<compile_context>
chip_gen: v6e
topology: v6e:2x2x1
jax: 0.10.0
libtpu: 0.0.40
codegen_flags: <defaults>
</compile_context>

<pallas_src>
import functools

import jax
import jax.numpy as jnp
from jax.experimental import pallas as pl
from jax.experimental.pallas import tpu as pltpu

HIDDEN = 32
MLP_SIZES = [32, 1]          # LSTMArgSelector(hidden_size=32, mlp_sizes=[32, 1])
B, T, NUM_CHOICES = 4, 8, 10


# ------------------------ fused gather + LSTM + MLP kernel ------------------------
def _fused_kernel(B_, T_, H_,
                  arg_ref, emb_ref, wih_ref, whh_ref, bl_ref, h0_ref,
                  w1_ref, b1_ref, w2_ref, b2_ref,
                  o_ref, hs_ref):
    """Rows are time-major: r = t*B + b. All data lives in VMEM for the whole call."""
    N = T_ * B_
    C = emb_ref.shape[0]

    # ---- embedding gather via one-hot matmul on the MXU ----
    ids = arg_ref[...]                                                  # (N, 1) int32
    lane = jax.lax.broadcasted_iota(jnp.int32, (N, C), 1)
    onehot = jnp.where(lane == ids, 1.0, 0.0)                           # (N, C) f32
    x_all = jnp.dot(onehot, emb_ref[...],
                    preferred_element_type=jnp.float32)                 # (N, H)

    # ---- hoisted input projection for ALL time steps (single matmul) ----
    gates_x = (jnp.dot(x_all, wih_ref[...], preferred_element_type=jnp.float32)
               + bl_ref[...])                                           # (N, 4H); order i,f,g,o
    gx_i = gates_x[:, 0 * H_:1 * H_]
    gx_f = gates_x[:, 1 * H_:2 * H_]
    gx_g = gates_x[:, 2 * H_:3 * H_]
    gx_o = gates_x[:, 3 * H_:4 * H_]

    # Pre-split recurrent weights per gate (once, off the serial path) so that each
    # per-step matmul result is already lane-aligned at width H.
    whh = whh_ref[...]
    whh_i = whh[:, 0 * H_:1 * H_]
    whh_f = whh[:, 1 * H_:2 * H_]
    whh_g = whh[:, 2 * H_:3 * H_]
    whh_o = whh[:, 3 * H_:4 * H_]

    h = jnp.broadcast_to(h0_ref[...], (B_, H_))                         # h0 == c0
    c = h

    # ---- serial LSTM recurrence, statically unrolled (T small & static) ----
    for t in range(T_):
        lo = t * B_
        hs_ref[lo:lo + B_, :] = h          # hidden state BEFORE consuming x_t (stays in VMEM)
        g_i = gx_i[lo:lo + B_, :] + jnp.dot(h, whh_i, preferred_element_type=jnp.float32)
        g_f = gx_f[lo:lo + B_, :] + jnp.dot(h, whh_f, preferred_element_type=jnp.float32)
        g_g = gx_g[lo:lo + B_, :] + jnp.dot(h, whh_g, preferred_element_type=jnp.float32)
        g_o = gx_o[lo:lo + B_, :] + jnp.dot(h, whh_o, preferred_element_type=jnp.float32)
        c = jax.nn.sigmoid(g_f) * c + jax.nn.sigmoid(g_i) * jnp.tanh(g_g)
        h = jax.nn.sigmoid(g_o) * jnp.tanh(c)

    # ---- MLP(cat(state, x)) without the concat: split W1 row-wise ----
    prev_all = hs_ref[...]                                              # (N, H) time-major
    w1 = w1_ref[...]
    h1 = (jnp.dot(prev_all, w1[0:H_, :], preferred_element_type=jnp.float32)
          + jnp.dot(x_all, w1[H_:2 * H_, :], preferred_element_type=jnp.float32)
          + b1_ref[...])
    h1 = jnp.maximum(h1, 0.0)   # TODO(synk): lambdabeam MLP hidden activation assumed ReLU
    o_ref[...] = (jnp.dot(h1, w2_ref[...], preferred_element_type=jnp.float32)
                  + b2_ref[...])                                        # (N, 1) time-major


# ------------------------------------ wrapper -------------------------------------
def lstm_arg_selector_forward(params, init_state, choice_embed, arg_seq):
    B_, T_ = arg_seq.shape
    H_ = choice_embed.shape[-1]
    C_ = choice_embed.shape[0]
    N = B_ * T_
    D1 = params['w1'].shape[1]
    D2 = params['w2'].shape[1]

    # Time-major flat indices (row r = t*B + b): one 128-byte int32 transpose of glue.
    arg_tm = jnp.transpose(arg_seq, (1, 0)).reshape(N, 1).astype(jnp.int32)
    h0 = init_state.reshape(1, H_).astype(jnp.float32)

    def full(shape):
        return pl.BlockSpec(shape, lambda i, _s=shape: (0,) * len(_s))

    scores_tm = pl.pallas_call(
        functools.partial(_fused_kernel, B_, T_, H_),
        out_shape=jax.ShapeDtypeStruct((N, 1), jnp.float32),
        grid_spec=pltpu.PrefetchScalarGridSpec(
            num_scalar_prefetch=0,
            grid=(1,),
            in_specs=[
                full((N, 1)),            # arg_seq (time-major, int32)
                full((C_, H_)),          # choice_embed
                full((H_, 4 * H_)),      # W_ih^T
                full((H_, 4 * H_)),      # W_hh^T
                full((1, 4 * H_)),       # b_ih + b_hh
                full((1, H_)),           # init_state
                full((2 * H_, D1)),      # W1^T (rows 0:H -> state, H:2H -> x)
                full((1, D1)),           # b1
                full((D1, D2)),          # W2^T
                full((1, D2)),           # b2
            ],
            out_specs=full((N, 1)),
            scratch_shapes=[pltpu.VMEM((N, H_), jnp.float32)],   # prev hidden states
        ),
        compiler_params=pltpu.CompilerParams(dimension_semantics=("arbitrary",)),
    )(arg_tm, choice_embed, params['w_ih_t'], params['w_hh_t'], params['b_lstm'],
      h0, params['w1'], params['b1'], params['w2'], params['b2'])

    # time-major (t*B + b) scores -> (T, B) -> (B, T); 32-element reshape + transpose.
    return scores_tm.reshape(T_, B_).T


# ------------------------------- pure-JAX reference --------------------------------
def reference_forward(params, init_state, choice_embed, arg_seq):
    B_, T_ = arg_seq.shape
    H_ = choice_embed.shape[-1]
    emb = choice_embed[arg_seq]
    h0 = jnp.broadcast_to(init_state[None, :], (B_, H_))
    c0 = h0

    def step(carry, x_t):
        h, c = carry
        gates = x_t @ params['w_ih_t'] + h @ params['w_hh_t'] + params['b_lstm'][0]
        i_g = jax.nn.sigmoid(gates[:, 0 * H_:1 * H_])
        f_g = jax.nn.sigmoid(gates[:, 1 * H_:2 * H_])
        g_g = jnp.tanh(gates[:, 2 * H_:3 * H_])
        o_g = jax.nn.sigmoid(gates[:, 3 * H_:4 * H_])
        c_new = f_g * c + i_g * g_g
        h_new = o_g * jnp.tanh(c_new)
        return (h_new, c_new), h       # emit PREVIOUS hidden state

    (_, _), prev_h = jax.lax.scan(step, (h0, c0), jnp.transpose(emb, (1, 0, 2)))
    state_flat = jnp.transpose(prev_h, (1, 0, 2)).reshape(B_ * T_, H_)
    x_flat = emb.reshape(B_ * T_, H_)
    xcat = jnp.concatenate([state_flat, x_flat], axis=-1)
    h1 = jnp.maximum(xcat @ params['w1'] + params['b1'][0], 0.0)
    out = h1 @ params['w2'] + params['b2'][0]
    return out.reshape(B_, T_)


def make_params(key, hidden, mlp_sizes):
    ks = jax.random.split(key, 8)
    s = 0.1
    w_ih = s * jax.random.normal(ks[0], (4 * hidden, hidden), jnp.float32)
    w_hh = s * jax.random.normal(ks[1], (4 * hidden, hidden), jnp.float32)
    b_ih = s * jax.random.normal(ks[2], (4 * hidden,), jnp.float32)
    b_hh = s * jax.random.normal(ks[3], (4 * hidden,), jnp.float32)
    d_in = 2 * hidden
    w1 = s * jax.random.normal(ks[4], (d_in, mlp_sizes[0]), jnp.float32)
    b1 = s * jax.random.normal(ks[5], (1, mlp_sizes[0]), jnp.float32)
    w2 = s * jax.random.normal(ks[6], (mlp_sizes[0], mlp_sizes[1]), jnp.float32)
    b2 = s * jax.random.normal(ks[7], (1, mlp_sizes[1]), jnp.float32)
    return dict(
        w_ih_t=w_ih.T, w_hh_t=w_hh.T, b_lstm=(b_ih + b_hh)[None, :],
        w1=w1, b1=b1, w2=w2, b2=b2,
    )


if __name__ == "__main__":
    key = jax.random.PRNGKey(0)
    k_par, k_emb, k_init, k_seq = jax.random.split(key, 4)
    params = make_params(k_par, HIDDEN, MLP_SIZES)

    choice_embed = jax.random.normal(k_emb, (NUM_CHOICES, HIDDEN), jnp.float32)
    init_state = jax.random.normal(k_init, (HIDDEN,), jnp.float32)
    arg_seq = jax.random.randint(k_seq, (B, T), 0, NUM_CHOICES, dtype=jnp.int32)

    fwd = jax.jit(lstm_arg_selector_forward)
    scores = jax.block_until_ready(fwd(params, init_state, choice_embed, arg_seq))

    ref = reference_forward(params, init_state, choice_embed, arg_seq)
    assert scores.shape == (B, T)
    assert jnp.allclose(scores, ref, atol=1e-4, rtol=1e-4), (scores, ref)
    print("KERNEL_OK")
</pallas_src>

<mosaic_0001>
module attributes {stable_mosaic.version = 11 : i64} {
  func.func @_fused_kernel(%arg0: i32, %arg1: memref<32x1xi32, #tpu.memory_space<vmem>>, %arg2: memref<10x32xf32, #tpu.memory_space<vmem>>, %arg3: memref<32x128xf32, #tpu.memory_space<vmem>>, %arg4: memref<32x128xf32, #tpu.memory_space<vmem>>, %arg5: memref<1x128xf32, #tpu.memory_space<vmem>>, %arg6: memref<1x32xf32, #tpu.memory_space<vmem>>, %arg7: memref<64x32xf32, #tpu.memory_space<vmem>>, %arg8: memref<1x32xf32, #tpu.memory_space<vmem>>, %arg9: memref<32x1xf32, #tpu.memory_space<vmem>>, %arg10: memref<1x1xf32, #tpu.memory_space<vmem>>, %arg11: memref<32x1xf32, #tpu.memory_space<vmem>>, %arg12: memref<32x32xf32, #tpu.memory_space<vmem>>) attributes {dimension_semantics = [#tpu.dimension_semantics<arbitrary>], iteration_bounds = array<i64: 1>, scalar_prefetch = 0 : i64, scratch_operands = 1 : i64, tpu.core_type = #tpu.core_type<tc>, window_params = [{pipeline_mode = #tpu.pipeline_mode<synchronous>, transform_indices = @transform_0, window_bounds = array<i64: 32, 1>}, {pipeline_mode = #tpu.pipeline_mode<synchronous>, transform_indices = @transform_1, window_bounds = array<i64: 10, 32>}, {pipeline_mode = #tpu.pipeline_mode<synchronous>, transform_indices = @transform_2, window_bounds = array<i64: 32, 128>}, {pipeline_mode = #tpu.pipeline_mode<synchronous>, transform_indices = @transform_3, window_bounds = array<i64: 32, 128>}, {pipeline_mode = #tpu.pipeline_mode<synchronous>, transform_indices = @transform_4, window_bounds = array<i64: 1, 128>}, {pipeline_mode = #tpu.pipeline_mode<synchronous>, transform_indices = @transform_5, window_bounds = array<i64: 1, 32>}, {pipeline_mode = #tpu.pipeline_mode<synchronous>, transform_indices = @transform_6, window_bounds = array<i64: 64, 32>}, {pipeline_mode = #tpu.pipeline_mode<synchronous>, transform_indices = @transform_7, window_bounds = array<i64: 1, 32>}, {pipeline_mode = #tpu.pipeline_mode<synchronous>, transform_indices = @transform_8, window_bounds = array<i64: 32, 1>}, {pipeline_mode = #tpu.pipeline_mode<synchronous>, transform_indices = @transform_9, window_bounds = array<i64: 1, 1>}, {pipeline_mode = #tpu.pipeline_mode<synchronous>, transform_indices = @transform_10, window_bounds = array<i64: 32, 1>}]} {
    %c0 = arith.constant 0 : index
    %c0_0 = arith.constant 0 : index
    %0 = vector.load %arg1[%c0, %c0_0] : memref<32x1xi32, #tpu.memory_space<vmem>>, vector<32x1xi32>
    %1 = tpu.iota {dimensions = array<i32: 1>} : vector<32x10xi32>
    %2 = vector.broadcast %0 : vector<32x1xi32> to vector<32x10xi32>
    %3 = arith.cmpi eq, %1, %2 : vector<32x10xi32>
    %cst = arith.constant 1.000000e+00 : f32
    %cst_1 = arith.constant 0.000000e+00 : f32
    %4 = vector.broadcast %cst : f32 to vector<32x10xf32>
    %5 = vector.broadcast %cst_1 : f32 to vector<32x10xf32>
    %6 = arith.select %3, %4, %5 : vector<32x10xi1>, vector<32x10xf32>
    %c0_2 = arith.constant 0 : index
    %c0_3 = arith.constant 0 : index
    %7 = vector.load %arg2[%c0_2, %c0_3] : memref<10x32xf32, #tpu.memory_space<vmem>>, vector<10x32xf32>
    %cst_4 = arith.constant dense<0.000000e+00> : vector<32x32xf32>
    %8 = tpu.matmul %6, %7, %cst_4 {dimension_numbers = #tpu.dot_dimension_numbers<[1], [0], [0], [1], [0, 0, 1, 1], [], []>} : vector<32x10xf32>, vector<10x32xf32>, vector<32x32xf32> -> vector<32x32xf32>
    %c0_5 = arith.constant 0 : index
    %c0_6 = arith.constant 0 : index
    %9 = vector.load %arg3[%c0_5, %c0_6] : memref<32x128xf32, #tpu.memory_space<vmem>>, vector<32x128xf32>
    %cst_7 = arith.constant dense<0.000000e+00> : vector<32x128xf32>
    %10 = tpu.matmul %8, %9, %cst_7 {dimension_numbers = #tpu.dot_dimension_numbers<[1], [0], [0], [1], [0, 0, 1, 1], [], []>} : vector<32x32xf32>, vector<32x128xf32>, vector<32x128xf32> -> vector<32x128xf32>
    %c0_8 = arith.constant 0 : index
    %c0_9 = arith.constant 0 : index
    %11 = vector.load %arg5[%c0_8, %c0_9] : memref<1x128xf32, #tpu.memory_space<vmem>>, vector<1x128xf32>
    %12 = vector.broadcast %11 : vector<1x128xf32> to vector<32x128xf32>
    %13 = arith.addf %10, %12 : vector<32x128xf32>
    %14 = vector.extract_strided_slice %13 {offsets = [0, 0], sizes = [32, 32], strides = [1, 1]} : vector<32x128xf32> to vector<32x32xf32>
    %15 = vector.extract_strided_slice %13 {offsets = [0, 32], sizes = [32, 32], strides = [1, 1]} : vector<32x128xf32> to vector<32x32xf32>
    %16 = vector.extract_strided_slice %13 {offsets = [0, 64], sizes = [32, 32], strides = [1, 1]} : vector<32x128xf32> to vector<32x32xf32>
    %17 = vector.extract_strided_slice %13 {offsets = [0, 96], sizes = [32, 32], strides = [1, 1]} : vector<32x128xf32> to vector<32x32xf32>
    %c0_10 = arith.constant 0 : index
    %c0_11 = arith.constant 0 : index
    %18 = vector.load %arg4[%c0_10, %c0_11] : memref<32x128xf32, #tpu.memory_space<vmem>>, vector<32x128xf32>
    %19 = vector.extract_strided_slice %18 {offsets = [0, 0], sizes = [32, 32], strides = [1, 1]} : vector<32x128xf32> to vector<32x32xf32>
    %20 = vector.extract_strided_slice %18 {offsets = [0, 32], sizes = [32, 32], strides = [1, 1]} : vector<32x128xf32> to vector<32x32xf32>
    %21 = vector.extract_strided_slice %18 {offsets = [0, 64], sizes = [32, 32], strides = [1, 1]} : vector<32x128xf32> to vector<32x32xf32>
    %22 = vector.extract_strided_slice %18 {offsets = [0, 96], sizes = [32, 32], strides = [1, 1]} : vector<32x128xf32> to vector<32x32xf32>
    %c0_12 = arith.constant 0 : index
    %c0_13 = arith.constant 0 : index
    %23 = vector.load %arg6[%c0_12, %c0_13] : memref<1x32xf32, #tpu.memory_space<vmem>>, vector<1x32xf32>
    %24 = vector.shape_cast %23 : vector<1x32xf32> to vector<1x32xf32>
    %25 = vector.broadcast %24 : vector<1x32xf32> to vector<4x32xf32>
    %c0_14 = arith.constant 0 : index
    %c0_15 = arith.constant 0 : index
    %26 = vector.load %arg12[%c0_14, %c0_15] : memref<32x32xf32, #tpu.memory_space<vmem>>, vector<4x32xf32>
    tpu.vector_store %arg12[%c0_14, %c0_15], %25 {strides = array<i32>} : memref<32x32xf32, #tpu.memory_space<vmem>>, vector<4x32xf32>,
    %27 = vector.extract_strided_slice %14 {offsets = [0, 0], sizes = [4, 32], strides = [1, 1]} : vector<32x32xf32> to vector<4x32xf32>
    %cst_16 = arith.constant dense<0.000000e+00> : vector<4x32xf32>
    %28 = tpu.matmul %25, %19, %cst_16 {dimension_numbers = #tpu.dot_dimension_numbers<[1], [0], [0], [1], [0, 0, 1, 1], [], []>} : vector<4x32xf32>, vector<32x32xf32>, vector<4x32xf32> -> vector<4x32xf32>
    %29 = arith.addf %27, %28 : vector<4x32xf32>
    %30 = vector.extract_strided_slice %15 {offsets = [0, 0], sizes = [4, 32], strides = [1, 1]} : vector<32x32xf32> to vector<4x32xf32>
    %cst_17 = arith.constant dense<0.000000e+00> : vector<4x32xf32>
    %31 = tpu.matmul %25, %20, %cst_17 {dimension_numbers = #tpu.dot_dimension_numbers<[1], [0], [0], [1], [0, 0, 1, 1], [], []>} : vector<4x32xf32>, vector<32x32xf32>, vector<4x32xf32> -> vector<4x32xf32>
    %32 = arith.addf %30, %31 : vector<4x32xf32>
    %33 = vector.extract_strided_slice %16 {offsets = [0, 0], sizes = [4, 32], strides = [1, 1]} : vector<32x32xf32> to vector<4x32xf32>
    %cst_18 = arith.constant dense<0.000000e+00> : vector<4x32xf32>
    %34 = tpu.matmul %25, %21, %cst_18 {dimension_numbers = #tpu.dot_dimension_numbers<[1], [0], [0], [1], [0, 0, 1, 1], [], []>} : vector<4x32xf32>, vector<32x32xf32>, vector<4x32xf32> -> vector<4x32xf32>
    %35 = arith.addf %33, %34 : vector<4x32xf32>
    %36 = vector.extract_strided_slice %17 {offsets = [0, 0], sizes = [4, 32], strides = [1, 1]} : vector<32x32xf32> to vector<4x32xf32>
    %cst_19 = arith.constant dense<0.000000e+00> : vector<4x32xf32>
    %37 = tpu.matmul %25, %22, %cst_19 {dimension_numbers = #tpu.dot_dimension_numbers<[1], [0], [0], [1], [0, 0, 1, 1], [], []>} : vector<4x32xf32>, vector<32x32xf32>, vector<4x32xf32> -> vector<4x32xf32>
    %38 = arith.addf %36, %37 : vector<4x32xf32>
    %39 = arith.negf %32 : vector<4x32xf32>
    %40 = math.exp %39 : vector<4x32xf32>
    %cst_20 = arith.constant 1.000000e+00 : f32
    %41 = vector.broadcast %cst_20 : f32 to vector<4x32xf32>
    %42 = arith.addf %41, %40 : vector<4x32xf32>
    %43 = arith.divf %41, %42 : vector<4x32xf32>
    %44 = arith.mulf %43, %25 : vector<4x32xf32>
    %45 = arith.negf %29 : vector<4x32xf32>
    %46 = math.exp %45 : vector<4x32xf32>
    %cst_21 = arith.constant 1.000000e+00 : f32
    %47 = vector.broadcast %cst_21 : f32 to vector<4x32xf32>
    %48 = arith.addf %47, %46 : vector<4x32xf32>
    %49 = arith.divf %47, %48 : vector<4x32xf32>
    %50 = math.tanh %35 : vector<4x32xf32>
    %51 = arith.mulf %49, %50 : vector<4x32xf32>
    %52 = arith.addf %44, %51 : vector<4x32xf32>
    %53 = arith.negf %38 : vector<4x32xf32>
    %54 = math.exp %53 : vector<4x32xf32>
    %cst_22 = arith.constant 1.000000e+00 : f32
    %55 = vector.broadcast %cst_22 : f32 to vector<4x32xf32>
    %56 = arith.addf %55, %54 : vector<4x32xf32>
    %57 = arith.divf %55, %56 : vector<4x32xf32>
    %58 = math.tanh %52 : vector<4x32xf32>
    %59 = arith.mulf %57, %58 : vector<4x32xf32>
    %c4 = arith.constant 4 : index
    %c0_23 = arith.constant 0 : index
    %60 = vector.load %arg12[%c4, %c0_23] : memref<32x32xf32, #tpu.memory_space<vmem>>, vector<4x32xf32>
    tpu.vector_store %arg12[%c4, %c0_23], %59 {strides = array<i32>} : memref<32x32xf32, #tpu.memory_space<vmem>>, vector<4x32xf32>,
    %61 = vector.extract_strided_slice %14 {offsets = [4, 0], sizes = [4, 32], strides = [1, 1]} : vector<32x32xf32> to vector<4x32xf32>
    %cst_24 = arith.constant dense<0.000000e+00> : vector<4x32xf32>
    %62 = tpu.matmul %59, %19, %cst_24 {dimension_numbers = #tpu.dot_dimension_numbers<[1], [0], [0], [1], [0, 0, 1, 1], [], []>} : vector<4x32xf32>, vector<32x32xf32>, vector<4x32xf32> -> vector<4x32xf32>
    %63 = arith.addf %61, %62 : vector<4x32xf32>
    %64 = vector.extract_strided_slice %15 {offsets = [4, 0], sizes = [4, 32], strides = [1, 1]} : vector<32x32xf32> to vector<4x32xf32>
    %cst_25 = arith.constant dense<0.000000e+00> : vector<4x32xf32>
    %65 = tpu.matmul %59, %20, %cst_25 {dimension_numbers = #tpu.dot_dimension_numbers<[1], [0], [0], [1], [0, 0, 1, 1], [], []>} : vector<4x32xf32>, vector<32x32xf32>, vector<4x32xf32> -> vector<4x32xf32>
    %66 = arith.addf %64, %65 : vector<4x32xf32>
    %67 = vector.extract_strided_slice %16 {offsets = [4, 0], sizes = [4, 32], strides = [1, 1]} : vector<32x32xf32> to vector<4x32xf32>
    %cst_26 = arith.constant dense<0.000000e+00> : vector<4x32xf32>
    %68 = tpu.matmul %59, %21, %cst_26 {dimension_numbers = #tpu.dot_dimension_numbers<[1], [0], [0], [1], [0, 0, 1, 1], [], []>} : vector<4x32xf32>, vector<32x32xf32>, vector<4x32xf32> -> vector<4x32xf32>
    %69 = arith.addf %67, %68 : vector<4x32xf32>
    %70 = vector.extract_strided_slice %17 {offsets = [4, 0], sizes = [4, 32], strides = [1, 1]} : vector<32x32xf32> to vector<4x32xf32>
    %cst_27 = arith.constant dense<0.000000e+00> : vector<4x32xf32>
    %71 = tpu.matmul %59, %22, %cst_27 {dimension_numbers = #tpu.dot_dimension_numbers<[1], [0], [0], [1], [0, 0, 1, 1], [], []>} : vector<4x32xf32>, vector<32x32xf32>, vector<4x32xf32> -> vector<4x32xf32>
    %72 = arith.addf %70, %71 : vector<4x32xf32>
    %73 = arith.negf %66 : vector<4x32xf32>
    %74 = math.exp %73 : vector<4x32xf32>
    %cst_28 = arith.constant 1.000000e+00 : f32
    %75 = vector.broadcast %cst_28 : f32 to vector<4x32xf32>
    %76 = arith.addf %75, %74 : vector<4x32xf32>
    %77 = arith.divf %75, %76 : vector<4x32xf32>
    %78 = arith.mulf %77, %52 : vector<4x32xf32>
    %79 = arith.negf %63 : vector<4x32xf32>
    %80 = math.exp %79 : vector<4x32xf32>
    %cst_29 = arith.constant 1.000000e+00 : f32
    %81 = vector.broadcast %cst_29 : f32 to vector<4x32xf32>
    %82 = arith.addf %81, %80 : vector<4x32xf32>
    %83 = arith.divf %81, %82 : vector<4x32xf32>
    %84 = math.tanh %69 : vector<4x32xf32>
    %85 = arith.mulf %83, %84 : vector<4x32xf32>
    %86 = arith.addf %78, %85 : vector<4x32xf32>
    %87 = arith.negf %72 : vector<4x32xf32>
    %88 = math.exp %87 : vector<4x32xf32>
    %cst_30 = arith.constant 1.000000e+00 : f32
    %89 = vector.broadcast %cst_30 : f32 to vector<4x32xf32>
    %90 = arith.addf %89, %88 : vector<4x32xf32>
    %91 = arith.divf %89, %90 : vector<4x32xf32>
    %92 = math.tanh %86 : vector<4x32xf32>
    %93 = arith.mulf %91, %92 : vector<4x32xf32>
    %c8 = arith.constant 8 : index
    %c0_31 = arith.constant 0 : index
    %94 = vector.load %arg12[%c8, %c0_31] : memref<32x32xf32, #tpu.memory_space<vmem>>, vector<4x32xf32>
    tpu.vector_store %arg12[%c8, %c0_31], %93 {strides = array<i32>} : memref<32x32xf32, #tpu.memory_space<vmem>>, vector<4x32xf32>,
    %95 = vector.extract_strided_slice %14 {offsets = [8, 0], sizes = [4, 32], strides = [1, 1]} : vector<32x32xf32> to vector<4x32xf32>
    %cst_32 = arith.constant dense<0.000000e+00> : vector<4x32xf32>
    %96 = tpu.matmul %93, %19, %cst_32 {dimension_numbers = #tpu.dot_dimension_numbers<[1], [0], [0], [1], [0, 0, 1, 1], [], []>} : vector<4x32xf32>, vector<32x32xf32>, vector<4x32xf32> -> vector<4x32xf32>
    %97 = arith.addf %95, %96 : vector<4x32xf32>
    %98 = vector.extract_strided_slice %15 {offsets = [8, 0], sizes = [4, 32], strides = [1, 1]} : vector<32x32xf32> to vector<4x32xf32>
    %cst_33 = arith.constant dense<0.000000e+00> : vector<4x32xf32>
    %99 = tpu.matmul %93, %20, %cst_33 {dimension_numbers = #tpu.dot_dimension_numbers<[1], [0], [0], [1], [0, 0, 1, 1], [], []>} : vector<4x32xf32>, vector<32x32xf32>, vector<4x32xf32> -> vector<4x32xf32>
    %100 = arith.addf %98, %99 : vector<4x32xf32>
    %101 = vector.extract_strided_slice %16 {offsets = [8, 0], sizes = [4, 32], strides = [1, 1]} : vector<32x32xf32> to vector<4x32xf32>
    %cst_34 = arith.constant dense<0.000000e+00> : vector<4x32xf32>
    %102 = tpu.matmul %93, %21, %cst_34 {dimension_numbers = #tpu.dot_dimension_numbers<[1], [0], [0], [1], [0, 0, 1, 1], [], []>} : vector<4x32xf32>, vector<32x32xf32>, vector<4x32xf32> -> vector<4x32xf32>
    %103 = arith.addf %101, %102 : vector<4x32xf32>
    %104 = vector.extract_strided_slice %17 {offsets = [8, 0], sizes = [4, 32], strides = [1, 1]} : vector<32x32xf32> to vector<4x32xf32>
    %cst_35 = arith.constant dense<0.000000e+00> : vector<4x32xf32>
    %105 = tpu.matmul %93, %22, %cst_35 {dimension_numbers = #tpu.dot_dimension_numbers<[1], [0], [0], [1], [0, 0, 1, 1], [], []>} : vector<4x32xf32>, vector<32x32xf32>, vector<4x32xf32> -> vector<4x32xf32>
    %106 = arith.addf %104, %105 : vector<4x32xf32>
    %107 = arith.negf %100 : vector<4x32xf32>
    %108 = math.exp %107 : vector<4x32xf32>
    %cst_36 = arith.constant 1.000000e+00 : f32
    %109 = vector.broadcast %cst_36 : f32 to vector<4x32xf32>
    %110 = arith.addf %109, %108 : vector<4x32xf32>
    %111 = arith.divf %109, %110 : vector<4x32xf32>
    %112 = arith.mulf %111, %86 : vector<4x32xf32>
    %113 = arith.negf %97 : vector<4x32xf32>
    %114 = math.exp %113 : vector<4x32xf32>
    %cst_37 = arith.constant 1.000000e+00 : f32
    %115 = vector.broadcast %cst_37 : f32 to vector<4x32xf32>
    %116 = arith.addf %115, %114 : vector<4x32xf32>
    %117 = arith.divf %115, %116 : vector<4x32xf32>
    %118 = math.tanh %103 : vector<4x32xf32>
    %119 = arith.mulf %117, %118 : vector<4x32xf32>
    %120 = arith.addf %112, %119 : vector<4x32xf32>
    %121 = arith.negf %106 : vector<4x32xf32>
    %122 = math.exp %121 : vector<4x32xf32>
    %cst_38 = arith.constant 1.000000e+00 : f32
    %123 = vector.broadcast %cst_38 : f32 to vector<4x32xf32>
    %124 = arith.addf %123, %122 : vector<4x32xf32>
    %125 = arith.divf %123, %124 : vector<4x32xf32>
    %126 = math.tanh %120 : vector<4x32xf32>
    %127 = arith.mulf %125, %126 : vector<4x32xf32>
    %c12 = arith.constant 12 : index
    %c0_39 = arith.constant 0 : index
    %128 = vector.load %arg12[%c12, %c0_39] : memref<32x32xf32, #tpu.memory_space<vmem>>, vector<4x32xf32>
    tpu.vector_store %arg12[%c12, %c0_39], %127 {strides = array<i32>} : memref<32x32xf32, #tpu.memory_space<vmem>>, vector<4x32xf32>,
    %129 = vector.extract_strided_slice %14 {offsets = [12, 0], sizes = [4, 32], strides = [1, 1]} : vector<32x32xf32> to vector<4x32xf32>
    %cst_40 = arith.constant dense<0.000000e+00> : vector<4x32xf32>
    %130 = tpu.matmul %127, %19, %cst_40 {dimension_numbers = #tpu.dot_dimension_numbers<[1], [0], [0], [1], [0, 0, 1, 1], [], []>} : vector<4x32xf32>, vector<32x32xf32>, vector<4x32xf32> -> vector<4x32xf32>
    %131 = arith.addf %129, %130 : vector<4x32xf32>
    %132 = vector.extract_strided_slice %15 {offsets = [12, 0], sizes = [4, 32], strides = [1, 1]} : vector<32x32xf32> to vector<4x32xf32>
    %cst_41 = arith.constant dense<0.000000e+00> : vector<4x32xf32>
    %133 = tpu.matmul %127, %20, %cst_41 {dimension_numbers = #tpu.dot_dimension_numbers<[1], [0], [0], [1], [0, 0, 1, 1], [], []>} : vector<4x32xf32>, vector<32x32xf32>, vector<4x32xf32> -> vector<4x32xf32>
    %134 = arith.addf %132, %133 : vector<4x32xf32>
    %135 = vector.extract_strided_slice %16 {offsets = [12, 0], sizes = [4, 32], strides = [1, 1]} : vector<32x32xf32> to vector<4x32xf32>
    %cst_42 = arith.constant dense<0.000000e+00> : vector<4x32xf32>
    %136 = tpu.matmul %127, %21, %cst_42 {dimension_numbers = #tpu.dot_dimension_numbers<[1], [0], [0], [1], [0, 0, 1, 1], [], []>} : vector<4x32xf32>, vector<32x32xf32>, vector<4x32xf32> -> vector<4x32xf32>
    %137 = arith.addf %135, %136 : vector<4x32xf32>
    %138 = vector.extract_strided_slice %17 {offsets = [12, 0], sizes = [4, 32], strides = [1, 1]} : vector<32x32xf32> to vector<4x32xf32>
    %cst_43 = arith.constant dense<0.000000e+00> : vector<4x32xf32>
    %139 = tpu.matmul %127, %22, %cst_43 {dimension_numbers = #tpu.dot_dimension_numbers<[1], [0], [0], [1], [0, 0, 1, 1], [], []>} : vector<4x32xf32>, vector<32x32xf32>, vector<4x32xf32> -> vector<4x32xf32>
    %140 = arith.addf %138, %139 : vector<4x32xf32>
    %141 = arith.negf %134 : vector<4x32xf32>
    %142 = math.exp %141 : vector<4x32xf32>
    %cst_44 = arith.constant 1.000000e+00 : f32
    %143 = vector.broadcast %cst_44 : f32 to vector<4x32xf32>
    %144 = arith.addf %143, %142 : vector<4x32xf32>
    %145 = arith.divf %143, %144 : vector<4x32xf32>
    %146 = arith.mulf %145, %120 : vector<4x32xf32>
    %147 = arith.negf %131 : vector<4x32xf32>
    %148 = math.exp %147 : vector<4x32xf32>
    %cst_45 = arith.constant 1.000000e+00 : f32
    %149 = vector.broadcast %cst_45 : f32 to vector<4x32xf32>
    %150 = arith.addf %149, %148 : vector<4x32xf32>
    %151 = arith.divf %149, %150 : vector<4x32xf32>
    %152 = math.tanh %137 : vector<4x32xf32>
    %153 = arith.mulf %151, %152 : vector<4x32xf32>
    %154 = arith.addf %146, %153 : vector<4x32xf32>
    %155 = arith.negf %140 : vector<4x32xf32>
    %156 = math.exp %155 : vector<4x32xf32>
    %cst_46 = arith.constant 1.000000e+00 : f32
    %157 = vector.broadcast %cst_46 : f32 to vector<4x32xf32>
    %158 = arith.addf %157, %156 : vector<4x32xf32>
    %159 = arith.divf %157, %158 : vector<4x32xf32>
    %160 = math.tanh %154 : vector<4x32xf32>
    %161 = arith.mulf %159, %160 : vector<4x32xf32>
    %c16 = arith.constant 16 : index
    %c0_47 = arith.constant 0 : index
    %162 = vector.load %arg12[%c16, %c0_47] : memref<32x32xf32, #tpu.memory_space<vmem>>, vector<4x32xf32>
    tpu.vector_store %arg12[%c16, %c0_47], %161 {strides = array<i32>} : memref<32x32xf32, #tpu.memory_space<vmem>>, vector<4x32xf32>,
    %163 = vector.extract_strided_slice %14 {offsets = [16, 0], sizes = [4, 32], strides = [1, 1]} : vector<32x32xf32> to vector<4x32xf32>
    %cst_48 = arith.constant dense<0.000000e+00> : vector<4x32xf32>
    %164 = tpu.matmul %161, %19, %cst_48 {dimension_numbers = #tpu.dot_dimension_numbers<[1], [0], [0], [1], [0, 0, 1, 1], [], []>} : vector<4x32xf32>, vector<32x32xf32>, vector<4x32xf32> -> vector<4x32xf32>
    %165 = arith.addf %163, %164 : vector<4x32xf32>
    %166 = vector.extract_strided_slice %15 {offsets = [16, 0], sizes = [4, 32], strides = [1, 1]} : vector<32x32xf32> to vector<4x32xf32>
    %cst_49 = arith.constant dense<0.000000e+00> : vector<4x32xf32>
    %167 = tpu.matmul %161, %20, %cst_49 {dimension_numbers = #tpu.dot_dimension_numbers<[1], [0], [0], [1], [0, 0, 1, 1], [], []>} : vector<4x32xf32>, vector<32x32xf32>, vector<4x32xf32> -> vector<4x32xf32>
    %168 = arith.addf %166, %167 : vector<4x32xf32>
    %169 = vector.extract_strided_slice %16 {offsets = [16, 0], sizes = [4, 32], strides = [1, 1]} : vector<32x32xf32> to vector<4x32xf32>
    %cst_50 = arith.constant dense<0.000000e+00> : vector<4x32xf32>
    %170 = tpu.matmul %161, %21, %cst_50 {dimension_numbers = #tpu.dot_dimension_numbers<[1], [0], [0], [1], [0, 0, 1, 1], [], []>} : vector<4x32xf32>, vector<32x32xf32>, vector<4x32xf32> -> vector<4x32xf32>
    %171 = arith.addf %169, %170 : vector<4x32xf32>
    %172 = vector.extract_strided_slice %17 {offsets = [16, 0], sizes = [4, 32], strides = [1, 1]} : vector<32x32xf32> to vector<4x32xf32>
    %cst_51 = arith.constant dense<0.000000e+00> : vector<4x32xf32>
    %173 = tpu.matmul %161, %22, %cst_51 {dimension_numbers = #tpu.dot_dimension_numbers<[1], [0], [0], [1], [0, 0, 1, 1], [], []>} : vector<4x32xf32>, vector<32x32xf32>, vector<4x32xf32> -> vector<4x32xf32>
    %174 = arith.addf %172, %173 : vector<4x32xf32>
    %175 = arith.negf %168 : vector<4x32xf32>
    %176 = math.exp %175 : vector<4x32xf32>
    %cst_52 = arith.constant 1.000000e+00 : f32
    %177 = vector.broadcast %cst_52 : f32 to vector<4x32xf32>
    %178 = arith.addf %177, %176 : vector<4x32xf32>
    %179 = arith.divf %177, %178 : vector<4x32xf32>
    %180 = arith.mulf %179, %154 : vector<4x32xf32>
    %181 = arith.negf %165 : vector<4x32xf32>
    %182 = math.exp %181 : vector<4x32xf32>
    %cst_53 = arith.constant 1.000000e+00 : f32
    %183 = vector.broadcast %cst_53 : f32 to vector<4x32xf32>
    %184 = arith.addf %183, %182 : vector<4x32xf32>
    %185 = arith.divf %183, %184 : vector<4x32xf32>
    %186 = math.tanh %171 : vector<4x32xf32>
    %187 = arith.mulf %185, %186 : vector<4x32xf32>
    %188 = arith.addf %180, %187 : vector<4x32xf32>
    %189 = arith.negf %174 : vector<4x32xf32>
    %190 = math.exp %189 : vector<4x32xf32>
    %cst_54 = arith.constant 1.000000e+00 : f32
    %191 = vector.broadcast %cst_54 : f32 to vector<4x32xf32>
    %192 = arith.addf %191, %190 : vector<4x32xf32>
    %193 = arith.divf %191, %192 : vector<4x32xf32>
    %194 = math.tanh %188 : vector<4x32xf32>
    %195 = arith.mulf %193, %194 : vector<4x32xf32>
    %c20 = arith.constant 20 : index
    %c0_55 = arith.constant 0 : index
    %196 = vector.load %arg12[%c20, %c0_55] : memref<32x32xf32, #tpu.memory_space<vmem>>, vector<4x32xf32>
    tpu.vector_store %arg12[%c20, %c0_55], %195 {strides = array<i32>} : memref<32x32xf32, #tpu.memory_space<vmem>>, vector<4x32xf32>,
    %197 = vector.extract_strided_slice %14 {offsets = [20, 0], sizes = [4, 32], strides = [1, 1]} : vector<32x32xf32> to vector<4x32xf32>
    %cst_56 = arith.constant dense<0.000000e+00> : vector<4x32xf32>
    %198 = tpu.matmul %195, %19, %cst_56 {dimension_numbers = #tpu.dot_dimension_numbers<[1], [0], [0], [1], [0, 0, 1, 1], [], []>} : vector<4x32xf32>, vector<32x32xf32>, vector<4x32xf32> -> vector<4x32xf32>
    %199 = arith.addf %197, %198 : vector<4x32xf32>
    %200 = vector.extract_strided_slice %15 {offsets = [20, 0], sizes = [4, 32], strides = [1, 1]} : vector<32x32xf32> to vector<4x32xf32>
    %cst_57 = arith.constant dense<0.000000e+00> : vector<4x32xf32>
    %201 = tpu.matmul %195, %20, %cst_57 {dimension_numbers = #tpu.dot_dimension_numbers<[1], [0], [0], [1], [0, 0, 1, 1], [], []>} : vector<4x32xf32>, vector<32x32xf32>, vector<4x32xf32> -> vector<4x32xf32>
    %202 = arith.addf %200, %201 : vector<4x32xf32>
    %203 = vector.extract_strided_slice %16 {offsets = [20, 0], sizes = [4, 32], strides = [1, 1]} : vector<32x32xf32> to vector<4x32xf32>
    %cst_58 = arith.constant dense<0.000000e+00> : vector<4x32xf32>
    %204 = tpu.matmul %195, %21, %cst_58 {dimension_numbers = #tpu.dot_dimension_numbers<[1], [0], [0], [1], [0, 0, 1, 1], [], []>} : vector<4x32xf32>, vector<32x32xf32>, vector<4x32xf32> -> vector<4x32xf32>
    %205 = arith.addf %203, %204 : vector<4x32xf32>
    %206 = vector.extract_strided_slice %17 {offsets = [20, 0], sizes = [4, 32], strides = [1, 1]} : vector<32x32xf32> to vector<4x32xf32>
    %cst_59 = arith.constant dense<0.000000e+00> : vector<4x32xf32>
    %207 = tpu.matmul %195, %22, %cst_59 {dimension_numbers = #tpu.dot_dimension_numbers<[1], [0], [0], [1], [0, 0, 1, 1], [], []>} : vector<4x32xf32>, vector<32x32xf32>, vector<4x32xf32> -> vector<4x32xf32>
    %208 = arith.addf %206, %207 : vector<4x32xf32>
    %209 = arith.negf %202 : vector<4x32xf32>
    %210 = math.exp %209 : vector<4x32xf32>
    %cst_60 = arith.constant 1.000000e+00 : f32
    %211 = vector.broadcast %cst_60 : f32 to vector<4x32xf32>
    %212 = arith.addf %211, %210 : vector<4x32xf32>
    %213 = arith.divf %211, %212 : vector<4x32xf32>
    %214 = arith.mulf %213, %188 : vector<4x32xf32>
    %215 = arith.negf %199 : vector<4x32xf32>
    %216 = math.exp %215 : vector<4x32xf32>
    %cst_61 = arith.constant 1.000000e+00 : f32
    %217 = vector.broadcast %cst_61 : f32 to vector<4x32xf32>
    %218 = arith.addf %217, %216 : vector<4x32xf32>
    %219 = arith.divf %217, %218 : vector<4x32xf32>
    %220 = math.tanh %205 : vector<4x32xf32>
    %221 = arith.mulf %219, %220 : vector<4x32xf32>
    %222 = arith.addf %214, %221 : vector<4x32xf32>
    %223 = arith.negf %208 : vector<4x32xf32>
    %224 = math.exp %223 : vector<4x32xf32>
    %cst_62 = arith.constant 1.000000e+00 : f32
    %225 = vector.broadcast %cst_62 : f32 to vector<4x32xf32>
    %226 = arith.addf %225, %224 : vector<4x32xf32>
    %227 = arith.divf %225, %226 : vector<4x32xf32>
    %228 = math.tanh %222 : vector<4x32xf32>
    %229 = arith.mulf %227, %228 : vector<4x32xf32>
    %c24 = arith.constant 24 : index
    %c0_63 = arith.constant 0 : index
    %230 = vector.load %arg12[%c24, %c0_63] : memref<32x32xf32, #tpu.memory_space<vmem>>, vector<4x32xf32>
    tpu.vector_store %arg12[%c24, %c0_63], %229 {strides = array<i32>} : memref<32x32xf32, #tpu.memory_space<vmem>>, vector<4x32xf32>,
    %231 = vector.extract_strided_slice %14 {offsets = [24, 0], sizes = [4, 32], strides = [1, 1]} : vector<32x32xf32> to vector<4x32xf32>
    %cst_64 = arith.constant dense<0.000000e+00> : vector<4x32xf32>
    %232 = tpu.matmul %229, %19, %cst_64 {dimension_numbers = #tpu.dot_dimension_numbers<[1], [0], [0], [1], [0, 0, 1, 1], [], []>} : vector<4x32xf32>, vector<32x32xf32>, vector<4x32xf32> -> vector<4x32xf32>
    %233 = arith.addf %231, %232 : vector<4x32xf32>
    %234 = vector.extract_strided_slice %15 {offsets = [24, 0], sizes = [4, 32], strides = [1, 1]} : vector<32x32xf32> to vector<4x32xf32>
    %cst_65 = arith.constant dense<0.000000e+00> : vector<4x32xf32>
    %235 = tpu.matmul %229, %20, %cst_65 {dimension_numbers = #tpu.dot_dimension_numbers<[1], [0], [0], [1], [0, 0, 1, 1], [], []>} : vector<4x32xf32>, vector<32x32xf32>, vector<4x32xf32> -> vector<4x32xf32>
    %236 = arith.addf %234, %235 : vector<4x32xf32>
    %237 = vector.extract_strided_slice %16 {offsets = [24, 0], sizes = [4, 32], strides = [1, 1]} : vector<32x32xf32> to vector<4x32xf32>
    %cst_66 = arith.constant dense<0.000000e+00> : vector<4x32xf32>
    %238 = tpu.matmul %229, %21, %cst_66 {dimension_numbers = #tpu.dot_dimension_numbers<[1], [0], [0], [1], [0, 0, 1, 1], [], []>} : vector<4x32xf32>, vector<32x32xf32>, vector<4x32xf32> -> vector<4x32xf32>
    %239 = arith.addf %237, %238 : vector<4x32xf32>
    %240 = vector.extract_strided_slice %17 {offsets = [24, 0], sizes = [4, 32], strides = [1, 1]} : vector<32x32xf32> to vector<4x32xf32>
    %cst_67 = arith.constant dense<0.000000e+00> : vector<4x32xf32>
    %241 = tpu.matmul %229, %22, %cst_67 {dimension_numbers = #tpu.dot_dimension_numbers<[1], [0], [0], [1], [0, 0, 1, 1], [], []>} : vector<4x32xf32>, vector<32x32xf32>, vector<4x32xf32> -> vector<4x32xf32>
    %242 = arith.addf %240, %241 : vector<4x32xf32>
    %243 = arith.negf %236 : vector<4x32xf32>
    %244 = math.exp %243 : vector<4x32xf32>
    %cst_68 = arith.constant 1.000000e+00 : f32
    %245 = vector.broadcast %cst_68 : f32 to vector<4x32xf32>
    %246 = arith.addf %245, %244 : vector<4x32xf32>
    %247 = arith.divf %245, %246 : vector<4x32xf32>
    %248 = arith.mulf %247, %222 : vector<4x32xf32>
    %249 = arith.negf %233 : vector<4x32xf32>
    %250 = math.exp %249 : vector<4x32xf32>
    %cst_69 = arith.constant 1.000000e+00 : f32
    %251 = vector.broadcast %cst_69 : f32 to vector<4x32xf32>
    %252 = arith.addf %251, %250 : vector<4x32xf32>
    %253 = arith.divf %251, %252 : vector<4x32xf32>
    %254 = math.tanh %239 : vector<4x32xf32>
    %255 = arith.mulf %253, %254 : vector<4x32xf32>
    %256 = arith.addf %248, %255 : vector<4x32xf32>
    %257 = arith.negf %242 : vector<4x32xf32>
    %258 = math.exp %257 : vector<4x32xf32>
    %cst_70 = arith.constant 1.000000e+00 : f32
    %259 = vector.broadcast %cst_70 : f32 to vector<4x32xf32>
    %260 = arith.addf %259, %258 : vector<4x32xf32>
    %261 = arith.divf %259, %260 : vector<4x32xf32>
    %262 = math.tanh %256 : vector<4x32xf32>
    %263 = arith.mulf %261, %262 : vector<4x32xf32>
    %c28 = arith.constant 28 : index
    %c0_71 = arith.constant 0 : index
    %264 = vector.load %arg12[%c28, %c0_71] : memref<32x32xf32, #tpu.memory_space<vmem>>, vector<4x32xf32>
    tpu.vector_store %arg12[%c28, %c0_71], %263 {strides = array<i32>} : memref<32x32xf32, #tpu.memory_space<vmem>>, vector<4x32xf32>,
    %c0_72 = arith.constant 0 : index
    %c0_73 = arith.constant 0 : index
    %265 = vector.load %arg12[%c0_72, %c0_73] : memref<32x32xf32, #tpu.memory_space<vmem>>, vector<32x32xf32>
    %c0_74 = arith.constant 0 : index
    %c0_75 = arith.constant 0 : index
    %266 = vector.load %arg7[%c0_74, %c0_75] : memref<64x32xf32, #tpu.memory_space<vmem>>, vector<64x32xf32>
    %267 = vector.extract_strided_slice %266 {offsets = [0, 0], sizes = [32, 32], strides = [1, 1]} : vector<64x32xf32> to vector<32x32xf32>
    %cst_76 = arith.constant dense<0.000000e+00> : vector<32x32xf32>
    %268 = tpu.matmul %265, %267, %cst_76 {dimension_numbers = #tpu.dot_dimension_numbers<[1], [0], [0], [1], [0, 0, 1, 1], [], []>} : vector<32x32xf32>, vector<32x32xf32>, vector<32x32xf32> -> vector<32x32xf32>
    %269 = vector.extract_strided_slice %266 {offsets = [32, 0], sizes = [32, 32], strides = [1, 1]} : vector<64x32xf32> to vector<32x32xf32>
    %cst_77 = arith.constant dense<0.000000e+00> : vector<32x32xf32>
    %270 = tpu.matmul %8, %269, %cst_77 {dimension_numbers = #tpu.dot_dimension_numbers<[1], [0], [0], [1], [0, 0, 1, 1], [], []>} : vector<32x32xf32>, vector<32x32xf32>, vector<32x32xf32> -> vector<32x32xf32>
    %271 = arith.addf %268, %270 : vector<32x32xf32>
    %c0_78 = arith.constant 0 : index
    %c0_79 = arith.constant 0 : index
    %272 = vector.load %arg8[%c0_78, %c0_79] : memref<1x32xf32, #tpu.memory_space<vmem>>, vector<1x32xf32>
    %273 = vector.broadcast %272 : vector<1x32xf32> to vector<32x32xf32>
    %274 = arith.addf %271, %273 : vector<32x32xf32>
    %cst_80 = arith.constant 0.000000e+00 : f32
    %275 = vector.broadcast %cst_80 : f32 to vector<32x32xf32>
    %276 = arith.maximumf %274, %275 : vector<32x32xf32>
    %c0_81 = arith.constant 0 : index
    %c0_82 = arith.constant 0 : index
    %277 = vector.load %arg9[%c0_81, %c0_82] : memref<32x1xf32, #tpu.memory_space<vmem>>, vector<32x1xf32>
    %cst_83 = arith.constant dense<0.000000e+00> : vector<32x1xf32>
    %278 = tpu.matmul %276, %277, %cst_83 {dimension_numbers = #tpu.dot_dimension_numbers<[1], [0], [0], [1], [0, 0, 1, 1], [], []>} : vector<32x32xf32>, vector<32x1xf32>, vector<32x1xf32> -> vector<32x1xf32>
    %c0_84 = arith.constant 0 : index
    %c0_85 = arith.constant 0 : index
    %279 = vector.load %arg10[%c0_84, %c0_85] : memref<1x1xf32, #tpu.memory_space<vmem>>, vector<1x1xf32>
    %280 = vector.broadcast %279 : vector<1x1xf32> to vector<32x1xf32>
    %281 = arith.addf %278, %280 : vector<32x1xf32>
    %c0_86 = arith.constant 0 : index
    %c0_87 = arith.constant 0 : index
    %282 = vector.load %arg11[%c0_86, %c0_87] : memref<32x1xf32, #tpu.memory_space<vmem>>, vector<32x1xf32>
    tpu.vector_store %arg11[%c0_86, %c0_87], %281 {strides = array<i32>} : memref<32x1xf32, #tpu.memory_space<vmem>>, vector<32x1xf32>,
    return
  }
  func.func @transform_0(%arg0: i32) -> (i32, i32) {
    %c0_i32 = arith.constant 0 : i32
    %c0_i32_0 = arith.constant 0 : i32
    %c0_i32_1 = arith.constant 0 : i32
    return %c0_i32, %c0_i32_0 : i32, i32
  }
  func.func @transform_1(%arg0: i32) -> (i32, i32) {
    %c0_i32 = arith.constant 0 : i32
    %c0_i32_0 = arith.constant 0 : i32
    %c0_i32_1 = arith.constant 0 : i32
    return %c0_i32, %c0_i32_0 : i32, i32
  }
  func.func @transform_2(%arg0: i32) -> (i32, i32) {
    %c0_i32 = arith.constant 0 : i32
    %c0_i32_0 = arith.constant 0 : i32
    %c0_i32_1 = arith.constant 0 : i32
    return %c0_i32, %c0_i32_0 : i32, i32
  }
  func.func @transform_3(%arg0: i32) -> (i32, i32) {
    %c0_i32 = arith.constant 0 : i32
    %c0_i32_0 = arith.constant 0 : i32
    %c0_i32_1 = arith.constant 0 : i32
    return %c0_i32, %c0_i32_0 : i32, i32
  }
  func.func @transform_4(%arg0: i32) -> (i32, i32) {
    %c0_i32 = arith.constant 0 : i32
    %c0_i32_0 = arith.constant 0 : i32
    %c0_i32_1 = arith.constant 0 : i32
    return %c0_i32, %c0_i32_0 : i32, i32
  }
  func.func @transform_5(%arg0: i32) -> (i32, i32) {
    %c0_i32 = arith.constant 0 : i32
    %c0_i32_0 = arith.constant 0 : i32
    %c0_i32_1 = arith.constant 0 : i32
    return %c0_i32, %c0_i32_0 : i32, i32
  }
  func.func @transform_6(%arg0: i32) -> (i32, i32) {
    %c0_i32 = arith.constant 0 : i32
    %c0_i32_0 = arith.constant 0 : i32
    %c0_i32_1 = arith.constant 0 : i32
    return %c0_i32, %c0_i32_0 : i32, i32
  }
  func.func @transform_7(%arg0: i32) -> (i32, i32) {
    %c0_i32 = arith.constant 0 : i32
    %c0_i32_0 = arith.constant 0 : i32
    %c0_i32_1 = arith.constant 0 : i32
    return %c0_i32, %c0_i32_0 : i32, i32
  }
  func.func @transform_8(%arg0: i32) -> (i32, i32) {
    %c0_i32 = arith.constant 0 : i32
    %c0_i32_0 = arith.constant 0 : i32
    %c0_i32_1 = arith.constant 0 : i32
    return %c0_i32, %c0_i32_0 : i32, i32
  }
  func.func @transform_9(%arg0: i32) -> (i32, i32) {
    %c0_i32 = arith.constant 0 : i32
    %c0_i32_0 = arith.constant 0 : i32
    %c0_i32_1 = arith.constant 0 : i32
    return %c0_i32, %c0_i32_0 : i32, i32
  }
  func.func @transform_10(%arg0: i32) -> (i32, i32) {
    %c0_i32 = arith.constant 0 : i32
    %c0_i32_0 = arith.constant 0 : i32
    %c0_i32_1 = arith.constant 0 : i32
    return %c0_i32, %c0_i32_0 : i32, i32
  }
}

</mosaic_0001>

<llo_original>
// kernel: lstm_arg_selector_forward.1
$region0: #{lstm_arg_selector_forward.1}
  #allocation0 [shape = 'u32[]', space=smem, size = 0x4, offset = 0x4, fixed_abs, tag = 'smem constant byte address 0x4 - core index']
  #allocation1 [shape = 'u32[144,128]{1,0:T(1,128)}', space=vmem, size = 0x12000, scoped, tag = 'internal scratch']
  #allocation2 [shape = 'f32[32,32]{1,0:T(8,128)}', space=vmem, size = 0x4000, scoped, tag = 'scratch operand']
  #allocation3 [shape = 'f32[1,1]{1,0:T(1,128)S(1)}', space=vmem, size = 0x200, scoped, tag = 'scoped memory for lstm_arg_selector_forward.1']
  %s0 = inlined_call_operand.vmem [shape: s32[32,1], index: 0, kind: input, shape index: {}]
  %s1 = inlined_call_operand.vmem [shape: f32[10,32], index: 1, kind: input, shape index: {}]
  %s2 = inlined_call_operand.vmem [shape: f32[32,128], index: 2, kind: input, shape index: {}]
  %s3 = inlined_call_operand.vmem [shape: f32[32,128], index: 3, kind: input, shape index: {}]
  %s4 = inlined_call_operand.vmem [shape: f32[1,128], index: 4, kind: input, shape index: {}]
  %s5 = inlined_call_operand.vmem [shape: f32[1,32], index: 5, kind: input, shape index: {}]
  %s6 = inlined_call_operand.vmem [shape: f32[64,32], index: 6, kind: input, shape index: {}]
  %s7 = inlined_call_operand.vmem [shape: f32[1,32], index: 7, kind: input, shape index: {}]
  %s8 = inlined_call_operand.vmem [shape: f32[32,1], index: 8, kind: input, shape index: {}]
  %s9 = inlined_call_operand.<no memory space> [shape: f32[1,1], index: 9, kind: input, shape index: {}]
  %s10 = inlined_call_operand.vmem [shape: f32[32,1], index: 10, kind: output, shape index: {}]
  %s11 = sld [smem:[#allocation0]]
  $region50: #{lstm_arg_selector_forward.1} parent=0
    _
  %s13 = ssub.s32 1, %s11
  %s14 = scalar_select 0, %s13, %s11
  %v15 = vstv %s9
  %16 = vst [vmem:[#allocation3] sm:$0x1] %v15
  // Predicated region
  $region2: #{lstm_arg_selector_forward.1} parent=0 // pred_check
    _
  $region3: #{lstm_arg_selector_forward.1} parent=0 // pred_check_branch
    %18 = sbr.rel (0) target = $region5
  $region4: #{lstm_arg_selector_forward.1} parent=0 // pred_region
    _
  $region5: #{lstm_arg_selector_forward.1} parent=0 // pred_fallthru
    _
  // Predicated region
  $region6: #{lstm_arg_selector_forward.1} parent=0 // pred_check
    _
  $region7: #{lstm_arg_selector_forward.1} parent=0 // pred_check_branch
    %20 = sbr.rel (0) target = $region9
  $region8: #{lstm_arg_selector_forward.1} parent=0 // pred_region
    _
  $region9: #{lstm_arg_selector_forward.1} parent=0 // pred_fallthru
    _
  // Predicated region
  $region10: #{lstm_arg_selector_forward.1} parent=0 // pred_check
    _
  $region11: #{lstm_arg_selector_forward.1} parent=0 // pred_check_branch
    %22 = sbr.rel (0) target = $region13
  $region12: #{lstm_arg_selector_forward.1} parent=0 // pred_region
    _
  $region13: #{lstm_arg_selector_forward.1} parent=0 // pred_fallthru
    _
  // Predicated region
  $region14: #{lstm_arg_selector_forward.1} parent=0 // pred_check
    _
  $region15: #{lstm_arg_selector_forward.1} parent=0 // pred_check_branch
    %24 = sbr.rel (0) target = $region17
  $region16: #{lstm_arg_selector_forward.1} parent=0 // pred_region
    _
  $region17: #{lstm_arg_selector_forward.1} parent=0 // pred_fallthru
    _
  // Predicated region
  $region18: #{lstm_arg_selector_forward.1} parent=0 // pred_check
    _
  $region19: #{lstm_arg_selector_forward.1} parent=0 // pred_check_branch
    %26 = sbr.rel (0) target = $region21
  $region20: #{lstm_arg_selector_forward.1} parent=0 // pred_region
    _
  $region21: #{lstm_arg_selector_forward.1} parent=0 // pred_fallthru
    _
  // Predicated region
  $region22: #{lstm_arg_selector_forward.1} parent=0 // pred_check
    _
  $region23: #{lstm_arg_selector_forward.1} parent=0 // pred_check_branch
    %28 = sbr.rel (0) target = $region25
  $region24: #{lstm_arg_selector_forward.1} parent=0 // pred_region
    _
  $region25: #{lstm_arg_selector_forward.1} parent=0 // pred_fallthru
    _
  // Predicated region
  $region26: #{lstm_arg_selector_forward.1} parent=0 // pred_check
    _
  $region27: #{lstm_arg_selector_forward.1} parent=0 // pred_check_branch
    %30 = sbr.rel (0) target = $region29
  $region28: #{lstm_arg_selector_forward.1} parent=0 // pred_region
    _
  $region29: #{lstm_arg_selector_forward.1} parent=0 // pred_fallthru
    _
  // Predicated region
  $region30: #{lstm_arg_selector_forward.1} parent=0 // pred_check
    _
  $region31: #{lstm_arg_selector_forward.1} parent=0 // pred_check_branch
    %32 = sbr.rel (0) target = $region33
  $region32: #{lstm_arg_selector_forward.1} parent=0 // pred_region
    _
  $region33: #{lstm_arg_selector_forward.1} parent=0 // pred_fallthru
    _
  // Predicated region
  $region34: #{lstm_arg_selector_forward.1} parent=0 // pred_check
    _
  $region35: #{lstm_arg_selector_forward.1} parent=0 // pred_check_branch
    %34 = sbr.rel (0) target = $region37
  $region36: #{lstm_arg_selector_forward.1} parent=0 // pred_region
    _
  $region37: #{lstm_arg_selector_forward.1} parent=0 // pred_fallthru
    _
  // Predicated region
  $region38: #{lstm_arg_selector_forward.1} parent=0 // pred_check
    _
  $region39: #{lstm_arg_selector_forward.1} parent=0 // pred_check_branch
    %36 = sbr.rel (0) target = $region41
  $region40: #{lstm_arg_selector_forward.1} parent=0 // pred_region
    _
  $region41: #{lstm_arg_selector_forward.1} parent=0 // pred_fallthru
    _
  %v37 = vld [vmem:[%s0] sm:$0xff]
  %v38 = vld [vmem:[%s0 + $0x8] sm:$0xff]
  %v39 = vld [vmem:[%s0 + $0x10] sm:$0xff]
  %v40 = vld [vmem:[%s0 + $0x18] sm:$0xff]
  %v41 = vlaneseq
  %v42 = vand.u32 %v41, 127
  %43 = vset.pattern.permute.xlu0 0
  %44 = vperm.xlu0 %43, %v37
  %v45 = vpop.permute.xlu0 %44
  %46 = vset.pattern.permute.xlu0 0
  %47 = vperm.xlu0 %46, %v38
  %v48 = vpop.permute.xlu0 %47
  %49 = vset.pattern.permute.xlu0 0
  %50 = vperm.xlu0 %49, %v39
  %v51 = vpop.permute.xlu0 %50
  %52 = vset.pattern.permute.xlu0 0
  %53 = vperm.xlu0 %52, %v40
  %v54 = vpop.permute.xlu0 %53
  %vm55 = vcmp.eq.s32.totalorder %v42, %v45
  %vm56 = vcmp.eq.s32.totalorder %v42, %v48
  %vm57 = vcmp.eq.s32.totalorder %v42, %v51
  %vm58 = vcmp.eq.s32.totalorder %v42, %v54
  %v59 = vsel %vm55, 1.0, 0.0
  %v60 = vsel %vm56, 1.0, 0.0
  %v61 = vsel %vm57, 1.0, 0.0
  %v62 = vsel %vm58, 1.0, 0.0
  %v63 = vld [vmem:[%s1] sm:$0xff]
  %v64 = vld [vmem:[%s1 + $0x8] sm:$0x3]
  %vm65 = vcmask 80896
  %v67 = vsel %vm65, %v59, 0
  %v70 = vsel %vm65, %v60, 0
  %v73 = vsel %vm65, %v61, 0
  %v76 = vsel %vm65, %v62, 0
  %vm78 = vcmask 1041408
  %v80 = vsel %vm78, %v64, 0
  %82 = vmatprep.subr.mxu0 0.0
  %83 = vmatpush1.msra.mxu0 0.0
  %84 = vmatprep.subr.mxu0 0.0
  %85 = vmatpush1.msra.mxu0 0.0
  %86 = vmatprep.subr.mxu0 0.0
  %87 = vmatpush1.msra.mxu0 0.0
  %88 = vmatprep.subr.mxu0 0.0
  %89 = vmatpush1.msra.mxu0 0.0
  %90 = vmatprep.subr.mxu0 0.0
  %91 = vmatpush1.msra.mxu0 0.0
  %92 = vmatprep.subr.mxu0 0.0
  %93 = vmatpush1.msra.mxu0 0.0
  %94 = vmatprep.subr.mxu0 0.0
  %95 = vmatpush1.msra.mxu0 0.0
  %96 = vmatprep.subr.mxu0 0.0
  %97 = vmatpush1.msra.mxu0 0.0
  %98 = vmatprep.subr.mxu0 0.0
  %99 = vmatpush1.msra.mxu0 0.0
  %100 = vmatprep.subr.mxu0 0.0
  %101 = vmatpush1.msra.mxu0 0.0
  %102 = vmatprep.subr.mxu0 0.0
  %103 = vmatpush1.msra.mxu0 0.0
  %104 = vmatprep.subr.mxu0 0.0
  %105 = vmatpush1.msra.mxu0 0.0
  %106 = vmatprep.subr.mxu0 0.0
  %107 = vmatpush1.msra.mxu0 0.0
  %108 = vmatprep.subr.mxu0 0.0
  %109 = vmatpush1.msra.mxu0 0.0
  %110 = vmatprep.subr.mxu0 0.0
  %111 = vmatpush1.msra.mxu0 %v80
  %112 = vmatprep.subr.mxu0 0.0
  %113 = vmatpush1.msra.mxu0 %v63
  %114 = vmatprep.subr.mxu0 0.0
  %115 = vmatpush2.msra.mxu0 0.0
  %116 = vmatprep.subr.mxu0 0.0
  %117 = vmatpush2.msra.mxu0 0.0
  %118 = vmatprep.subr.mxu0 0.0
  %119 = vmatpush2.msra.mxu0 0.0
  %120 = vmatprep.subr.mxu0 0.0
  %121 = vmatpush2.msra.mxu0 0.0
  %122 = vmatprep.subr.mxu0 0.0
  %123 = vmatpush2.msra.mxu0 0.0
  %124 = vmatprep.subr.mxu0 0.0
  %125 = vmatpush2.msra.mxu0 0.0
  %126 = vmatprep.subr.mxu0 0.0
  %127 = vmatpush2.msra.mxu0 0.0
  %128 = vmatprep.subr.mxu0 0.0
  %129 = vmatpush2.msra.mxu0 0.0
  %130 = vmatprep.subr.mxu0 0.0
  %131 = vmatpush2.msra.mxu0 0.0
  %132 = vmatprep.subr.mxu0 0.0
  %133 = vmatpush2.msra.mxu0 0.0
  %134 = vmatprep.subr.mxu0 0.0
  %135 = vmatpush2.msra.mxu0 0.0
  %136 = vmatprep.subr.mxu0 0.0
  %137 = vmatpush2.msra.mxu0 0.0
  %138 = vmatprep.subr.mxu0 0.0
  %139 = vmatpush2.msra.mxu0 0.0
  %140 = vmatprep.subr.mxu0 0.0
  %141 = vmatpush2.msra.mxu0 0.0
  %142 = vmatprep.subr.mxu0 0.0
  %143 = vmatpush2.msra.mxu0 0.0
  %144 = vmatprep.subr.mxu0 0.0
  %145 = vmatpush2.msra.mxu0 0.0
  %146 = vmatprep.mubr.f32.mxu0 0.0
  %147 = vmatmul.mubr.f32.gmra.mxu0 %v67
  %v148 = vpop.f32.mrf.mxu0
  %v149 = vadd.f32 0.0, %v148
  %v150 = vpop.f32.mrf.mxu0
  %151 = vmatprep.mubr.f32.mxu0 0.0
  %152 = vmatmul.mubr.f32.gmra.mxu0 %v70
  %v153 = vpop.f32.mrf.mxu0
  %v154 = vadd.f32 0.0, %v153
  %v155 = vpop.f32.mrf.mxu0
  %156 = vmatprep.mubr.f32.mxu0 0.0
  %157 = vmatmul.mubr.f32.gmra.mxu0 %v73
  %v158 = vpop.f32.mrf.mxu0
  %v159 = vadd.f32 0.0, %v158
  %v160 = vpop.f32.mrf.mxu0
  %161 = vmatprep.mubr.f32.mxu0 0.0
  %162 = vmatmul.mubr.f32.gmra.mxu0 %v76
  %v163 = vpop.f32.mrf.mxu0
  %v164 = vadd.f32 0.0, %v163
  %v165 = vpop.f32.mrf.mxu0
  %166 = vdwg.mxu0
  %v167 = vld [vmem:[%s2] sm:$0xff]
  %v168 = vld [vmem:[%s2 + $0x8] sm:$0xff]
  %v169 = vld [vmem:[%s2 + $0x10] sm:$0xff]
  %v170 = vld [vmem:[%s2 + $0x18] sm:$0xff]
  %v171 = vld [vmem:[%s4] sm:$0x1]
  %v173 = vlaneseq
  %v174 = vshrl.u32 %v173, 7
  %v175 = vsub.s32 0, %v174
  %v176 = vrot.slane %v171, %v175
  %vm178 = vcmask 261120
  %v180 = vsel %vm178, %v149, 0
  %v183 = vsel %vm178, %v154, 0
  %v186 = vsel %vm178, %v159, 0
  %v189 = vsel %vm178, %v164, 0
  %191 = vmatprep.subr.mxu0 0.0
  %192 = vmatpush1.msra.mxu0 0.0
  %193 = vmatprep.subr.mxu0 0.0
  %194 = vmatpush1.msra.mxu0 0.0
  %195 = vmatprep.subr.mxu0 0.0
  %196 = vmatpush1.msra.mxu0 0.0
  %197 = vmatprep.subr.mxu0 0.0
  %198 = vmatpush1.msra.mxu0 0.0
  %199 = vmatprep.subr.mxu0 0.0
  %200 = vmatpush1.msra.mxu0 0.0
  %201 = vmatprep.subr.mxu0 0.0
  %202 = vmatpush1.msra.mxu0 0.0
  %203 = vmatprep.subr.mxu0 0.0
  %204 = vmatpush1.msra.mxu0 0.0
  %205 = vmatprep.subr.mxu0 0.0
  %206 = vmatpush1.msra.mxu0 0.0
  %207 = vmatprep.subr.mxu0 0.0
  %208 = vmatpush1.msra.mxu0 0.0
  %209 = vmatprep.subr.mxu0 0.0
  %210 = vmatpush1.msra.mxu0 0.0
  %211 = vmatprep.subr.mxu0 0.0
  %212 = vmatpush1.msra.mxu0 0.0
  %213 = vmatprep.subr.mxu0 0.0
  %214 = vmatpush1.msra.mxu0 0.0
  %215 = vmatprep.subr.mxu0 0.0
  %216 = vmatpush1.msra.mxu0 %v170
  %217 = vmatprep.subr.mxu0 0.0
  %218 = vmatpush1.msra.mxu0 %v169
  %219 = vmatprep.subr.mxu0 0.0
  %220 = vmatpush1.msra.mxu0 %v168
  %221 = vmatprep.subr.mxu0 0.0
  %222 = vmatpush1.msra.mxu0 %v167
  %223 = vmatprep.subr.mxu0 0.0
  %224 = vmatpush2.msra.mxu0 0.0
  %225 = vmatprep.subr.mxu0 0.0
  %226 = vmatpush2.msra.mxu0 0.0
  %227 = vmatprep.subr.mxu0 0.0
  %228 = vmatpush2.msra.mxu0 0.0
  %229 = vmatprep.subr.mxu0 0.0
  %230 = vmatpush2.msra.mxu0 0.0
  %231 = vmatprep.subr.mxu0 0.0
  %232 = vmatpush2.msra.mxu0 0.0
  %233 = vmatprep.subr.mxu0 0.0
  %234 = vmatpush2.msra.mxu0 0.0
  %235 = vmatprep.subr.mxu0 0.0
  %236 = vmatpush2.msra.mxu0 0.0
  %237 = vmatprep.subr.mxu0 0.0
  %238 = vmatpush2.msra.mxu0 0.0
  %239 = vmatprep.subr.mxu0 0.0
  %240 = vmatpush2.msra.mxu0 0.0
  %241 = vmatprep.subr.mxu0 0.0
  %242 = vmatpush2.msra.mxu0 0.0
  %243 = vmatprep.subr.mxu0 0.0
  %244 = vmatpush2.msra.mxu0 0.0
  %245 = vmatprep.subr.mxu0 0.0
  %246 = vmatpush2.msra.mxu0 0.0
  %247 = vmatprep.subr.mxu0 0.0
  %248 = vmatpush2.msra.mxu0 0.0
  %249 = vmatprep.subr.mxu0 0.0
  %250 = vmatpush2.msra.mxu0 0.0
  %251 = vmatprep.subr.mxu0 0.0
  %252 = vmatpush2.msra.mxu0 0.0
  %253 = vmatprep.subr.mxu0 0.0
  %254 = vmatpush2.msra.mxu0 0.0
  %255 = vmatprep.mubr.f32.mxu0 0.0
  %256 = vmatmul.mubr.f32.gmra.mxu0 %v180
  %v257 = vpop.f32.mrf.mxu0
  %v258 = vadd.f32 %v176, %v257
  %v259 = vpop.f32.mrf.mxu0
  %260 = vmatprep.mubr.f32.mxu0 0.0
  %261 = vmatmul.mubr.f32.gmra.mxu0 %v183
  %v262 = vpop.f32.mrf.mxu0
  %v263 = vadd.f32 %v176, %v262
  %v264 = vpop.f32.mrf.mxu0
  %265 = vmatprep.mubr.f32.mxu0 0.0
  %266 = vmatmul.mubr.f32.gmra.mxu0 %v186
  %v267 = vpop.f32.mrf.mxu0
  %v268 = vadd.f32 %v176, %v267
  %v269 = vpop.f32.mrf.mxu0
  %270 = vmatprep.mubr.f32.mxu0 0.0
  %271 = vmatmul.mubr.f32.gmra.mxu0 %v189
  %v272 = vpop.f32.mrf.mxu0
  %v273 = vadd.f32 %v176, %v272
  %v274 = vpop.f32.mrf.mxu0
  %275 = vdwg.mxu0
  %v276 = vld [vmem:[%s3] sm:$0xff]
  %v277 = vld [vmem:[%s3 + $0x8] sm:$0xff]
  %v278 = vld [vmem:[%s3 + $0x10] sm:$0xff]
  %v279 = vld [vmem:[%s3 + $0x18] sm:$0xff]
  %v280 = vld [vmem:[%s5] sm:$0x1]
  %v282 = vlaneseq
  %v283 = vshrl.u32 %v282, 7
  %v284 = vsub.s32 0, %v283
  %v285 = vrot.slane %v280, %v284
  %vm287 = vcmask 257024
  %288 = vst.msk [vmem:[#allocation2] sm:$0xf] %vm287, %v285
  %v289 = vsel %vm178, %v285, 0
  %291 = vmatprep.subr.mxu0 0.0
  %292 = vmatpush1.msra.mxu0 0.0
  %293 = vmatprep.subr.mxu0 0.0
  %294 = vmatpush1.msra.mxu0 0.0
  %295 = vmatprep.subr.mxu0 0.0
  %296 = vmatpush1.msra.mxu0 0.0
  %297 = vmatprep.subr.mxu0 0.0
  %298 = vmatpush1.msra.mxu0 0.0
  %299 = vmatprep.subr.mxu0 0.0
  %300 = vmatpush1.msra.mxu0 0.0
  %301 = vmatprep.subr.mxu0 0.0
  %302 = vmatpush1.msra.mxu0 0.0
  %303 = vmatprep.subr.mxu0 0.0
  %304 = vmatpush1.msra.mxu0 0.0
  %305 = vmatprep.subr.mxu0 0.0
  %306 = vmatpush1.msra.mxu0 0.0
  %307 = vmatprep.subr.mxu0 0.0
  %308 = vmatpush1.msra.mxu0 0.0
  %309 = vmatprep.subr.mxu0 0.0
  %310 = vmatpush1.msra.mxu0 0.0
  %311 = vmatprep.subr.mxu0 0.0
  %312 = vmatpush1.msra.mxu0 0.0
  %313 = vmatprep.subr.mxu0 0.0
  %314 = vmatpush1.msra.mxu0 0.0
  %315 = vmatprep.subr.mxu0 0.0
  %316 = vmatpush1.msra.mxu0 %v279
  %317 = vmatprep.subr.mxu0 0.0
  %318 = vmatpush1.msra.mxu0 %v278
  %319 = vmatprep.subr.mxu0 0.0
  %320 = vmatpush1.msra.mxu0 %v277
  %321 = vmatprep.subr.mxu0 0.0
  %322 = vmatpush1.msra.mxu0 %v276
  %323 = vmatprep.subr.mxu0 0.0
  %324 = vmatpush2.msra.mxu0 0.0
  %325 = vmatprep.subr.mxu0 0.0
  %326 = vmatpush2.msra.mxu0 0.0
  %327 = vmatprep.subr.mxu0 0.0
  %328 = vmatpush2.msra.mxu0 0.0
  %329 = vmatprep.subr.mxu0 0.0
  %330 = vmatpush2.msra.mxu0 0.0
  %331 = vmatprep.subr.mxu0 0.0
  %332 = vmatpush2.msra.mxu0 0.0
  %333 = vmatprep.subr.mxu0 0.0
  %334 = vmatpush2.msra.mxu0 0.0
  %335 = vmatprep.subr.mxu0 0.0
  %336 = vmatpush2.msra.mxu0 0.0
  %337 = vmatprep.subr.mxu0 0.0
  %338 = vmatpush2.msra.mxu0 0.0
  %339 = vmatprep.subr.mxu0 0.0
  %340 = vmatpush2.msra.mxu0 0.0
  %341 = vmatprep.subr.mxu0 0.0
  %342 = vmatpush2.msra.mxu0 0.0
  %343 = vmatprep.subr.mxu0 0.0
  %344 = vmatpush2.msra.mxu0 0.0
  %345 = vmatprep.subr.mxu0 0.0
  %346 = vmatpush2.msra.mxu0 0.0
  %347 = vmatprep.subr.mxu0 0.0
  %348 = vmatpush2.msra.mxu0 0.0
  %349 = vmatprep.subr.mxu0 0.0
  %350 = vmatpush2.msra.mxu0 0.0
  %351 = vmatprep.subr.mxu0 0.0
  %352 = vmatpush2.msra.mxu0 0.0
  %353 = vmatprep.subr.mxu0 0.0
  %354 = vmatpush2.msra.mxu0 0.0
  %355 = vmatprep.mubr.f32.mxu0 0.0
  %356 = vmatmul.mubr.f32.gmra.mxu0 %v289
  %v357 = vpop.f32.mrf.mxu0
  %v358 = vadd.f32 0.0, %v357
  %v359 = vpop.f32.mrf.mxu0
  %360 = vdwg.mxu0
  %v361 = vadd.f32 %v258, %v358
  %366 = vrot.lane.b32.xlu0 %v276, 96
  %v367 = vpop.permute.xlu0 %366
  %368 = vrot.lane.b32.xlu0 %v277, 96
  %v369 = vpop.permute.xlu0 %368
  %370 = vrot.lane.b32.xlu0 %v278, 96
  %v371 = vpop.permute.xlu0 %370
  %372 = vrot.lane.b32.xlu0 %v279, 96
  %v373 = vpop.permute.xlu0 %372
  %378 = vmatprep.subr.mxu0 0.0
  %379 = vmatpush1.msra.mxu0 0.0
  %380 = vmatprep.subr.mxu0 0.0
  %381 = vmatpush1.msra.mxu0 0.0
  %382 = vmatprep.subr.mxu0 0.0
  %383 = vmatpush1.msra.mxu0 0.0
  %384 = vmatprep.subr.mxu0 0.0
  %385 = vmatpush1.msra.mxu0 0.0
  %386 = vmatprep.subr.mxu0 0.0
  %387 = vmatpush1.msra.mxu0 0.0
  %388 = vmatprep.subr.mxu0 0.0
  %389 = vmatpush1.msra.mxu0 0.0
  %390 = vmatprep.subr.mxu0 0.0
  %391 = vmatpush1.msra.mxu0 0.0
  %392 = vmatprep.subr.mxu0 0.0
  %393 = vmatpush1.msra.mxu0 0.0
  %394 = vmatprep.subr.mxu0 0.0
  %395 = vmatpush1.msra.mxu0 0.0
  %396 = vmatprep.subr.mxu0 0.0
  %397 = vmatpush1.msra.mxu0 0.0
  %398 = vmatprep.subr.mxu0 0.0
  %399 = vmatpush1.msra.mxu0 0.0
  %400 = vmatprep.subr.mxu0 0.0
  %401 = vmatpush1.msra.mxu0 0.0
  %402 = vmatprep.subr.mxu0 0.0
  %403 = vmatpush1.msra.mxu0 %v373
  %404 = vmatprep.subr.mxu0 0.0
  %405 = vmatpush1.msra.mxu0 %v371
  %406 = vmatprep.subr.mxu0 0.0
  %407 = vmatpush1.msra.mxu0 %v369
  %408 = vmatprep.subr.mxu0 0.0
  %409 = vmatpush1.msra.mxu0 %v367
  %410 = vmatprep.subr.mxu0 0.0
  %411 = vmatpush2.msra.mxu0 0.0
  %412 = vmatprep.subr.mxu0 0.0
  %413 = vmatpush2.msra.mxu0 0.0
  %414 = vmatprep.subr.mxu0 0.0
  %415 = vmatpush2.msra.mxu0 0.0
  %416 = vmatprep.subr.mxu0 0.0
  %417 = vmatpush2.msra.mxu0 0.0
  %418 = vmatprep.subr.mxu0 0.0
  %419 = vmatpush2.msra.mxu0 0.0
  %420 = vmatprep.subr.mxu0 0.0
  %421 = vmatpush2.msra.mxu0 0.0
  %422 = vmatprep.subr.mxu0 0.0
  %423 = vmatpush2.msra.mxu0 0.0
  %424 = vmatprep.subr.mxu0 0.0
  %425 = vmatpush2.msra.mxu0 0.0
  %426 = vmatprep.subr.mxu0 0.0
  %427 = vmatpush2.msra.mxu0 0.0
  %428 = vmatprep.subr.mxu0 0.0
  %429 = vmatpush2.msra.mxu0 0.0
  %430 = vmatprep.subr.mxu0 0.0
  %431 = vmatpush2.msra.mxu0 0.0
  %432 = vmatprep.subr.mxu0 0.0
  %433 = vmatpush2.msra.mxu0 0.0
  %434 = vmatprep.subr.mxu0 0.0
  %435 = vmatpush2.msra.mxu0 0.0
  %436 = vmatprep.subr.mxu0 0.0
  %437 = vmatpush2.msra.mxu0 0.0
  %438 = vmatprep.subr.mxu0 0.0
  %439 = vmatpush2.msra.mxu0 0.0
  %440 = vmatprep.subr.mxu0 0.0
  %441 = vmatpush2.msra.mxu0 0.0
  %442 = vmatprep.mubr.f32.mxu0 0.0
  %443 = vmatmul.mubr.f32.gmra.mxu0 %v289
  %v444 = vpop.f32.mrf.mxu0
  %v445 = vadd.f32 0.0, %v444
  %v446 = vpop.f32.mrf.mxu0
  %447 = vdwg.mxu0
  %449 = vrot.lane.b32.xlu0 %v445, 32
  %v450 = vpop.permute.xlu0 %449
  %v452 = vadd.f32 %v258, %v450
  %453 = vrot.lane.b32.xlu0 %v276, 64
  %v454 = vpop.permute.xlu0 %453
  %455 = vrot.lane.b32.xlu0 %v277, 64
  %v456 = vpop.permute.xlu0 %455
  %457 = vrot.lane.b32.xlu0 %v278, 64
  %v458 = vpop.permute.xlu0 %457
  %459 = vrot.lane.b32.xlu0 %v279, 64
  %v460 = vpop.permute.xlu0 %459
  %465 = vmatprep.subr.mxu0 0.0
  %466 = vmatpush1.msra.mxu0 0.0
  %467 = vmatprep.subr.mxu0 0.0
  %468 = vmatpush1.msra.mxu0 0.0
  %469 = vmatprep.subr.mxu0 0.0
  %470 = vmatpush1.msra.mxu0 0.0
  %471 = vmatprep.subr.mxu0 0.0
  %472 = vmatpush1.msra.mxu0 0.0
  %473 = vmatprep.subr.mxu0 0.0
  %474 = vmatpush1.msra.mxu0 0.0
  %475 = vmatprep.subr.mxu0 0.0
  %476 = vmatpush1.msra.mxu0 0.0
  %477 = vmatprep.subr.mxu0 0.0
  %478 = vmatpush1.msra.mxu0 0.0
  %479 = vmatprep.subr.mxu0 0.0
  %480 = vmatpush1.msra.mxu0 0.0
  %481 = vmatprep.subr.mxu0 0.0
  %482 = vmatpush1.msra.mxu0 0.0
  %483 = vmatprep.subr.mxu0 0.0
  %484 = vmatpush1.msra.mxu0 0.0
  %485 = vmatprep.subr.mxu0 0.0
  %486 = vmatpush1.msra.mxu0 0.0
  %487 = vmatprep.subr.mxu0 0.0
  %488 = vmatpush1.msra.mxu0 0.0
  %489 = vmatprep.subr.mxu0 0.0
  %490 = vmatpush1.msra.mxu0 %v460
  %491 = vmatprep.subr.mxu0 0.0
  %492 = vmatpush1.msra.mxu0 %v458
  %493 = vmatprep.subr.mxu0 0.0
  %494 = vmatpush1.msra.mxu0 %v456
  %495 = vmatprep.subr.mxu0 0.0
  %496 = vmatpush1.msra.mxu0 %v454
  %497 = vmatprep.subr.mxu0 0.0
  %498 = vmatpush2.msra.mxu0 0.0
  %499 = vmatprep.subr.mxu0 0.0
  %500 = vmatpush2.msra.mxu0 0.0
  %501 = vmatprep.subr.mxu0 0.0
  %502 = vmatpush2.msra.mxu0 0.0
  %503 = vmatprep.subr.mxu0 0.0
  %504 = vmatpush2.msra.mxu0 0.0
  %505 = vmatprep.subr.mxu0 0.0
  %506 = vmatpush2.msra.mxu0 0.0
  %507 = vmatprep.subr.mxu0 0.0
  %508 = vmatpush2.msra.mxu0 0.0
  %509 = vmatprep.subr.mxu0 0.0
  %510 = vmatpush2.msra.mxu0 0.0
  %511 = vmatprep.subr.mxu0 0.0
  %512 = vmatpush2.msra.mxu0 0.0
  %513 = vmatprep.subr.mxu0 0.0
  %514 = vmatpush2.msra.mxu0 0.0
  %515 = vmatprep.subr.mxu0 0.0
  %516 = vmatpush2.msra.mxu0 0.0
  %517 = vmatprep.subr.mxu0 0.0
  %518 = vmatpush2.msra.mxu0 0.0
  %519 = vmatprep.subr.mxu0 0.0
  %520 = vmatpush2.msra.mxu0 0.0
  %521 = vmatprep.subr.mxu0 0.0
  %522 = vmatpush2.msra.mxu0 0.0
  %523 = vmatprep.subr.mxu0 0.0
  %524 = vmatpush2.msra.mxu0 0.0
  %525 = vmatprep.subr.mxu0 0.0
  %526 = vmatpush2.msra.mxu0 0.0
  %527 = vmatprep.subr.mxu0 0.0
  %528 = vmatpush2.msra.mxu0 0.0
  %529 = vmatprep.mubr.f32.mxu0 0.0
  %530 = vmatmul.mubr.f32.gmra.mxu0 %v289
  %v531 = vpop.f32.mrf.mxu0
  %v532 = vadd.f32 0.0, %v531
  %v533 = vpop.f32.mrf.mxu0
  %534 = vdwg.mxu0
  %536 = vrot.lane.b32.xlu0 %v532, 64
  %v537 = vpop.permute.xlu0 %536
  %v539 = vadd.f32 %v258, %v537
  %540 = vrot.lane.b32.xlu0 %v276, 32
  %v541 = vpop.permute.xlu0 %540
  %542 = vrot.lane.b32.xlu0 %v277, 32
  %v543 = vpop.permute.xlu0 %542
  %544 = vrot.lane.b32.xlu0 %v278, 32
  %v545 = vpop.permute.xlu0 %544
  %546 = vrot.lane.b32.xlu0 %v279, 32
  %v547 = vpop.permute.xlu0 %546
  %552 = vmatprep.subr.mxu0 0.0
  %553 = vmatpush1.msra.mxu0 0.0
  %554 = vmatprep.subr.mxu0 0.0
  %555 = vmatpush1.msra.mxu0 0.0
  %556 = vmatprep.subr.mxu0 0.0
  %557 = vmatpush1.msra.mxu0 0.0
  %558 = vmatprep.subr.mxu0 0.0
  %559 = vmatpush1.msra.mxu0 0.0
  %560 = vmatprep.subr.mxu0 0.0
  %561 = vmatpush1.msra.mxu0 0.0
  %562 = vmatprep.subr.mxu0 0.0
  %563 = vmatpush1.msra.mxu0 0.0
  %564 = vmatprep.subr.mxu0 0.0
  %565 = vmatpush1.msra.mxu0 0.0
  %566 = vmatprep.subr.mxu0 0.0
  %567 = vmatpush1.msra.mxu0 0.0
  %568 = vmatprep.subr.mxu0 0.0
  %569 = vmatpush1.msra.mxu0 0.0
  %570 = vmatprep.subr.mxu0 0.0
  %571 = vmatpush1.msra.mxu0 0.0
  %572 = vmatprep.subr.mxu0 0.0
  %573 = vmatpush1.msra.mxu0 0.0
  %574 = vmatprep.subr.mxu0 0.0
  %575 = vmatpush1.msra.mxu0 0.0
  %576 = vmatprep.subr.mxu0 0.0
  %577 = vmatpush1.msra.mxu0 %v547
  %578 = vmatprep.subr.mxu0 0.0
  %579 = vmatpush1.msra.mxu0 %v545
  %580 = vmatprep.subr.mxu0 0.0
  %581 = vmatpush1.msra.mxu0 %v543
  %582 = vmatprep.subr.mxu0 0.0
  %583 = vmatpush1.msra.mxu0 %v541
  %584 = vmatprep.subr.mxu0 0.0
  %585 = vmatpush2.msra.mxu0 0.0
  %586 = vmatprep.subr.mxu0 0.0
  %587 = vmatpush2.msra.mxu0 0.0
  %588 = vmatprep.subr.mxu0 0.0
  %589 = vmatpush2.msra.mxu0 0.0
  %590 = vmatprep.subr.mxu0 0.0
  %591 = vmatpush2.msra.mxu0 0.0
  %592 = vmatprep.subr.mxu0 0.0
  %593 = vmatpush2.msra.mxu0 0.0
  %594 = vmatprep.subr.mxu0 0.0
  %595 = vmatpush2.msra.mxu0 0.0
  %596 = vmatprep.subr.mxu0 0.0
  %597 = vmatpush2.msra.mxu0 0.0
  %598 = vmatprep.subr.mxu0 0.0
  %599 = vmatpush2.msra.mxu0 0.0
  %600 = vmatprep.subr.mxu0 0.0
  %601 = vmatpush2.msra.mxu0 0.0
  %602 = vmatprep.subr.mxu0 0.0
  %603 = vmatpush2.msra.mxu0 0.0
  %604 = vmatprep.subr.mxu0 0.0
  %605 = vmatpush2.msra.mxu0 0.0
  %606 = vmatprep.subr.mxu0 0.0
  %607 = vmatpush2.msra.mxu0 0.0
  %608 = vmatprep.subr.mxu0 0.0
  %609 = vmatpush2.msra.mxu0 0.0
  %610 = vmatprep.subr.mxu0 0.0
  %611 = vmatpush2.msra.mxu0 0.0
  %612 = vmatprep.subr.mxu0 0.0
  %613 = vmatpush2.msra.mxu0 0.0
  %614 = vmatprep.subr.mxu0 0.0
  %615 = vmatpush2.msra.mxu0 0.0
  %616 = vmatprep.mubr.f32.mxu0 0.0
  %617 = vmatmul.mubr.f32.gmra.mxu0 %v289
  %v618 = vpop.f32.mrf.mxu0
  %v619 = vadd.f32 0.0, %v618
  %v620 = vpop.f32.mrf.mxu0
  %621 = vdwg.mxu0
  %623 = vrot.lane.b32.xlu0 %v619, 96
  %v624 = vpop.permute.xlu0 %623
  %v626 = vadd.f32 %v258, %v624
  %v627 = vxor.u32 %v452, 2147483648
  %v628 = vmul.f32 %v627, 1.442695
  %v629 = vpow.pop %v628
  %v630 = vadd.f32 %v629, 1.0
  %v631 = vrcp.pop %v630
  %v632 = vmul.f32 1.0, %v631
  %633 = vrot.lane.b32.xlu0 %v285, 32
  %v634 = vpop.permute.xlu0 %633
  %v636 = vmul.f32 %v632, %v634
  %v637 = vxor.u32 %v361, 2147483648
  %v638 = vmul.f32 %v637, 1.442695
  %v639 = vpow.pop %v638
  %v640 = vadd.f32 %v639, 1.0
  %v641 = vrcp.pop %v640
  %v642 = vmul.f32 1.0, %v641
  %v643 = vtanh.pop %v539
  %645 = vrot.lane.b32.xlu0 %v643, 64
  %v646 = vpop.permute.xlu0 %645
  %v648 = vmul.f32 %v642, %v646
  %650 = vrot.lane.b32.xlu0 %v648, 32
  %v651 = vpop.permute.xlu0 %650
  %v653 = vadd.f32 %v636, %v651
  %v654 = vxor.u32 %v626, 2147483648
  %v655 = vmul.f32 %v654, 1.442695
  %v656 = vpow.pop %v655
  %v657 = vadd.f32 %v656, 1.0
  %v658 = vrcp.pop %v657
  %v659 = vmul.f32 1.0, %v658
  %v660 = vtanh.pop %v653
  %662 = vrot.lane.b32.xlu0 %v660, 64
  %v663 = vpop.permute.xlu0 %662
  %v665 = vmul.f32 %v659, %v663
  %667 = vrot.lane.b32.xlu0 %v665, 32
  %v668 = vpop.permute.xlu0 %667
  %670 = vst.msk [vmem:[#allocation2 + $0x4] sm:$0xf] %vm287, %v668
  %v671 = vsel %vm178, %v668, 0
  %673 = vmatprep.subr.mxu0 0.0
  %674 = vmatpush1.msra.mxu0 0.0
  %675 = vmatprep.subr.mxu0 0.0
  %676 = vmatpush1.msra.mxu0 0.0
  %677 = vmatprep.subr.mxu0 0.0
  %678 = vmatpush1.msra.mxu0 0.0
  %679 = vmatprep.subr.mxu0 0.0
  %680 = vmatpush1.msra.mxu0 0.0
  %681 = vmatprep.subr.mxu0 0.0
  %682 = vmatpush1.msra.mxu0 0.0
  %683 = vmatprep.subr.mxu0 0.0
  %684 = vmatpush1.msra.mxu0 0.0
  %685 = vmatprep.subr.mxu0 0.0
  %686 = vmatpush1.msra.mxu0 0.0
  %687 = vmatprep.subr.mxu0 0.0
  %688 = vmatpush1.msra.mxu0 0.0
  %689 = vmatprep.subr.mxu0 0.0
  %690 = vmatpush1.msra.mxu0 0.0
  %691 = vmatprep.subr.mxu0 0.0
  %692 = vmatpush1.msra.mxu0 0.0
  %693 = vmatprep.subr.mxu0 0.0
  %694 = vmatpush1.msra.mxu0 0.0
  %695 = vmatprep.subr.mxu0 0.0
  %696 = vmatpush1.msra.mxu0 0.0
  %697 = vmatprep.subr.mxu0 0.0
  %698 = vmatpush1.msra.mxu0 %v279
  %699 = vmatprep.subr.mxu0 0.0
  %700 = vmatpush1.msra.mxu0 %v278
  %701 = vmatprep.subr.mxu0 0.0
  %702 = vmatpush1.msra.mxu0 %v277
  %703 = vmatprep.subr.mxu0 0.0
  %704 = vmatpush1.msra.mxu0 %v276
  %705 = vmatprep.subr.mxu0 0.0
  %706 = vmatpush2.msra.mxu0 0.0
  %707 = vmatprep.subr.mxu0 0.0
  %708 = vmatpush2.msra.mxu0 0.0
  %709 = vmatprep.subr.mxu0 0.0
  %710 = vmatpush2.msra.mxu0 0.0
  %711 = vmatprep.subr.mxu0 0.0
  %712 = vmatpush2.msra.mxu0 0.0
  %713 = vmatprep.subr.mxu0 0.0
  %714 = vmatpush2.msra.mxu0 0.0
  %715 = vmatprep.subr.mxu0 0.0
  %716 = vmatpush2.msra.mxu0 0.0
  %717 = vmatprep.subr.mxu0 0.0
  %718 = vmatpush2.msra.mxu0 0.0
  %719 = vmatprep.subr.mxu0 0.0
  %720 = vmatpush2.msra.mxu0 0.0
  %721 = vmatprep.subr.mxu0 0.0
  %722 = vmatpush2.msra.mxu0 0.0
  %723 = vmatprep.subr.mxu0 0.0
  %724 = vmatpush2.msra.mxu0 0.0
  %725 = vmatprep.subr.mxu0 0.0
  %726 = vmatpush2.msra.mxu0 0.0
  %727 = vmatprep.subr.mxu0 0.0
  %728 = vmatpush2.msra.mxu0 0.0
  %729 = vmatprep.subr.mxu0 0.0
  %730 = vmatpush2.msra.mxu0 0.0
  %731 = vmatprep.subr.mxu0 0.0
  %732 = vmatpush2.msra.mxu0 0.0
  %733 = vmatprep.subr.mxu0 0.0
  %734 = vmatpush2.msra.mxu0 0.0
  %735 = vmatprep.subr.mxu0 0.0
  %736 = vmatpush2.msra.mxu0 0.0
  %737 = vmatprep.mubr.f32.mxu0 0.0
  %738 = vmatmul.mubr.f32.gmra.mxu0 %v671
  %v739 = vpop.f32.mrf.mxu0
  %v740 = vadd.f32 0.0, %v739
  %v741 = vpop.f32.mrf.mxu0
  %742 = vdwg.mxu0
  %v744 = vrot.slane %v740, 4
  %v746 = vadd.f32 %v258, %v744
  %747 = vmatprep.subr.mxu0 0.0
  %748 = vmatpush1.msra.mxu0 0.0
  %749 = vmatprep.subr.mxu0 0.0
  %750 = vmatpush1.msra.mxu0 0.0
  %751 = vmatprep.subr.mxu0 0.0
  %752 = vmatpush1.msra.mxu0 0.0
  %753 = vmatprep.subr.mxu0 0.0
  %754 = vmatpush1.msra.mxu0 0.0
  %755 = vmatprep.subr.mxu0 0.0
  %756 = vmatpush1.msra.mxu0 0.0
  %757 = vmatprep.subr.mxu0 0.0
  %758 = vmatpush1.msra.mxu0 0.0
  %759 = vmatprep.subr.mxu0 0.0
  %760 = vmatpush1.msra.mxu0 0.0
  %761 = vmatprep.subr.mxu0 0.0
  %762 = vmatpush1.msra.mxu0 0.0
  %763 = vmatprep.subr.mxu0 0.0
  %764 = vmatpush1.msra.mxu0 0.0
  %765 = vmatprep.subr.mxu0 0.0
  %766 = vmatpush1.msra.mxu0 0.0
  %767 = vmatprep.subr.mxu0 0.0
  %768 = vmatpush1.msra.mxu0 0.0
  %769 = vmatprep.subr.mxu0 0.0
  %770 = vmatpush1.msra.mxu0 0.0
  %771 = vmatprep.subr.mxu0 0.0
  %772 = vmatpush1.msra.mxu0 %v373
  %773 = vmatprep.subr.mxu0 0.0
  %774 = vmatpush1.msra.mxu0 %v371
  %775 = vmatprep.subr.mxu0 0.0
  %776 = vmatpush1.msra.mxu0 %v369
  %777 = vmatprep.subr.mxu0 0.0
  %778 = vmatpush1.msra.mxu0 %v367
  %779 = vmatprep.subr.mxu0 0.0
  %780 = vmatpush2.msra.mxu0 0.0
  %781 = vmatprep.subr.mxu0 0.0
  %782 = vmatpush2.msra.mxu0 0.0
  %783 = vmatprep.subr.mxu0 0.0
  %784 = vmatpush2.msra.mxu0 0.0
  %785 = vmatprep.subr.mxu0 0.0
  %786 = vmatpush2.msra.mxu0 0.0
  %787 = vmatprep.subr.mxu0 0.0
  %788 = vmatpush2.msra.mxu0 0.0
  %789 = vmatprep.subr.mxu0 0.0
  %790 = vmatpush2.msra.mxu0 0.0
  %791 = vmatprep.subr.mxu0 0.0
  %792 = vmatpush2.msra.mxu0 0.0
  %793 = vmatprep.subr.mxu0 0.0
  %794 = vmatpush2.msra.mxu0 0.0
  %795 = vmatprep.subr.mxu0 0.0
  %796 = vmatpush2.msra.mxu0 0.0
  %797 = vmatprep.subr.mxu0 0.0
  %798 = vmatpush2.msra.mxu0 0.0
  %799 = vmatprep.subr.mxu0 0.0
  %800 = vmatpush2.msra.mxu0 0.0
  %801 = vmatprep.subr.mxu0 0.0
  %802 = vmatpush2.msra.mxu0 0.0
  %803 = vmatprep.subr.mxu0 0.0
  %804 = vmatpush2.msra.mxu0 0.0
  %805 = vmatprep.subr.mxu0 0.0
  %806 = vmatpush2.msra.mxu0 0.0
  %807 = vmatprep.subr.mxu0 0.0
  %808 = vmatpush2.msra.mxu0 0.0
  %809 = vmatprep.subr.mxu0 0.0
  %810 = vmatpush2.msra.mxu0 0.0
  %811 = vmatprep.mubr.f32.mxu0 0.0
  %812 = vmatmul.mubr.f32.gmra.mxu0 %v671
  %v813 = vpop.f32.mrf.mxu0
  %v814 = vadd.f32 0.0, %v813
  %v815 = vpop.f32.mrf.mxu0
  %816 = vdwg.mxu0
  %v818 = vrot.slane %v814, 4
  %819 = vrot.lane.b32.xlu0 %v818, 32
  %v820 = vpop.permute.xlu0 %819
  %v822 = vadd.f32 %v258, %v820
  %823 = vmatprep.subr.mxu0 0.0
  %824 = vmatpush1.msra.mxu0 0.0
  %825 = vmatprep.subr.mxu0 0.0
  %826 = vmatpush1.msra.mxu0 0.0
  %827 = vmatprep.subr.mxu0 0.0
  %828 = vmatpush1.msra.mxu0 0.0
  %829 = vmatprep.subr.mxu0 0.0
  %830 = vmatpush1.msra.mxu0 0.0
  %831 = vmatprep.subr.mxu0 0.0
  %832 = vmatpush1.msra.mxu0 0.0
  %833 = vmatprep.subr.mxu0 0.0
  %834 = vmatpush1.msra.mxu0 0.0
  %835 = vmatprep.subr.mxu0 0.0
  %836 = vmatpush1.msra.mxu0 0.0
  %837 = vmatprep.subr.mxu0 0.0
  %838 = vmatpush1.msra.mxu0 0.0
  %839 = vmatprep.subr.mxu0 0.0
  %840 = vmatpush1.msra.mxu0 0.0
  %841 = vmatprep.subr.mxu0 0.0
  %842 = vmatpush1.msra.mxu0 0.0
  %843 = vmatprep.subr.mxu0 0.0
  %844 = vmatpush1.msra.mxu0 0.0
  %845 = vmatprep.subr.mxu0 0.0
  %846 = vmatpush1.msra.mxu0 0.0
  %847 = vmatprep.subr.mxu0 0.0
  %848 = vmatpush1.msra.mxu0 %v460
  %849 = vmatprep.subr.mxu0 0.0
  %850 = vmatpush1.msra.mxu0 %v458
  %851 = vmatprep.subr.mxu0 0.0
  %852 = vmatpush1.msra.mxu0 %v456
  %853 = vmatprep.subr.mxu0 0.0
  %854 = vmatpush1.msra.mxu0 %v454
  %855 = vmatprep.subr.mxu0 0.0
  %856 = vmatpush2.msra.mxu0 0.0
  %857 = vmatprep.subr.mxu0 0.0
  %858 = vmatpush2.msra.mxu0 0.0
  %859 = vmatprep.subr.mxu0 0.0
  %860 = vmatpush2.msra.mxu0 0.0
  %861 = vmatprep.subr.mxu0 0.0
  %862 = vmatpush2.msra.mxu0 0.0
  %863 = vmatprep.subr.mxu0 0.0
  %864 = vmatpush2.msra.mxu0 0.0
  %865 = vmatprep.subr.mxu0 0.0
  %866 = vmatpush2.msra.mxu0 0.0
  %867 = vmatprep.subr.mxu0 0.0
  %868 = vmatpush2.msra.mxu0 0.0
  %869 = vmatprep.subr.mxu0 0.0
  %870 = vmatpush2.msra.mxu0 0.0
  %871 = vmatprep.subr.mxu0 0.0
  %872 = vmatpush2.msra.mxu0 0.0
  %873 = vmatprep.subr.mxu0 0.0
  %874 = vmatpush2.msra.mxu0 0.0
  %875 = vmatprep.subr.mxu0 0.0
  %876 = vmatpush2.msra.mxu0 0.0
  %877 = vmatprep.subr.mxu0 0.0
  %878 = vmatpush2.msra.mxu0 0.0
  %879 = vmatprep.subr.mxu0 0.0
  %880 = vmatpush2.msra.mxu0 0.0
  %881 = vmatprep.subr.mxu0 0.0
  %882 = vmatpush2.msra.mxu0 0.0
  %883 = vmatprep.subr.mxu0 0.0
  %884 = vmatpush2.msra.mxu0 0.0
  %885 = vmatprep.subr.mxu0 0.0
  %886 = vmatpush2.msra.mxu0 0.0
  %887 = vmatprep.mubr.f32.mxu0 0.0
  %888 = vmatmul.mubr.f32.gmra.mxu0 %v671
  %v889 = vpop.f32.mrf.mxu0
  %v890 = vadd.f32 0.0, %v889
  %v891 = vpop.f32.mrf.mxu0
  %892 = vdwg.mxu0
  %v894 = vrot.slane %v890, 4
  %895 = vrot.lane.b32.xlu0 %v894, 64
  %v896 = vpop.permute.xlu0 %895
  %v898 = vadd.f32 %v258, %v896
  %899 = vmatprep.subr.mxu0 0.0
  %900 = vmatpush1.msra.mxu0 0.0
  %901 = vmatprep.subr.mxu0 0.0
  %902 = vmatpush1.msra.mxu0 0.0
  %903 = vmatprep.subr.mxu0 0.0
  %904 = vmatpush1.msra.mxu0 0.0
  %905 = vmatprep.subr.mxu0 0.0
  %906 = vmatpush1.msra.mxu0 0.0
  %907 = vmatprep.subr.mxu0 0.0
  %908 = vmatpush1.msra.mxu0 0.0
  %909 = vmatprep.subr.mxu0 0.0
  %910 = vmatpush1.msra.mxu0 0.0
  %911 = vmatprep.subr.mxu0 0.0
  %912 = vmatpush1.msra.mxu0 0.0
  %913 = vmatprep.subr.mxu0 0.0
  %914 = vmatpush1.msra.mxu0 0.0
  %915 = vmatprep.subr.mxu0 0.0
  %916 = vmatpush1.msra.mxu0 0.0
  %917 = vmatprep.subr.mxu0 0.0
  %918 = vmatpush1.msra.mxu0 0.0
  %919 = vmatprep.subr.mxu0 0.0
  %920 = vmatpush1.msra.mxu0 0.0
  %921 = vmatprep.subr.mxu0 0.0
  %922 = vmatpush1.msra.mxu0 0.0
  %923 = vmatprep.subr.mxu0 0.0
  %924 = vmatpush1.msra.mxu0 %v547
  %925 = vmatprep.subr.mxu0 0.0
  %926 = vmatpush1.msra.mxu0 %v545
  %927 = vmatprep.subr.mxu0 0.0
  %928 = vmatpush1.msra.mxu0 %v543
  %929 = vmatprep.subr.mxu0 0.0
  %930 = vmatpush1.msra.mxu0 %v541
  %931 = vmatprep.subr.mxu0 0.0
  %932 = vmatpush2.msra.mxu0 0.0
  %933 = vmatprep.subr.mxu0 0.0
  %934 = vmatpush2.msra.mxu0 0.0
  %935 = vmatprep.subr.mxu0 0.0
  %936 = vmatpush2.msra.mxu0 0.0
  %937 = vmatprep.subr.mxu0 0.0
  %938 = vmatpush2.msra.mxu0 0.0
  %939 = vmatprep.subr.mxu0 0.0
  %940 = vmatpush2.msra.mxu0 0.0
  %941 = vmatprep.subr.mxu0 0.0
  %942 = vmatpush2.msra.mxu0 0.0
  %943 = vmatprep.subr.mxu0 0.0
  %944 = vmatpush2.msra.mxu0 0.0
  %945 = vmatprep.subr.mxu0 0.0
  %946 = vmatpush2.msra.mxu0 0.0
  %947 = vmatprep.subr.mxu0 0.0
  %948 = vmatpush2.msra.mxu0 0.0
  %949 = vmatprep.subr.mxu0 0.0
  %950 = vmatpush2.msra.mxu0 0.0
  %951 = vmatprep.subr.mxu0 0.0
  %952 = vmatpush2.msra.mxu0 0.0
  %953 = vmatprep.subr.mxu0 0.0
  %954 = vmatpush2.msra.mxu0 0.0
  %955 = vmatprep.subr.mxu0 0.0
  %956 = vmatpush2.msra.mxu0 0.0
  %957 = vmatprep.subr.mxu0 0.0
  %958 = vmatpush2.msra.mxu0 0.0
  %959 = vmatprep.subr.mxu0 0.0
  %960 = vmatpush2.msra.mxu0 0.0
  %961 = vmatprep.subr.mxu0 0.0
  %962 = vmatpush2.msra.mxu0 0.0
  %963 = vmatprep.mubr.f32.mxu0 0.0
  %964 = vmatmul.mubr.f32.gmra.mxu0 %v671
  %v965 = vpop.f32.mrf.mxu0
  %v966 = vadd.f32 0.0, %v965
  %v967 = vpop.f32.mrf.mxu0
  %968 = vdwg.mxu0
  %v970 = vrot.slane %v966, 4
  %971 = vrot.lane.b32.xlu0 %v970, 96
  %v972 = vpop.permute.xlu0 %971
  %v974 = vadd.f32 %v258, %v972
  %v975 = vxor.u32 %v822, 2147483648
  %v976 = vmul.f32 %v975, 1.442695
  %v977 = vpow.pop %v976
  %v978 = vadd.f32 %v977, 1.0
  %v979 = vrcp.pop %v978
  %v980 = vmul.f32 1.0, %v979
  %v982 = vrot.slane %v653, 4
  %v984 = vmul.f32 %v980, %v982
  %v985 = vxor.u32 %v746, 2147483648
  %v986 = vmul.f32 %v985, 1.442695
  %v987 = vpow.pop %v986
  %v988 = vadd.f32 %v987, 1.0
  %v989 = vrcp.pop %v988
  %v990 = vmul.f32 1.0, %v989
  %v991 = vtanh.pop %v898
  %993 = vrot.lane.b32.xlu0 %v991, 64
  %v994 = vpop.permute.xlu0 %993
  %v996 = vmul.f32 %v990, %v994
  %998 = vrot.lane.b32.xlu0 %v996, 32
  %v999 = vpop.permute.xlu0 %998
  %v1001 = vadd.f32 %v984, %v999
  %v1002 = vxor.u32 %v974, 2147483648
  %v1003 = vmul.f32 %v1002, 1.442695
  %v1004 = vpow.pop %v1003
  %v1005 = vadd.f32 %v1004, 1.0
  %v1006 = vrcp.pop %v1005
  %v1007 = vmul.f32 1.0, %v1006
  %v1008 = vtanh.pop %v1001
  %1010 = vrot.lane.b32.xlu0 %v1008, 64
  %v1011 = vpop.permute.xlu0 %1010
  %v1013 = vmul.f32 %v1007, %v1011
  %1015 = vrot.lane.b32.xlu0 %v1013, 32
  %v1016 = vpop.permute.xlu0 %1015
  %vm1018 = vcmask 261124
  %1019 = vst.msk [vmem:[#allocation2 + $0x4] sm:$0xf0] %vm1018, %v1016
  %v1020 = vrot.slane %v1013, 4
  %1021 = vrot.lane.b32.xlu0 %v1020, 32
  %v1022 = vpop.permute.xlu0 %1021
  %v1023 = vsel %vm178, %v1022, 0
  %1025 = vmatprep.subr.mxu0 0.0
  %1026 = vmatpush1.msra.mxu0 0.0
  %1027 = vmatprep.subr.mxu0 0.0
  %1028 = vmatpush1.msra.mxu0 0.0
  %1029 = vmatprep.subr.mxu0 0.0
  %1030 = vmatpush1.msra.mxu0 0.0
  %1031 = vmatprep.subr.mxu0 0.0
  %1032 = vmatpush1.msra.mxu0 0.0
  %1033 = vmatprep.subr.mxu0 0.0
  %1034 = vmatpush1.msra.mxu0 0.0
  %1035 = vmatprep.subr.mxu0 0.0
  %1036 = vmatpush1.msra.mxu0 0.0
  %1037 = vmatprep.subr.mxu0 0.0
  %1038 = vmatpush1.msra.mxu0 0.0
  %1039 = vmatprep.subr.mxu0 0.0
  %1040 = vmatpush1.msra.mxu0 0.0
  %1041 = vmatprep.subr.mxu0 0.0
  %1042 = vmatpush1.msra.mxu0 0.0
  %1043 = vmatprep.subr.mxu0 0.0
  %1044 = vmatpush1.msra.mxu0 0.0
  %1045 = vmatprep.subr.mxu0 0.0
  %1046 = vmatpush1.msra.mxu0 0.0
  %1047 = vmatprep.subr.mxu0 0.0
  %1048 = vmatpush1.msra.mxu0 0.0
  %1049 = vmatprep.subr.mxu0 0.0
  %1050 = vmatpush1.msra.mxu0 %v279
  %1051 = vmatprep.subr.mxu0 0.0
  %1052 = vmatpush1.msra.mxu0 %v278
  %1053 = vmatprep.subr.mxu0 0.0
  %1054 = vmatpush1.msra.mxu0 %v277
  %1055 = vmatprep.subr.mxu0 0.0
  %1056 = vmatpush1.msra.mxu0 %v276
  %1057 = vmatprep.subr.mxu0 0.0
  %1058 = vmatpush2.msra.mxu0 0.0
  %1059 = vmatprep.subr.mxu0 0.0
  %1060 = vmatpush2.msra.mxu0 0.0
  %1061 = vmatprep.subr.mxu0 0.0
  %1062 = vmatpush2.msra.mxu0 0.0
  %1063 = vmatprep.subr.mxu0 0.0
  %1064 = vmatpush2.msra.mxu0 0.0
  %1065 = vmatprep.subr.mxu0 0.0
  %1066 = vmatpush2.msra.mxu0 0.0
  %1067 = vmatprep.subr.mxu0 0.0
  %1068 = vmatpush2.msra.mxu0 0.0
  %1069 = vmatprep.subr.mxu0 0.0
  %1070 = vmatpush2.msra.mxu0 0.0
  %1071 = vmatprep.subr.mxu0 0.0
  %1072 = vmatpush2.msra.mxu0 0.0
  %1073 = vmatprep.subr.mxu0 0.0
  %1074 = vmatpush2.msra.mxu0 0.0
  %1075 = vmatprep.subr.mxu0 0.0
  %1076 = vmatpush2.msra.mxu0 0.0
  %1077 = vmatprep.subr.mxu0 0.0
  %1078 = vmatpush2.msra.mxu0 0.0
  %1079 = vmatprep.subr.mxu0 0.0
  %1080 = vmatpush2.msra.mxu0 0.0
  %1081 = vmatprep.subr.mxu0 0.0
  %1082 = vmatpush2.msra.mxu0 0.0
  %1083 = vmatprep.subr.mxu0 0.0
  %1084 = vmatpush2.msra.mxu0 0.0
  %1085 = vmatprep.subr.mxu0 0.0
  %1086 = vmatpush2.msra.mxu0 0.0
  %1087 = vmatprep.subr.mxu0 0.0
  %1088 = vmatpush2.msra.mxu0 0.0
  %1089 = vmatprep.mubr.f32.mxu0 0.0
  %1090 = vmatmul.mubr.f32.gmra.mxu0 %v1023
  %v1091 = vpop.f32.mrf.mxu0
  %v1092 = vadd.f32 0.0, %v1091
  %v1093 = vpop.f32.mrf.mxu0
  %1094 = vdwg.mxu0
  %v1095 = vadd.f32 %v263, %v1092
  %1096 = vmatprep.subr.mxu0 0.0
  %1097 = vmatpush1.msra.mxu0 0.0
  %1098 = vmatprep.subr.mxu0 0.0
  %1099 = vmatpush1.msra.mxu0 0.0
  %1100 = vmatprep.subr.mxu0 0.0
  %1101 = vmatpush1.msra.mxu0 0.0
  %1102 = vmatprep.subr.mxu0 0.0
  %1103 = vmatpush1.msra.mxu0 0.0
  %1104 = vmatprep.subr.mxu0 0.0
  %1105 = vmatpush1.msra.mxu0 0.0
  %1106 = vmatprep.subr.mxu0 0.0
  %1107 = vmatpush1.msra.mxu0 0.0
  %1108 = vmatprep.subr.mxu0 0.0
  %1109 = vmatpush1.msra.mxu0 0.0
  %1110 = vmatprep.subr.mxu0 0.0
  %1111 = vmatpush1.msra.mxu0 0.0
  %1112 = vmatprep.subr.mxu0 0.0
  %1113 = vmatpush1.msra.mxu0 0.0
  %1114 = vmatprep.subr.mxu0 0.0
  %1115 = vmatpush1.msra.mxu0 0.0
  %1116 = vmatprep.subr.mxu0 0.0
  %1117 = vmatpush1.msra.mxu0 0.0
  %1118 = vmatprep.subr.mxu0 0.0
  %1119 = vmatpush1.msra.mxu0 0.0
  %1120 = vmatprep.subr.mxu0 0.0
  %1121 = vmatpush1.msra.mxu0 %v373
  %1122 = vmatprep.subr.mxu0 0.0
  %1123 = vmatpush1.msra.mxu0 %v371
  %1124 = vmatprep.subr.mxu0 0.0
  %1125 = vmatpush1.msra.mxu0 %v369
  %1126 = vmatprep.subr.mxu0 0.0
  %1127 = vmatpush1.msra.mxu0 %v367
  %1128 = vmatprep.subr.mxu0 0.0
  %1129 = vmatpush2.msra.mxu0 0.0
  %1130 = vmatprep.subr.mxu0 0.0
  %1131 = vmatpush2.msra.mxu0 0.0
  %1132 = vmatprep.subr.mxu0 0.0
  %1133 = vmatpush2.msra.mxu0 0.0
  %1134 = vmatprep.subr.mxu0 0.0
  %1135 = vmatpush2.msra.mxu0 0.0
  %1136 = vmatprep.subr.mxu0 0.0
  %1137 = vmatpush2.msra.mxu0 0.0
  %1138 = vmatprep.subr.mxu0 0.0
  %1139 = vmatpush2.msra.mxu0 0.0
  %1140 = vmatprep.subr.mxu0 0.0
  %1141 = vmatpush2.msra.mxu0 0.0
  %1142 = vmatprep.subr.mxu0 0.0
  %1143 = vmatpush2.msra.mxu0 0.0
  %1144 = vmatprep.subr.mxu0 0.0
  %1145 = vmatpush2.msra.mxu0 0.0
  %1146 = vmatprep.subr.mxu0 0.0
  %1147 = vmatpush2.msra.mxu0 0.0
  %1148 = vmatprep.subr.mxu0 0.0
  %1149 = vmatpush2.msra.mxu0 0.0
  %1150 = vmatprep.subr.mxu0 0.0
  %1151 = vmatpush2.msra.mxu0 0.0
  %1152 = vmatprep.subr.mxu0 0.0
  %1153 = vmatpush2.msra.mxu0 0.0
  %1154 = vmatprep.subr.mxu0 0.0
  %1155 = vmatpush2.msra.mxu0 0.0
  %1156 = vmatprep.subr.mxu0 0.0
  %1157 = vmatpush2.msra.mxu0 0.0
  %1158 = vmatprep.subr.mxu0 0.0
  %1159 = vmatpush2.msra.mxu0 0.0
  %1160 = vmatprep.mubr.f32.mxu0 0.0
  %1161 = vmatmul.mubr.f32.gmra.mxu0 %v1023
  %v1162 = vpop.f32.mrf.mxu0
  %v1163 = vadd.f32 0.0, %v1162
  %v1164 = vpop.f32.mrf.mxu0
  %1165 = vdwg.mxu0
  %1167 = vrot.lane.b32.xlu0 %v1163, 32
  %v1168 = vpop.permute.xlu0 %1167
  %v1170 = vadd.f32 %v263, %v1168
  %1171 = vmatprep.subr.mxu0 0.0
  %1172 = vmatpush1.msra.mxu0 0.0
  %1173 = vmatprep.subr.mxu0 0.0
  %1174 = vmatpush1.msra.mxu0 0.0
  %1175 = vmatprep.subr.mxu0 0.0
  %1176 = vmatpush1.msra.mxu0 0.0
  %1177 = vmatprep.subr.mxu0 0.0
  %1178 = vmatpush1.msra.mxu0 0.0
  %1179 = vmatprep.subr.mxu0 0.0
  %1180 = vmatpush1.msra.mxu0 0.0
  %1181 = vmatprep.subr.mxu0 0.0
  %1182 = vmatpush1.msra.mxu0 0.0
  %1183 = vmatprep.subr.mxu0 0.0
  %1184 = vmatpush1.msra.mxu0 0.0
  %1185 = vmatprep.subr.mxu0 0.0
  %1186 = vmatpush1.msra.mxu0 0.0
  %1187 = vmatprep.subr.mxu0 0.0
  %1188 = vmatpush1.msra.mxu0 0.0
  %1189 = vmatprep.subr.mxu0 0.0
  %1190 = vmatpush1.msra.mxu0 0.0
  %1191 = vmatprep.subr.mxu0 0.0
  %1192 = vmatpush1.msra.mxu0 0.0
  %1193 = vmatprep.subr.mxu0 0.0
  %1194 = vmatpush1.msra.mxu0 0.0
  %1195 = vmatprep.subr.mxu0 0.0
  %1196 = vmatpush1.msra.mxu0 %v460
  %1197 = vmatprep.subr.mxu0 0.0
  %1198 = vmatpush1.msra.mxu0 %v458
  %1199 = vmatprep.subr.mxu0 0.0
  %1200 = vmatpush1.msra.mxu0 %v456
  %1201 = vmatprep.subr.mxu0 0.0
  %1202 = vmatpush1.msra.mxu0 %v454
  %1203 = vmatprep.subr.mxu0 0.0
  %1204 = vmatpush2.msra.mxu0 0.0
  %1205 = vmatprep.subr.mxu0 0.0
  %1206 = vmatpush2.msra.mxu0 0.0
  %1207 = vmatprep.subr.mxu0 0.0
  %1208 = vmatpush2.msra.mxu0 0.0
  %1209 = vmatprep.subr.mxu0 0.0
  %1210 = vmatpush2.msra.mxu0 0.0
  %1211 = vmatprep.subr.mxu0 0.0
  %1212 = vmatpush2.msra.mxu0 0.0
  %1213 = vmatprep.subr.mxu0 0.0
  %1214 = vmatpush2.msra.mxu0 0.0
  %1215 = vmatprep.subr.mxu0 0.0
  %1216 = vmatpush2.msra.mxu0 0.0
  %1217 = vmatprep.subr.mxu0 0.0
  %1218 = vmatpush2.msra.mxu0 0.0
  %1219 = vmatprep.subr.mxu0 0.0
  %1220 = vmatpush2.msra.mxu0 0.0
  %1221 = vmatprep.subr.mxu0 0.0
  %1222 = vmatpush2.msra.mxu0 0.0
  %1223 = vmatprep.subr.mxu0 0.0
  %1224 = vmatpush2.msra.mxu0 0.0
  %1225 = vmatprep.subr.mxu0 0.0
  %1226 = vmatpush2.msra.mxu0 0.0
  %1227 = vmatprep.subr.mxu0 0.0
  %1228 = vmatpush2.msra.mxu0 0.0
  %1229 = vmatprep.subr.mxu0 0.0
  %1230 = vmatpush2.msra.mxu0 0.0
  %1231 = vmatprep.subr.mxu0 0.0
  %1232 = vmatpush2.msra.mxu0 0.0
  %1233 = vmatprep.subr.mxu0 0.0
  %1234 = vmatpush2.msra.mxu0 0.0
  %1235 = vmatprep.mubr.f32.mxu0 0.0
  %1236 = vmatmul.mubr.f32.gmra.mxu0 %v1023
  %v1237 = vpop.f32.mrf.mxu0
  %v1238 = vadd.f32 0.0, %v1237
  %v1239 = vpop.f32.mrf.mxu0
  %1240 = vdwg.mxu0
  %1242 = vrot.lane.b32.xlu0 %v1238, 64
  %v1243 = vpop.permute.xlu0 %1242
  %v1245 = vadd.f32 %v263, %v1243
  %1246 = vmatprep.subr.mxu0 0.0
  %1247 = vmatpush1.msra.mxu0 0.0
  %1248 = vmatprep.subr.mxu0 0.0
  %1249 = vmatpush1.msra.mxu0 0.0
  %1250 = vmatprep.subr.mxu0 0.0
  %1251 = vmatpush1.msra.mxu0 0.0
  %1252 = vmatprep.subr.mxu0 0.0
  %1253 = vmatpush1.msra.mxu0 0.0
  %1254 = vmatprep.subr.mxu0 0.0
  %1255 = vmatpush1.msra.mxu0 0.0
  %1256 = vmatprep.subr.mxu0 0.0
  %1257 = vmatpush1.msra.mxu0 0.0
  %1258 = vmatprep.subr.mxu0 0.0
  %1259 = vmatpush1.msra.mxu0 0.0
  %1260 = vmatprep.subr.mxu0 0.0
  %1261 = vmatpush1.msra.mxu0 0.0
  %1262 = vmatprep.subr.mxu0 0.0
  %1263 = vmatpush1.msra.mxu0 0.0
  %1264 = vmatprep.subr.mxu0 0.0
  %1265 = vmatpush1.msra.mxu0 0.0
  %1266 = vmatprep.subr.mxu0 0.0
  %1267 = vmatpush1.msra.mxu0 0.0
  %1268 = vmatprep.subr.mxu0 0.0
  %1269 = vmatpush1.msra.mxu0 0.0
  %1270 = vmatprep.subr.mxu0 0.0
  %1271 = vmatpush1.msra.mxu0 %v547
  %1272 = vmatprep.subr.mxu0 0.0
  %1273 = vmatpush1.msra.mxu0 %v545
  %1274 = vmatprep.subr.mxu0 0.0
  %1275 = vmatpush1.msra.mxu0 %v543
  %1276 = vmatprep.subr.mxu0 0.0
  %1277 = vmatpush1.msra.mxu0 %v541
  %1278 = vmatprep.subr.mxu0 0.0
  %1279 = vmatpush2.msra.mxu0 0.0
  %1280 = vmatprep.subr.mxu0 0.0
  %1281 = vmatpush2.msra.mxu0 0.0
  %1282 = vmatprep.subr.mxu0 0.0
  %1283 = vmatpush2.msra.mxu0 0.0
  %1284 = vmatprep.subr.mxu0 0.0
  %1285 = vmatpush2.msra.mxu0 0.0
  %1286 = vmatprep.subr.mxu0 0.0
  %1287 = vmatpush2.msra.mxu0 0.0
  %1288 = vmatprep.subr.mxu0 0.0
  %1289 = vmatpush2.msra.mxu0 0.0
  %1290 = vmatprep.subr.mxu0 0.0
  %1291 = vmatpush2.msra.mxu0 0.0
  %1292 = vmatprep.subr.mxu0 0.0
  %1293 = vmatpush2.msra.mxu0 0.0
  %1294 = vmatprep.subr.mxu0 0.0
  %1295 = vmatpush2.msra.mxu0 0.0
  %1296 = vmatprep.subr.mxu0 0.0
  %1297 = vmatpush2.msra.mxu0 0.0
  %1298 = vmatprep.subr.mxu0 0.0
  %1299 = vmatpush2.msra.mxu0 0.0
  %1300 = vmatprep.subr.mxu0 0.0
  %1301 = vmatpush2.msra.mxu0 0.0
  %1302 = vmatprep.subr.mxu0 0.0
  %1303 = vmatpush2.msra.mxu0 0.0
  %1304 = vmatprep.subr.mxu0 0.0
  %1305 = vmatpush2.msra.mxu0 0.0
  %1306 = vmatprep.subr.mxu0 0.0
  %1307 = vmatpush2.msra.mxu0 0.0
  %1308 = vmatprep.subr.mxu0 0.0
  %1309 = vmatpush2.msra.mxu0 0.0
  %1310 = vmatprep.mubr.f32.mxu0 0.0
  %1311 = vmatmul.mubr.f32.gmra.mxu0 %v1023
  %v1312 = vpop.f32.mrf.mxu0
  %v1313 = vadd.f32 0.0, %v1312
  %v1314 = vpop.f32.mrf.mxu0
  %1315 = vdwg.mxu0
  %1317 = vrot.lane.b32.xlu0 %v1313, 96
  %v1318 = vpop.permute.xlu0 %1317
  %v1320 = vadd.f32 %v263, %v1318
  %v1321 = vxor.u32 %v1170, 2147483648
  %v1322 = vmul.f32 %v1321, 1.442695
  %v1323 = vpow.pop %v1322
  %v1324 = vadd.f32 %v1323, 1.0
  %v1325 = vrcp.pop %v1324
  %v1326 = vmul.f32 1.0, %v1325
  %v1328 = vrot.slane %v1001, 4
  %v1330 = vmul.f32 %v1326, %v1328
  %v1331 = vxor.u32 %v1095, 2147483648
  %v1332 = vmul.f32 %v1331, 1.442695
  %v1333 = vpow.pop %v1332
  %v1334 = vadd.f32 %v1333, 1.0
  %v1335 = vrcp.pop %v1334
  %v1336 = vmul.f32 1.0, %v1335
  %v1337 = vtanh.pop %v1245
  %1339 = vrot.lane.b32.xlu0 %v1337, 64
  %v1340 = vpop.permute.xlu0 %1339
  %v1342 = vmul.f32 %v1336, %v1340
  %1344 = vrot.lane.b32.xlu0 %v1342, 32
  %v1345 = vpop.permute.xlu0 %1344
  %v1347 = vadd.f32 %v1330, %v1345
  %v1348 = vxor.u32 %v1320, 2147483648
  %v1349 = vmul.f32 %v1348, 1.442695
  %v1350 = vpow.pop %v1349
  %v1351 = vadd.f32 %v1350, 1.0
  %v1352 = vrcp.pop %v1351
  %v1353 = vmul.f32 1.0, %v1352
  %v1354 = vtanh.pop %v1347
  %1356 = vrot.lane.b32.xlu0 %v1354, 64
  %v1357 = vpop.permute.xlu0 %1356
  %v1359 = vmul.f32 %v1353, %v1357
  %1361 = vrot.lane.b32.xlu0 %v1359, 32
  %v1362 = vpop.permute.xlu0 %1361
  %1364 = vst.msk [vmem:[#allocation2 + $0xc] sm:$0xf] %vm287, %v1362
  %v1365 = vsel %vm178, %v1362, 0
  %1367 = vmatprep.subr.mxu0 0.0
  %1368 = vmatpush1.msra.mxu0 0.0
  %1369 = vmatprep.subr.mxu0 0.0
  %1370 = vmatpush1.msra.mxu0 0.0
  %1371 = vmatprep.subr.mxu0 0.0
  %1372 = vmatpush1.msra.mxu0 0.0
  %1373 = vmatprep.subr.mxu0 0.0
  %1374 = vmatpush1.msra.mxu0 0.0
  %1375 = vmatprep.subr.mxu0 0.0
  %1376 = vmatpush1.msra.mxu0 0.0
  %1377 = vmatprep.subr.mxu0 0.0
  %1378 = vmatpush1.msra.mxu0 0.0
  %1379 = vmatprep.subr.mxu0 0.0
  %1380 = vmatpush1.msra.mxu0 0.0
  %1381 = vmatprep.subr.mxu0 0.0
  %1382 = vmatpush1.msra.mxu0 0.0
  %1383 = vmatprep.subr.mxu0 0.0
  %1384 = vmatpush1.msra.mxu0 0.0
  %1385 = vmatprep.subr.mxu0 0.0
  %1386 = vmatpush1.msra.mxu0 0.0
  %1387 = vmatprep.subr.mxu0 0.0
  %1388 = vmatpush1.msra.mxu0 0.0
  %1389 = vmatprep.subr.mxu0 0.0
  %1390 = vmatpush1.msra.mxu0 0.0
  %1391 = vmatprep.subr.mxu0 0.0
  %1392 = vmatpush1.msra.mxu0 %v279
  %1393 = vmatprep.subr.mxu0 0.0
  %1394 = vmatpush1.msra.mxu0 %v278
  %1395 = vmatprep.subr.mxu0 0.0
  %1396 = vmatpush1.msra.mxu0 %v277
  %1397 = vmatprep.subr.mxu0 0.0
  %1398 = vmatpush1.msra.mxu0 %v276
  %1399 = vmatprep.subr.mxu0 0.0
  %1400 = vmatpush2.msra.mxu0 0.0
  %1401 = vmatprep.subr.mxu0 0.0
  %1402 = vmatpush2.msra.mxu0 0.0
  %1403 = vmatprep.subr.mxu0 0.0
  %1404 = vmatpush2.msra.mxu0 0.0
  %1405 = vmatprep.subr.mxu0 0.0
  %1406 = vmatpush2.msra.mxu0 0.0
  %1407 = vmatprep.subr.mxu0 0.0
  %1408 = vmatpush2.msra.mxu0 0.0
  %1409 = vmatprep.subr.mxu0 0.0
  %1410 = vmatpush2.msra.mxu0 0.0
  %1411 = vmatprep.subr.mxu0 0.0
  %1412 = vmatpush2.msra.mxu0 0.0
  %1413 = vmatprep.subr.mxu0 0.0
  %1414 = vmatpush2.msra.mxu0 0.0
  %1415 = vmatprep.subr.mxu0 0.0
  %1416 = vmatpush2.msra.mxu0 0.0
  %1417 = vmatprep.subr.mxu0 0.0
  %1418 = vmatpush2.msra.mxu0 0.0
  %1419 = vmatprep.subr.mxu0 0.0
  %1420 = vmatpush2.msra.mxu0 0.0
  %1421 = vmatprep.subr.mxu0 0.0
  %1422 = vmatpush2.msra.mxu0 0.0
  %1423 = vmatprep.subr.mxu0 0.0
  %1424 = vmatpush2.msra.mxu0 0.0
  %1425 = vmatprep.subr.mxu0 0.0
  %1426 = vmatpush2.msra.mxu0 0.0
  %1427 = vmatprep.subr.mxu0 0.0
  %1428 = vmatpush2.msra.mxu0 0.0
  %1429 = vmatprep.subr.mxu0 0.0
  %1430 = vmatpush2.msra.mxu0 0.0
  %1431 = vmatprep.mubr.f32.mxu0 0.0
  %1432 = vmatmul.mubr.f32.gmra.mxu0 %v1365
  %v1433 = vpop.f32.mrf.mxu0
  %v1434 = vadd.f32 0.0, %v1433
  %v1435 = vpop.f32.mrf.mxu0
  %1436 = vdwg.mxu0
  %v1438 = vrot.slane %v1434, 4
  %v1440 = vadd.f32 %v263, %v1438
  %1441 = vmatprep.subr.mxu0 0.0
  %1442 = vmatpush1.msra.mxu0 0.0
  %1443 = vmatprep.subr.mxu0 0.0
  %1444 = vmatpush1.msra.mxu0 0.0
  %1445 = vmatprep.subr.mxu0 0.0
  %1446 = vmatpush1.msra.mxu0 0.0
  %1447 = vmatprep.subr.mxu0 0.0
  %1448 = vmatpush1.msra.mxu0 0.0
  %1449 = vmatprep.subr.mxu0 0.0
  %1450 = vmatpush1.msra.mxu0 0.0
  %1451 = vmatprep.subr.mxu0 0.0
  %1452 = vmatpush1.msra.mxu0 0.0
  %1453 = vmatprep.subr.mxu0 0.0
  %1454 = vmatpush1.msra.mxu0 0.0
  %1455 = vmatprep.subr.mxu0 0.0
  %1456 = vmatpush1.msra.mxu0 0.0
  %1457 = vmatprep.subr.mxu0 0.0
  %1458 = vmatpush1.msra.mxu0 0.0
  %1459 = vmatprep.subr.mxu0 0.0
  %1460 = vmatpush1.msra.mxu0 0.0
  %1461 = vmatprep.subr.mxu0 0.0
  %1462 = vmatpush1.msra.mxu0 0.0
  %1463 = vmatprep.subr.mxu0 0.0
  %1464 = vmatpush1.msra.mxu0 0.0
  %1465 = vmatprep.subr.mxu0 0.0
  %1466 = vmatpush1.msra.mxu0 %v373
  %1467 = vmatprep.subr.mxu0 0.0
  %1468 = vmatpush1.msra.mxu0 %v371
  %1469 = vmatprep.subr.mxu0 0.0
  %1470 = vmatpush1.msra.mxu0 %v369
  %1471 = vmatprep.subr.mxu0 0.0
  %1472 = vmatpush1.msra.mxu0 %v367
  %1473 = vmatprep.subr.mxu0 0.0
  %1474 = vmatpush2.msra.mxu0 0.0
  %1475 = vmatprep.subr.mxu0 0.0
  %1476 = vmatpush2.msra.mxu0 0.0
  %1477 = vmatprep.subr.mxu0 0.0
  %1478 = vmatpush2.msra.mxu0 0.0
  %1479 = vmatprep.subr.mxu0 0.0
  %1480 = vmatpush2.msra.mxu0 0.0
  %1481 = vmatprep.subr.mxu0 0.0
  %1482 = vmatpush2.msra.mxu0 0.0
  %1483 = vmatprep.subr.mxu0 0.0
  %1484 = vmatpush2.msra.mxu0 0.0
  %1485 = vmatprep.subr.mxu0 0.0
  %1486 = vmatpush2.msra.mxu0 0.0
  %1487 = vmatprep.subr.mxu0 0.0
  %1488 = vmatpush2.msra.mxu0 0.0
  %1489 = vmatprep.subr.mxu0 0.0
  %1490 = vmatpush2.msra.mxu0 0.0
  %1491 = vmatprep.subr.mxu0 0.0
  %1492 = vmatpush2.msra.mxu0 0.0
  %1493 = vmatprep.subr.mxu0 0.0
  %1494 = vmatpush2.msra.mxu0 0.0
  %1495 = vmatprep.subr.mxu0 0.0
  %1496 = vmatpush2.msra.mxu0 0.0
  %1497 = vmatprep.subr.mxu0 0.0
  %1498 = vmatpush2.msra.mxu0 0.0
  %1499 = vmatprep.subr.mxu0 0.0
  %1500 = vmatpush2.msra.mxu0 0.0
  %1501 = vmatprep.subr.mxu0 0.0
  %1502 = vmatpush2.msra.mxu0 0.0
  %1503 = vmatprep.subr.mxu0 0.0
  %1504 = vmatpush2.msra.mxu0 0.0
  %1505 = vmatprep.mubr.f32.mxu0 0.0
  %1506 = vmatmul.mubr.f32.gmra.mxu0 %v1365
  %v1507 = vpop.f32.mrf.mxu0
  %v1508 = vadd.f32 0.0, %v1507
  %v1509 = vpop.f32.mrf.mxu0
  %1510 = vdwg.mxu0
  %v1512 = vrot.slane %v1508, 4
  %1513 = vrot.lane.b32.xlu0 %v1512, 32
  %v1514 = vpop.permute.xlu0 %1513
  %v1516 = vadd.f32 %v263, %v1514
  %1517 = vmatprep.subr.mxu0 0.0
  %1518 = vmatpush1.msra.mxu0 0.0
  %1519 = vmatprep.subr.mxu0 0.0
  %1520 = vmatpush1.msra.mxu0 0.0
  %1521 = vmatprep.subr.mxu0 0.0
  %1522 = vmatpush1.msra.mxu0 0.0
  %1523 = vmatprep.subr.mxu0 0.0
  %1524 = vmatpush1.msra.mxu0 0.0
  %1525 = vmatprep.subr.mxu0 0.0
  %1526 = vmatpush1.msra.mxu0 0.0
  %1527 = vmatprep.subr.mxu0 0.0
  %1528 = vmatpush1.msra.mxu0 0.0
  %1529 = vmatprep.subr.mxu0 0.0
  %1530 = vmatpush1.msra.mxu0 0.0
  %1531 = vmatprep.subr.mxu0 0.0
  %1532 = vmatpush1.msra.mxu0 0.0
  %1533 = vmatprep.subr.mxu0 0.0
  %1534 = vmatpush1.msra.mxu0 0.0
  %1535 = vmatprep.subr.mxu0 0.0
  %1536 = vmatpush1.msra.mxu0 0.0
  %1537 = vmatprep.subr.mxu0 0.0
  %1538 = vmatpush1.msra.mxu0 0.0
  %1539 = vmatprep.subr.mxu0 0.0
  %1540 = vmatpush1.msra.mxu0 0.0
  %1541 = vmatprep.subr.mxu0 0.0
  %1542 = vmatpush1.msra.mxu0 %v460
  %1543 = vmatprep.subr.mxu0 0.0
  %1544 = vmatpush1.msra.mxu0 %v458
  %1545 = vmatprep.subr.mxu0 0.0
  %1546 = vmatpush1.msra.mxu0 %v456
  %1547 = vmatprep.subr.mxu0 0.0
  %1548 = vmatpush1.msra.mxu0 %v454
  %1549 = vmatprep.subr.mxu0 0.0
  %1550 = vmatpush2.msra.mxu0 0.0
  %1551 = vmatprep.subr.mxu0 0.0
  %1552 = vmatpush2.msra.mxu0 0.0
  %1553 = vmatprep.subr.mxu0 0.0
  %1554 = vmatpush2.msra.mxu0 0.0
  %1555 = vmatprep.subr.mxu0 0.0
  %1556 = vmatpush2.msra.mxu0 0.0
  %1557 = vmatprep.subr.mxu0 0.0
  %1558 = vmatpush2.msra.mxu0 0.0
  %1559 = vmatprep.subr.mxu0 0.0
  %1560 = vmatpush2.msra.mxu0 0.0
  %1561 = vmatprep.subr.mxu0 0.0
  %1562 = vmatpush2.msra.mxu0 0.0
  %1563 = vmatprep.subr.mxu0 0.0
  %1564 = vmatpush2.msra.mxu0 0.0
  %1565 = vmatprep.subr.mxu0 0.0
  %1566 = vmatpush2.msra.mxu0 0.0
  %1567 = vmatprep.subr.mxu0 0.0
  %1568 = vmatpush2.msra.mxu0 0.0
  %1569 = vmatprep.subr.mxu0 0.0
  %1570 = vmatpush2.msra.mxu0 0.0
  %1571 = vmatprep.subr.mxu0 0.0
  %1572 = vmatpush2.msra.mxu0 0.0
  %1573 = vmatprep.subr.mxu0 0.0
  %1574 = vmatpush2.msra.mxu0 0.0
  %1575 = vmatprep.subr.mxu0 0.0
  %1576 = vmatpush2.msra.mxu0 0.0
  %1577 = vmatprep.subr.mxu0 0.0
  %1578 = vmatpush2.msra.mxu0 0.0
  %1579 = vmatprep.subr.mxu0 0.0
  %1580 = vmatpush2.msra.mxu0 0.0
  %1581 = vmatprep.mubr.f32.mxu0 0.0
  %1582 = vmatmul.mubr.f32.gmra.mxu0 %v1365
  %v1583 = vpop.f32.mrf.mxu0
  %v1584 = vadd.f32 0.0, %v1583
  %v1585 = vpop.f32.mrf.mxu0
  %1586 = vdwg.mxu0
  %v1588 = vrot.slane %v1584, 4
  %1589 = vrot.lane.b32.xlu0 %v1588, 64
  %v1590 = vpop.permute.xlu0 %1589
  %v1592 = vadd.f32 %v263, %v1590
  %1593 = vmatprep.subr.mxu0 0.0
  %1594 = vmatpush1.msra.mxu0 0.0
  %1595 = vmatprep.subr.mxu0 0.0
  %1596 = vmatpush1.msra.mxu0 0.0
  %1597 = vmatprep.subr.mxu0 0.0
  %1598 = vmatpush1.msra.mxu0 0.0
  %1599 = vmatprep.subr.mxu0 0.0
  %1600 = vmatpush1.msra.mxu0 0.0
  %1601 = vmatprep.subr.mxu0 0.0
  %1602 = vmatpush1.msra.mxu0 0.0
  %1603 = vmatprep.subr.mxu0 0.0
  %1604 = vmatpush1.msra.mxu0 0.0
  %1605 = vmatprep.subr.mxu0 0.0
  %1606 = vmatpush1.msra.mxu0 0.0
  %1607 = vmatprep.subr.mxu0 0.0
  %1608 = vmatpush1.msra.mxu0 0.0
  %1609 = vmatprep.subr.mxu0 0.0
  %1610 = vmatpush1.msra.mxu0 0.0
  %1611 = vmatprep.subr.mxu0 0.0
  %1612 = vmatpush1.msra.mxu0 0.0
  %1613 = vmatprep.subr.mxu0 0.0
  %1614 = vmatpush1.msra.mxu0 0.0
  %1615 = vmatprep.subr.mxu0 0.0
  %1616 = vmatpush1.msra.mxu0 0.0
  %1617 = vmatprep.subr.mxu0 0.0
  %1618 = vmatpush1.msra.mxu0 %v547
  %1619 = vmatprep.subr.mxu0 0.0
  %1620 = vmatpush1.msra.mxu0 %v545
  %1621 = vmatprep.subr.mxu0 0.0
  %1622 = vmatpush1.msra.mxu0 %v543
  %1623 = vmatprep.subr.mxu0 0.0
  %1624 = vmatpush1.msra.mxu0 %v541
  %1625 = vmatprep.subr.mxu0 0.0
  %1626 = vmatpush2.msra.mxu0 0.0
  %1627 = vmatprep.subr.mxu0 0.0
  %1628 = vmatpush2.msra.mxu0 0.0
  %1629 = vmatprep.subr.mxu0 0.0
  %1630 = vmatpush2.msra.mxu0 0.0
  %1631 = vmatprep.subr.mxu0 0.0
  %1632 = vmatpush2.msra.mxu0 0.0
  %1633 = vmatprep.subr.mxu0 0.0
  %1634 = vmatpush2.msra.mxu0 0.0
  %1635 = vmatprep.subr.mxu0 0.0
  %1636 = vmatpush2.msra.mxu0 0.0
  %1637 = vmatprep.subr.mxu0 0.0
  %1638 = vmatpush2.msra.mxu0 0.0
  %1639 = vmatprep.subr.mxu0 0.0
  %1640 = vmatpush2.msra.mxu0 0.0
  %1641 = vmatprep.subr.mxu0 0.0
  %1642 = vmatpush2.msra.mxu0 0.0
  %1643 = vmatprep.subr.mxu0 0.0
  %1644 = vmatpush2.msra.mxu0 0.0
  %1645 = vmatprep.subr.mxu0 0.0
  %1646 = vmatpush2.msra.mxu0 0.0
  %1647 = vmatprep.subr.mxu0 0.0
  %1648 = vmatpush2.msra.mxu0 0.0
  %1649 = vmatprep.subr.mxu0 0.0
  %1650 = vmatpush2.msra.mxu0 0.0
  %1651 = vmatprep.subr.mxu0 0.0
  %1652 = vmatpush2.msra.mxu0 0.0
  %1653 = vmatprep.subr.mxu0 0.0
  %1654 = vmatpush2.msra.mxu0 0.0
  %1655 = vmatprep.subr.mxu0 0.0
  %1656 = vmatpush2.msra.mxu0 0.0
  %1657 = vmatprep.mubr.f32.mxu0 0.0
  %1658 = vmatmul.mubr.f32.gmra.mxu0 %v1365
  %v1659 = vpop.f32.mrf.mxu0
  %v1660 = vadd.f32 0.0, %v1659
  %v1661 = vpop.f32.mrf.mxu0
  %1662 = vdwg.mxu0
  %v1664 = vrot.slane %v1660, 4
  %1665 = vrot.lane.b32.xlu0 %v1664, 96
  %v1666 = vpop.permute.xlu0 %1665
  %v1668 = vadd.f32 %v263, %v1666
  %v1669 = vxor.u32 %v1516, 2147483648
  %v1670 = vmul.f32 %v1669, 1.442695
  %v1671 = vpow.pop %v1670
  %v1672 = vadd.f32 %v1671, 1.0
  %v1673 = vrcp.pop %v1672
  %v1674 = vmul.f32 1.0, %v1673
  %v1676 = vrot.slane %v1347, 4
  %v1678 = vmul.f32 %v1674, %v1676
  %v1679 = vxor.u32 %v1440, 2147483648
  %v1680 = vmul.f32 %v1679, 1.442695
  %v1681 = vpow.pop %v1680
  %v1682 = vadd.f32 %v1681, 1.0
  %v1683 = vrcp.pop %v1682
  %v1684 = vmul.f32 1.0, %v1683
  %v1685 = vtanh.pop %v1592
  %1687 = vrot.lane.b32.xlu0 %v1685, 64
  %v1688 = vpop.permute.xlu0 %1687
  %v1690 = vmul.f32 %v1684, %v1688
  %1692 = vrot.lane.b32.xlu0 %v1690, 32
  %v1693 = vpop.permute.xlu0 %1692
  %v1695 = vadd.f32 %v1678, %v1693
  %v1696 = vxor.u32 %v1668, 2147483648
  %v1697 = vmul.f32 %v1696, 1.442695
  %v1698 = vpow.pop %v1697
  %v1699 = vadd.f32 %v1698, 1.0
  %v1700 = vrcp.pop %v1699
  %v1701 = vmul.f32 1.0, %v1700
  %v1702 = vtanh.pop %v1695
  %1704 = vrot.lane.b32.xlu0 %v1702, 64
  %v1705 = vpop.permute.xlu0 %1704
  %v1707 = vmul.f32 %v1701, %v1705
  %1709 = vrot.lane.b32.xlu0 %v1707, 32
  %v1710 = vpop.permute.xlu0 %1709
  %1712 = vst.msk [vmem:[#allocation2 + $0xc] sm:$0xf0] %vm1018, %v1710
  %v1713 = vrot.slane %v1707, 4
  %1714 = vrot.lane.b32.xlu0 %v1713, 32
  %v1715 = vpop.permute.xlu0 %1714
  %v1716 = vsel %vm178, %v1715, 0
  %1718 = vmatprep.subr.mxu0 0.0
  %1719 = vmatpush1.msra.mxu0 0.0
  %1720 = vmatprep.subr.mxu0 0.0
  %1721 = vmatpush1.msra.mxu0 0.0
  %1722 = vmatprep.subr.mxu0 0.0
  %1723 = vmatpush1.msra.mxu0 0.0
  %1724 = vmatprep.subr.mxu0 0.0
  %1725 = vmatpush1.msra.mxu0 0.0
  %1726 = vmatprep.subr.mxu0 0.0
  %1727 = vmatpush1.msra.mxu0 0.0
  %1728 = vmatprep.subr.mxu0 0.0
  %1729 = vmatpush1.msra.mxu0 0.0
  %1730 = vmatprep.subr.mxu0 0.0
  %1731 = vmatpush1.msra.mxu0 0.0
  %1732 = vmatprep.subr.mxu0 0.0
  %1733 = vmatpush1.msra.mxu0 0.0
  %1734 = vmatprep.subr.mxu0 0.0
  %1735 = vmatpush1.msra.mxu0 0.0
  %1736 = vmatprep.subr.mxu0 0.0
  %1737 = vmatpush1.msra.mxu0 0.0
  %1738 = vmatprep.subr.mxu0 0.0
  %1739 = vmatpush1.msra.mxu0 0.0
  %1740 = vmatprep.subr.mxu0 0.0
  %1741 = vmatpush1.msra.mxu0 0.0
  %1742 = vmatprep.subr.mxu0 0.0
  %1743 = vmatpush1.msra.mxu0 %v279
  %1744 = vmatprep.subr.mxu0 0.0
  %1745 = vmatpush1.msra.mxu0 %v278
  %1746 = vmatprep.subr.mxu0 0.0
  %1747 = vmatpush1.msra.mxu0 %v277
  %1748 = vmatprep.subr.mxu0 0.0
  %1749 = vmatpush1.msra.mxu0 %v276
  %1750 = vmatprep.subr.mxu0 0.0
  %1751 = vmatpush2.msra.mxu0 0.0
  %1752 = vmatprep.subr.mxu0 0.0
  %1753 = vmatpush2.msra.mxu0 0.0
  %1754 = vmatprep.subr.mxu0 0.0
  %1755 = vmatpush2.msra.mxu0 0.0
  %1756 = vmatprep.subr.mxu0 0.0
  %1757 = vmatpush2.msra.mxu0 0.0
  %1758 = vmatprep.subr.mxu0 0.0
  %1759 = vmatpush2.msra.mxu0 0.0
  %1760 = vmatprep.subr.mxu0 0.0
  %1761 = vmatpush2.msra.mxu0 0.0
  %1762 = vmatprep.subr.mxu0 0.0
  %1763 = vmatpush2.msra.mxu0 0.0
  %1764 = vmatprep.subr.mxu0 0.0
  %1765 = vmatpush2.msra.mxu0 0.0
  %1766 = vmatprep.subr.mxu0 0.0
  %1767 = vmatpush2.msra.mxu0 0.0
  %1768 = vmatprep.subr.mxu0 0.0
  %1769 = vmatpush2.msra.mxu0 0.0
  %1770 = vmatprep.subr.mxu0 0.0
  %1771 = vmatpush2.msra.mxu0 0.0
  %1772 = vmatprep.subr.mxu0 0.0
  %1773 = vmatpush2.msra.mxu0 0.0
  %1774 = vmatprep.subr.mxu0 0.0
  %1775 = vmatpush2.msra.mxu0 0.0
  %1776 = vmatprep.subr.mxu0 0.0
  %1777 = vmatpush2.msra.mxu0 0.0
  %1778 = vmatprep.subr.mxu0 0.0
  %1779 = vmatpush2.msra.mxu0 0.0
  %1780 = vmatprep.subr.mxu0 0.0
  %1781 = vmatpush2.msra.mxu0 0.0
  %1782 = vmatprep.mubr.f32.mxu0 0.0
  %1783 = vmatmul.mubr.f32.gmra.mxu0 %v1716
  %v1784 = vpop.f32.mrf.mxu0
  %v1785 = vadd.f32 0.0, %v1784
  %v1786 = vpop.f32.mrf.mxu0
  %1787 = vdwg.mxu0
  %v1788 = vadd.f32 %v268, %v1785
  %1789 = vmatprep.subr.mxu0 0.0
  %1790 = vmatpush1.msra.mxu0 0.0
  %1791 = vmatprep.subr.mxu0 0.0
  %1792 = vmatpush1.msra.mxu0 0.0
  %1793 = vmatprep.subr.mxu0 0.0
  %1794 = vmatpush1.msra.mxu0 0.0
  %1795 = vmatprep.subr.mxu0 0.0
  %1796 = vmatpush1.msra.mxu0 0.0
  %1797 = vmatprep.subr.mxu0 0.0
  %1798 = vmatpush1.msra.mxu0 0.0
  %1799 = vmatprep.subr.mxu0 0.0
  %1800 = vmatpush1.msra.mxu0 0.0
  %1801 = vmatprep.subr.mxu0 0.0
  %1802 = vmatpush1.msra.mxu0 0.0
  %1803 = vmatprep.subr.mxu0 0.0
  %1804 = vmatpush1.msra.mxu0 0.0
  %1805 = vmatprep.subr.mxu0 0.0
  %1806 = vmatpush1.msra.mxu0 0.0
  %1807 = vmatprep.subr.mxu0 0.0
  %1808 = vmatpush1.msra.mxu0 0.0
  %1809 = vmatprep.subr.mxu0 0.0
  %1810 = vmatpush1.msra.mxu0 0.0
  %1811 = vmatprep.subr.mxu0 0.0
  %1812 = vmatpush1.msra.mxu0 0.0
  %1813 = vmatprep.subr.mxu0 0.0
  %1814 = vmatpush1.msra.mxu0 %v373
  %1815 = vmatprep.subr.mxu0 0.0
  %1816 = vmatpush1.msra.mxu0 %v371
  %1817 = vmatprep.subr.mxu0 0.0
  %1818 = vmatpush1.msra.mxu0 %v369
  %1819 = vmatprep.subr.mxu0 0.0
  %1820 = vmatpush1.msra.mxu0 %v367
  %1821 = vmatprep.subr.mxu0 0.0
  %1822 = vmatpush2.msra.mxu0 0.0
  %1823 = vmatprep.subr.mxu0 0.0
  %1824 = vmatpush2.msra.mxu0 0.0
  %1825 = vmatprep.subr.mxu0 0.0
  %1826 = vmatpush2.msra.mxu0 0.0
  %1827 = vmatprep.subr.mxu0 0.0
  %1828 = vmatpush2.msra.mxu0 0.0
  %1829 = vmatprep.subr.mxu0 0.0
  %1830 = vmatpush2.msra.mxu0 0.0
  %1831 = vmatprep.subr.mxu0 0.0
  %1832 = vmatpush2.msra.mxu0 0.0
  %1833 = vmatprep.subr.mxu0 0.0
  %1834 = vmatpush2.msra.mxu0 0.0
  %1835 = vmatprep.subr.mxu0 0.0
  %1836 = vmatpush2.msra.mxu0 0.0
  %1837 = vmatprep.subr.mxu0 0.0
  %1838 = vmatpush2.msra.mxu0 0.0
  %1839 = vmatprep.subr.mxu0 0.0
  %1840 = vmatpush2.msra.mxu0 0.0
  %1841 = vmatprep.subr.mxu0 0.0
  %1842 = vmatpush2.msra.mxu0 0.0
  %1843 = vmatprep.subr.mxu0 0.0
  %1844 = vmatpush2.msra.mxu0 0.0
  %1845 = vmatprep.subr.mxu0 0.0
  %1846 = vmatpush2.msra.mxu0 0.0
  %1847 = vmatprep.subr.mxu0 0.0
  %1848 = vmatpush2.msra.mxu0 0.0
  %1849 = vmatprep.subr.mxu0 0.0
  %1850 = vmatpush2.msra.mxu0 0.0
  %1851 = vmatprep.subr.mxu0 0.0
  %1852 = vmatpush2.msra.mxu0 0.0
  %1853 = vmatprep.mubr.f32.mxu0 0.0
  %1854 = vmatmul.mubr.f32.gmra.mxu0 %v1716
  %v1855 = vpop.f32.mrf.mxu0
  %v1856 = vadd.f32 0.0, %v1855
  %v1857 = vpop.f32.mrf.mxu0
  %1858 = vdwg.mxu0
  %1860 = vrot.lane.b32.xlu0 %v1856, 32
  %v1861 = vpop.permute.xlu0 %1860
  %v1863 = vadd.f32 %v268, %v1861
  %1864 = vmatprep.subr.mxu0 0.0
  %1865 = vmatpush1.msra.mxu0 0.0
  %1866 = vmatprep.subr.mxu0 0.0
  %1867 = vmatpush1.msra.mxu0 0.0
  %1868 = vmatprep.subr.mxu0 0.0
  %1869 = vmatpush1.msra.mxu0 0.0
  %1870 = vmatprep.subr.mxu0 0.0
  %1871 = vmatpush1.msra.mxu0 0.0
  %1872 = vmatprep.subr.mxu0 0.0
  %1873 = vmatpush1.msra.mxu0 0.0
  %1874 = vmatprep.subr.mxu0 0.0
  %1875 = vmatpush1.msra.mxu0 0.0
  %1876 = vmatprep.subr.mxu0 0.0
  %1877 = vmatpush1.msra.mxu0 0.0
  %1878 = vmatprep.subr.mxu0 0.0
  %1879 = vmatpush1.msra.mxu0 0.0
  %1880 = vmatprep.subr.mxu0 0.0
  %1881 = vmatpush1.msra.mxu0 0.0
  %1882 = vmatprep.subr.mxu0 0.0
  %1883 = vmatpush1.msra.mxu0 0.0
  %1884 = vmatprep.subr.mxu0 0.0
  %1885 = vmatpush1.msra.mxu0 0.0
  %1886 = vmatprep.subr.mxu0 0.0
  %1887 = vmatpush1.msra.mxu0 0.0
  %1888 = vmatprep.subr.mxu0 0.0
  %1889 = vmatpush1.msra.mxu0 %v460
  %1890 = vmatprep.subr.mxu0 0.0
  %1891 = vmatpush1.msra.mxu0 %v458
  %1892 = vmatprep.subr.mxu0 0.0
  %1893 = vmatpush1.msra.mxu0 %v456
  %1894 = vmatprep.subr.mxu0 0.0
  %1895 = vmatpush1.msra.mxu0 %v454
  %1896 = vmatprep.subr.mxu0 0.0
  %1897 = vmatpush2.msra.mxu0 0.0
  %1898 = vmatprep.subr.mxu0 0.0
  %1899 = vmatpush2.msra.mxu0 0.0
  %1900 = vmatprep.subr.mxu0 0.0
  %1901 = vmatpush2.msra.mxu0 0.0
  %1902 = vmatprep.subr.mxu0 0.0
  %1903 = vmatpush2.msra.mxu0 0.0
  %1904 = vmatprep.subr.mxu0 0.0
  %1905 = vmatpush2.msra.mxu0 0.0
  %1906 = vmatprep.subr.mxu0 0.0
  %1907 = vmatpush2.msra.mxu0 0.0
  %1908 = vmatprep.subr.mxu0 0.0
  %1909 = vmatpush2.msra.mxu0 0.0
  %1910 = vmatprep.subr.mxu0 0.0
  %1911 = vmatpush2.msra.mxu0 0.0
  %1912 = vmatprep.subr.mxu0 0.0
  %1913 = vmatpush2.msra.mxu0 0.0
  %1914 = vmatprep.subr.mxu0 0.0
  %1915 = vmatpush2.msra.mxu0 0.0
  %1916 = vmatprep.subr.mxu0 0.0
  %1917 = vmatpush2.msra.mxu0 0.0
  %1918 = vmatprep.subr.mxu0 0.0
  %1919 = vmatpush2.msra.mxu0 0.0
  %1920 = vmatprep.subr.mxu0 0.0
  %1921 = vmatpush2.msra.mxu0 0.0
  %1922 = vmatprep.subr.mxu0 0.0
  %1923 = vmatpush2.msra.mxu0 0.0
  %1924 = vmatprep.subr.mxu0 0.0
  %1925 = vmatpush2.msra.mxu0 0.0
  %1926 = vmatprep.subr.mxu0 0.0
  %1927 = vmatpush2.msra.mxu0 0.0
  %1928 = vmatprep.mubr.f32.mxu0 0.0
  %1929 = vmatmul.mubr.f32.gmra.mxu0 %v1716
  %v1930 = vpop.f32.mrf.mxu0
  %v1931 = vadd.f32 0.0, %v1930
  %v1932 = vpop.f32.mrf.mxu0
  %1933 = vdwg.mxu0
  %1935 = vrot.lane.b32.xlu0 %v1931, 64
  %v1936 = vpop.permute.xlu0 %1935
  %v1938 = vadd.f32 %v268, %v1936
  %1939 = vmatprep.subr.mxu0 0.0
  %1940 = vmatpush1.msra.mxu0 0.0
  %1941 = vmatprep.subr.mxu0 0.0
  %1942 = vmatpush1.msra.mxu0 0.0
  %1943 = vmatprep.subr.mxu0 0.0
  %1944 = vmatpush1.msra.mxu0 0.0
  %1945 = vmatprep.subr.mxu0 0.0
  %1946 = vmatpush1.msra.mxu0 0.0
  %1947 = vmatprep.subr.mxu0 0.0
  %1948 = vmatpush1.msra.mxu0 0.0
  %1949 = vmatprep.subr.mxu0 0.0
  %1950 = vmatpush1.msra.mxu0 0.0
  %1951 = vmatprep.subr.mxu0 0.0
  %1952 = vmatpush1.msra.mxu0 0.0
  %1953 = vmatprep.subr.mxu0 0.0
  %1954 = vmatpush1.msra.mxu0 0.0
  %1955 = vmatprep.subr.mxu0 0.0
  %1956 = vmatpush1.msra.mxu0 0.0
  %1957 = vmatprep.subr.mxu0 0.0
  %1958 = vmatpush1.msra.mxu0 0.0
  %1959 = vmatprep.subr.mxu0 0.0
  %1960 = vmatpush1.msra.mxu0 0.0
  %1961 = vmatprep.subr.mxu0 0.0
  %1962 = vmatpush1.msra.mxu0 0.0
  %1963 = vmatprep.subr.mxu0 0.0
  %1964 = vmatpush1.msra.mxu0 %v547
  %1965 = vmatprep.subr.mxu0 0.0
  %1966 = vmatpush1.msra.mxu0 %v545
  %1967 = vmatprep.subr.mxu0 0.0
  %1968 = vmatpush1.msra.mxu0 %v543
  %1969 = vmatprep.subr.mxu0 0.0
  %1970 = vmatpush1.msra.mxu0 %v541
  %1971 = vmatprep.subr.mxu0 0.0
  %1972 = vmatpush2.msra.mxu0 0.0
  %1973 = vmatprep.subr.mxu0 0.0
  %1974 = vmatpush2.msra.mxu0 0.0
  %1975 = vmatprep.subr.mxu0 0.0
  %1976 = vmatpush2.msra.mxu0 0.0
  %1977 = vmatprep.subr.mxu0 0.0
  %1978 = vmatpush2.msra.mxu0 0.0
  %1979 = vmatprep.subr.mxu0 0.0
  %1980 = vmatpush2.msra.mxu0 0.0
  %1981 = vmatprep.subr.mxu0 0.0
  %1982 = vmatpush2.msra.mxu0 0.0
  %1983 = vmatprep.subr.mxu0 0.0
  %1984 = vmatpush2.msra.mxu0 0.0
  %1985 = vmatprep.subr.mxu0 0.0
  %1986 = vmatpush2.msra.mxu0 0.0
  %1987 = vmatprep.subr.mxu0 0.0
  %1988 = vmatpush2.msra.mxu0 0.0
  %1989 = vmatprep.subr.mxu0 0.0
  %1990 = vmatpush2.msra.mxu0 0.0
  %1991 = vmatprep.subr.mxu0 0.0
  %1992 = vmatpush2.msra.mxu0 0.0
  %1993 = vmatprep.subr.mxu0 0.0
  %1994 = vmatpush2.msra.mxu0 0.0
  %1995 = vmatprep.subr.mxu0 0.0
  %1996 = vmatpush2.msra.mxu0 0.0
  %1997 = vmatprep.subr.mxu0 0.0
  %1998 = vmatpush2.msra.mxu0 0.0
  %1999 = vmatprep.subr.mxu0 0.0
  %2000 = vmatpush2.msra.mxu0 0.0
  %2001 = vmatprep.subr.mxu0 0.0
  %2002 = vmatpush2.msra.mxu0 0.0
  %2003 = vmatprep.mubr.f32.mxu0 0.0
  %2004 = vmatmul.mubr.f32.gmra.mxu0 %v1716
  %v2005 = vpop.f32.mrf.mxu0
  %v2006 = vadd.f32 0.0, %v2005
  %v2007 = vpop.f32.mrf.mxu0
  %2008 = vdwg.mxu0
  %2010 = vrot.lane.b32.xlu0 %v2006, 96
  %v2011 = vpop.permute.xlu0 %2010
  %v2013 = vadd.f32 %v268, %v2011
  %v2014 = vxor.u32 %v1863, 2147483648
  %v2015 = vmul.f32 %v2014, 1.442695
  %v2016 = vpow.pop %v2015
  %v2017 = vadd.f32 %v2016, 1.0
  %v2018 = vrcp.pop %v2017
  %v2019 = vmul.f32 1.0, %v2018
  %v2021 = vrot.slane %v1695, 4
  %v2023 = vmul.f32 %v2019, %v2021
  %v2024 = vxor.u32 %v1788, 2147483648
  %v2025 = vmul.f32 %v2024, 1.442695
  %v2026 = vpow.pop %v2025
  %v2027 = vadd.f32 %v2026, 1.0
  %v2028 = vrcp.pop %v2027
  %v2029 = vmul.f32 1.0, %v2028
  %v2030 = vtanh.pop %v1938
  %2032 = vrot.lane.b32.xlu0 %v2030, 64
  %v2033 = vpop.permute.xlu0 %2032
  %v2035 = vmul.f32 %v2029, %v2033
  %2037 = vrot.lane.b32.xlu0 %v2035, 32
  %v2038 = vpop.permute.xlu0 %2037
  %v2040 = vadd.f32 %v2023, %v2038
  %v2041 = vxor.u32 %v2013, 2147483648
  %v2042 = vmul.f32 %v2041, 1.442695
  %v2043 = vpow.pop %v2042
  %v2044 = vadd.f32 %v2043, 1.0
  %v2045 = vrcp.pop %v2044
  %v2046 = vmul.f32 1.0, %v2045
  %v2047 = vtanh.pop %v2040
  %2049 = vrot.lane.b32.xlu0 %v2047, 64
  %v2050 = vpop.permute.xlu0 %2049
  %v2052 = vmul.f32 %v2046, %v2050
  %2054 = vrot.lane.b32.xlu0 %v2052, 32
  %v2055 = vpop.permute.xlu0 %2054
  %2057 = vst.msk [vmem:[#allocation2 + $0x14] sm:$0xf] %vm287, %v2055
  %v2058 = vsel %vm178, %v2055, 0
  %2060 = vmatprep.subr.mxu0 0.0
  %2061 = vmatpush1.msra.mxu0 0.0
  %2062 = vmatprep.subr.mxu0 0.0
  %2063 = vmatpush1.msra.mxu0 0.0
  %2064 = vmatprep.subr.mxu0 0.0
  %2065 = vmatpush1.msra.mxu0 0.0
  %2066 = vmatprep.subr.mxu0 0.0
  %2067 = vmatpush1.msra.mxu0 0.0
  %2068 = vmatprep.subr.mxu0 0.0
  %2069 = vmatpush1.msra.mxu0 0.0
  %2070 = vmatprep.subr.mxu0 0.0
  %2071 = vmatpush1.msra.mxu0 0.0
  %2072 = vmatprep.subr.mxu0 0.0
  %2073 = vmatpush1.msra.mxu0 0.0
  %2074 = vmatprep.subr.mxu0 0.0
  %2075 = vmatpush1.msra.mxu0 0.0
  %2076 = vmatprep.subr.mxu0 0.0
  %2077 = vmatpush1.msra.mxu0 0.0
  %2078 = vmatprep.subr.mxu0 0.0
  %2079 = vmatpush1.msra.mxu0 0.0
  %2080 = vmatprep.subr.mxu0 0.0
  %2081 = vmatpush1.msra.mxu0 0.0
  %2082 = vmatprep.subr.mxu0 0.0
  %2083 = vmatpush1.msra.mxu0 0.0
  %2084 = vmatprep.subr.mxu0 0.0
  %2085 = vmatpush1.msra.mxu0 %v279
  %2086 = vmatprep.subr.mxu0 0.0
  %2087 = vmatpush1.msra.mxu0 %v278
  %2088 = vmatprep.subr.mxu0 0.0
  %2089 = vmatpush1.msra.mxu0 %v277
  %2090 = vmatprep.subr.mxu0 0.0
  %2091 = vmatpush1.msra.mxu0 %v276
  %2092 = vmatprep.subr.mxu0 0.0
  %2093 = vmatpush2.msra.mxu0 0.0
  %2094 = vmatprep.subr.mxu0 0.0
  %2095 = vmatpush2.msra.mxu0 0.0
  %2096 = vmatprep.subr.mxu0 0.0
  %2097 = vmatpush2.msra.mxu0 0.0
  %2098 = vmatprep.subr.mxu0 0.0
  %2099 = vmatpush2.msra.mxu0 0.0
  %2100 = vmatprep.subr.mxu0 0.0
  %2101 = vmatpush2.msra.mxu0 0.0
  %2102 = vmatprep.subr.mxu0 0.0
  %2103 = vmatpush2.msra.mxu0 0.0
  %2104 = vmatprep.subr.mxu0 0.0
  %2105 = vmatpush2.msra.mxu0 0.0
  %2106 = vmatprep.subr.mxu0 0.0
  %2107 = vmatpush2.msra.mxu0 0.0
  %2108 = vmatprep.subr.mxu0 0.0
  %2109 = vmatpush2.msra.mxu0 0.0
  %2110 = vmatprep.subr.mxu0 0.0
  %2111 = vmatpush2.msra.mxu0 0.0
  %2112 = vmatprep.subr.mxu0 0.0
  %2113 = vmatpush2.msra.mxu0 0.0
  %2114 = vmatprep.subr.mxu0 0.0
  %2115 = vmatpush2.msra.mxu0 0.0
  %2116 = vmatprep.subr.mxu0 0.0
  %2117 = vmatpush2.msra.mxu0 0.0
  %2118 = vmatprep.subr.mxu0 0.0
  %2119 = vmatpush2.msra.mxu0 0.0
  %2120 = vmatprep.subr.mxu0 0.0
  %2121 = vmatpush2.msra.mxu0 0.0
  %2122 = vmatprep.subr.mxu0 0.0
  %2123 = vmatpush2.msra.mxu0 0.0
  %2124 = vmatprep.mubr.f32.mxu0 0.0
  %2125 = vmatmul.mubr.f32.gmra.mxu0 %v2058
  %v2126 = vpop.f32.mrf.mxu0
  %v2127 = vadd.f32 0.0, %v2126
  %v2128 = vpop.f32.mrf.mxu0
  %2129 = vdwg.mxu0
  %v2131 = vrot.slane %v2127, 4
  %v2133 = vadd.f32 %v268, %v2131
  %2134 = vmatprep.subr.mxu0 0.0
  %2135 = vmatpush1.msra.mxu0 0.0
  %2136 = vmatprep.subr.mxu0 0.0
  %2137 = vmatpush1.msra.mxu0 0.0
  %2138 = vmatprep.subr.mxu0 0.0
  %2139 = vmatpush1.msra.mxu0 0.0
  %2140 = vmatprep.subr.mxu0 0.0
  %2141 = vmatpush1.msra.mxu0 0.0
  %2142 = vmatprep.subr.mxu0 0.0
  %2143 = vmatpush1.msra.mxu0 0.0
  %2144 = vmatprep.subr.mxu0 0.0
  %2145 = vmatpush1.msra.mxu0 0.0
  %2146 = vmatprep.subr.mxu0 0.0
  %2147 = vmatpush1.msra.mxu0 0.0
  %2148 = vmatprep.subr.mxu0 0.0
  %2149 = vmatpush1.msra.mxu0 0.0
  %2150 = vmatprep.subr.mxu0 0.0
  %2151 = vmatpush1.msra.mxu0 0.0
  %2152 = vmatprep.subr.mxu0 0.0
  %2153 = vmatpush1.msra.mxu0 0.0
  %2154 = vmatprep.subr.mxu0 0.0
  %2155 = vmatpush1.msra.mxu0 0.0
  %2156 = vmatprep.subr.mxu0 0.0
  %2157 = vmatpush1.msra.mxu0 0.0
  %2158 = vmatprep.subr.mxu0 0.0
  %2159 = vmatpush1.msra.mxu0 %v373
  %2160 = vmatprep.subr.mxu0 0.0
  %2161 = vmatpush1.msra.mxu0 %v371
  %2162 = vmatprep.subr.mxu0 0.0
  %2163 = vmatpush1.msra.mxu0 %v369
  %2164 = vmatprep.subr.mxu0 0.0
  %2165 = vmatpush1.msra.mxu0 %v367
  %2166 = vmatprep.subr.mxu0 0.0
  %2167 = vmatpush2.msra.mxu0 0.0
  %2168 = vmatprep.subr.mxu0 0.0
  %2169 = vmatpush2.msra.mxu0 0.0
  %2170 = vmatprep.subr.mxu0 0.0
  %2171 = vmatpush2.msra.mxu0 0.0
  %2172 = vmatprep.subr.mxu0 0.0
  %2173 = vmatpush2.msra.mxu0 0.0
  %2174 = vmatprep.subr.mxu0 0.0
  %2175 = vmatpush2.msra.mxu0 0.0
  %2176 = vmatprep.subr.mxu0 0.0
  %2177 = vmatpush2.msra.mxu0 0.0
  %2178 = vmatprep.subr.mxu0 0.0
  %2179 = vmatpush2.msra.mxu0 0.0
  %2180 = vmatprep.subr.mxu0 0.0
  %2181 = vmatpush2.msra.mxu0 0.0
  %2182 = vmatprep.subr.mxu0 0.0
  %2183 = vmatpush2.msra.mxu0 0.0
  %2184 = vmatprep.subr.mxu0 0.0
  %2185 = vmatpush2.msra.mxu0 0.0
  %2186 = vmatprep.subr.mxu0 0.0
  %2187 = vmatpush2.msra.mxu0 0.0
  %2188 = vmatprep.subr.mxu0 0.0
  %2189 = vmatpush2.msra.mxu0 0.0
  %2190 = vmatprep.subr.mxu0 0.0
  %2191 = vmatpush2.msra.mxu0 0.0
  %2192 = vmatprep.subr.mxu0 0.0
  %2193 = vmatpush2.msra.mxu0 0.0
  %2194 = vmatprep.subr.mxu0 0.0
  %2195 = vmatpush2.msra.mxu0 0.0
  %2196 = vmatprep.subr.mxu0 0.0
  %2197 = vmatpush2.msra.mxu0 0.0
  %2198 = vmatprep.mubr.f32.mxu0 0.0
  %2199 = vmatmul.mubr.f32.gmra.mxu0 %v2058
  %v2200 = vpop.f32.mrf.mxu0
  %v2201 = vadd.f32 0.0, %v2200
  %v2202 = vpop.f32.mrf.mxu0
  %2203 = vdwg.mxu0
  %v2205 = vrot.slane %v2201, 4
  %2206 = vrot.lane.b32.xlu0 %v2205, 32
  %v2207 = vpop.permute.xlu0 %2206
  %v2209 = vadd.f32 %v268, %v2207
  %2210 = vmatprep.subr.mxu0 0.0
  %2211 = vmatpush1.msra.mxu0 0.0
  %2212 = vmatprep.subr.mxu0 0.0
  %2213 = vmatpush1.msra.mxu0 0.0
  %2214 = vmatprep.subr.mxu0 0.0
  %2215 = vmatpush1.msra.mxu0 0.0
  %2216 = vmatprep.subr.mxu0 0.0
  %2217 = vmatpush1.msra.mxu0 0.0
  %2218 = vmatprep.subr.mxu0 0.0
  %2219 = vmatpush1.msra.mxu0 0.0
  %2220 = vmatprep.subr.mxu0 0.0
  %2221 = vmatpush1.msra.mxu0 0.0
  %2222 = vmatprep.subr.mxu0 0.0
  %2223 = vmatpush1.msra.mxu0 0.0
  %2224 = vmatprep.subr.mxu0 0.0
  %2225 = vmatpush1.msra.mxu0 0.0
  %2226 = vmatprep.subr.mxu0 0.0
  %2227 = vmatpush1.msra.mxu0 0.0
  %2228 = vmatprep.subr.mxu0 0.0
  %2229 = vmatpush1.msra.mxu0 0.0
  %2230 = vmatprep.subr.mxu0 0.0
  %2231 = vmatpush1.msra.mxu0 0.0
  %2232 = vmatprep.subr.mxu0 0.0
  %2233 = vmatpush1.msra.mxu0 0.0
  %2234 = vmatprep.subr.mxu0 0.0
  %2235 = vmatpush1.msra.mxu0 %v460
  %2236 = vmatprep.subr.mxu0 0.0
  %2237 = vmatpush1.msra.mxu0 %v458
  %2238 = vmatprep.subr.mxu0 0.0
  %2239 = vmatpush1.msra.mxu0 %v456
  %2240 = vmatprep.subr.mxu0 0.0
  %2241 = vmatpush1.msra.mxu0 %v454
  %2242 = vmatprep.subr.mxu0 0.0
  %2243 = vmatpush2.msra.mxu0 0.0
  %2244 = vmatprep.subr.mxu0 0.0
  %2245 = vmatpush2.msra.mxu0 0.0
  %2246 = vmatprep.subr.mxu0 0.0
  %2247 = vmatpush2.msra.mxu0 0.0
  %2248 = vmatprep.subr.mxu0 0.0
  %2249 = vmatpush2.msra.mxu0 0.0
  %2250 = vmatprep.subr.mxu0 0.0
  %2251 = vmatpush2.msra.mxu0 0.0
  %2252 = vmatprep.subr.mxu0 0.0
  %2253 = vmatpush2.msra.mxu0 0.0
  %2254 = vmatprep.subr.mxu0 0.0
  %2255 = vmatpush2.msra.mxu0 0.0
  %2256 = vmatprep.subr.mxu0 0.0
  %2257 = vmatpush2.msra.mxu0 0.0
  %2258 = vmatprep.subr.mxu0 0.0
  %2259 = vmatpush2.msra.mxu0 0.0
  %2260 = vmatprep.subr.mxu0 0.0
  %2261 = vmatpush2.msra.mxu0 0.0
  %2262 = vmatprep.subr.mxu0 0.0
  %2263 = vmatpush2.msra.mxu0 0.0
  %2264 = vmatprep.subr.mxu0 0.0
  %2265 = vmatpush2.msra.mxu0 0.0
  %2266 = vmatprep.subr.mxu0 0.0
  %2267 = vmatpush2.msra.mxu0 0.0
  %2268 = vmatprep.subr.mxu0 0.0
  %2269 = vmatpush2.msra.mxu0 0.0
  %2270 = vmatprep.subr.mxu0 0.0
  %2271 = vmatpush2.msra.mxu0 0.0
  %2272 = vmatprep.subr.mxu0 0.0
  %2273 = vmatpush2.msra.mxu0 0.0
  %2274 = vmatprep.mubr.f32.mxu0 0.0
  %2275 = vmatmul.mubr.f32.gmra.mxu0 %v2058
  %v2276 = vpop.f32.mrf.mxu0
  %v2277 = vadd.f32 0.0, %v2276
  %v2278 = vpop.f32.mrf.mxu0
  %2279 = vdwg.mxu0
  %v2281 = vrot.slane %v2277, 4
  %2282 = vrot.lane.b32.xlu0 %v2281, 64
  %v2283 = vpop.permute.xlu0 %2282
  %v2285 = vadd.f32 %v268, %v2283
  %2286 = vmatprep.subr.mxu0 0.0
  %2287 = vmatpush1.msra.mxu0 0.0
  %2288 = vmatprep.subr.mxu0 0.0
  %2289 = vmatpush1.msra.mxu0 0.0
  %2290 = vmatprep.subr.mxu0 0.0
  %2291 = vmatpush1.msra.mxu0 0.0
  %2292 = vmatprep.subr.mxu0 0.0
  %2293 = vmatpush1.msra.mxu0 0.0
  %2294 = vmatprep.subr.mxu0 0.0
  %2295 = vmatpush1.msra.mxu0 0.0
  %2296 = vmatprep.subr.mxu0 0.0
  %2297 = vmatpush1.msra.mxu0 0.0
  %2298 = vmatprep.subr.mxu0 0.0
  %2299 = vmatpush1.msra.mxu0 0.0
  %2300 = vmatprep.subr.mxu0 0.0
  %2301 = vmatpush1.msra.mxu0 0.0
  %2302 = vmatprep.subr.mxu0 0.0
  %2303 = vmatpush1.msra.mxu0 0.0
  %2304 = vmatprep.subr.mxu0 0.0
  %2305 = vmatpush1.msra.mxu0 0.0
  %2306 = vmatprep.subr.mxu0 0.0
  %2307 = vmatpush1.msra.mxu0 0.0
  %2308 = vmatprep.subr.mxu0 0.0
  %2309 = vmatpush1.msra.mxu0 0.0
  %2310 = vmatprep.subr.mxu0 0.0
  %2311 = vmatpush1.msra.mxu0 %v547
  %2312 = vmatprep.subr.mxu0 0.0
  %2313 = vmatpush1.msra.mxu0 %v545
  %2314 = vmatprep.subr.mxu0 0.0
  %2315 = vmatpush1.msra.mxu0 %v543
  %2316 = vmatprep.subr.mxu0 0.0
  %2317 = vmatpush1.msra.mxu0 %v541
  %2318 = vmatprep.subr.mxu0 0.0
  %2319 = vmatpush2.msra.mxu0 0.0
  %2320 = vmatprep.subr.mxu0 0.0
  %2321 = vmatpush2.msra.mxu0 0.0
  %2322 = vmatprep.subr.mxu0 0.0
  %2323 = vmatpush2.msra.mxu0 0.0
  %2324 = vmatprep.subr.mxu0 0.0
  %2325 = vmatpush2.msra.mxu0 0.0
  %2326 = vmatprep.subr.mxu0 0.0
  %2327 = vmatpush2.msra.mxu0 0.0
  %2328 = vmatprep.subr.mxu0 0.0
  %2329 = vmatpush2.msra.mxu0 0.0
  %2330 = vmatprep.subr.mxu0 0.0
  %2331 = vmatpush2.msra.mxu0 0.0
  %2332 = vmatprep.subr.mxu0 0.0
  %2333 = vmatpush2.msra.mxu0 0.0
  %2334 = vmatprep.subr.mxu0 0.0
  %2335 = vmatpush2.msra.mxu0 0.0
  %2336 = vmatprep.subr.mxu0 0.0
  %2337 = vmatpush2.msra.mxu0 0.0
  %2338 = vmatprep.subr.mxu0 0.0
  %2339 = vmatpush2.msra.mxu0 0.0
  %2340 = vmatprep.subr.mxu0 0.0
  %2341 = vmatpush2.msra.mxu0 0.0
  %2342 = vmatprep.subr.mxu0 0.0
  %2343 = vmatpush2.msra.mxu0 0.0
  %2344 = vmatprep.subr.mxu0 0.0
  %2345 = vmatpush2.msra.mxu0 0.0
  %2346 = vmatprep.subr.mxu0 0.0
  %2347 = vmatpush2.msra.mxu0 0.0
  %2348 = vmatprep.subr.mxu0 0.0
  %2349 = vmatpush2.msra.mxu0 0.0
  %2350 = vmatprep.mubr.f32.mxu0 0.0
  %2351 = vmatmul.mubr.f32.gmra.mxu0 %v2058
  %v2352 = vpop.f32.mrf.mxu0
  %v2353 = vadd.f32 0.0, %v2352
  %v2354 = vpop.f32.mrf.mxu0
  %2355 = vdwg.mxu0
  %v2357 = vrot.slane %v2353, 4
  %2358 = vrot.lane.b32.xlu0 %v2357, 96
  %v2359 = vpop.permute.xlu0 %2358
  %v2361 = vadd.f32 %v268, %v2359
  %v2362 = vxor.u32 %v2209, 2147483648
  %v2363 = vmul.f32 %v2362, 1.442695
  %v2364 = vpow.pop %v2363
  %v2365 = vadd.f32 %v2364, 1.0
  %v2366 = vrcp.pop %v2365
  %v2367 = vmul.f32 1.0, %v2366
  %v2369 = vrot.slane %v2040, 4
  %v2371 = vmul.f32 %v2367, %v2369
  %v2372 = vxor.u32 %v2133, 2147483648
  %v2373 = vmul.f32 %v2372, 1.442695
  %v2374 = vpow.pop %v2373
  %v2375 = vadd.f32 %v2374, 1.0
  %v2376 = vrcp.pop %v2375
  %v2377 = vmul.f32 1.0, %v2376
  %v2378 = vtanh.pop %v2285
  %2380 = vrot.lane.b32.xlu0 %v2378, 64
  %v2381 = vpop.permute.xlu0 %2380
  %v2383 = vmul.f32 %v2377, %v2381
  %2385 = vrot.lane.b32.xlu0 %v2383, 32
  %v2386 = vpop.permute.xlu0 %2385
  %v2388 = vadd.f32 %v2371, %v2386
  %v2389 = vxor.u32 %v2361, 2147483648
  %v2390 = vmul.f32 %v2389, 1.442695
  %v2391 = vpow.pop %v2390
  %v2392 = vadd.f32 %v2391, 1.0
  %v2393 = vrcp.pop %v2392
  %v2394 = vmul.f32 1.0, %v2393
  %v2395 = vtanh.pop %v2388
  %2397 = vrot.lane.b32.xlu0 %v2395, 64
  %v2398 = vpop.permute.xlu0 %2397
  %v2400 = vmul.f32 %v2394, %v2398
  %2402 = vrot.lane.b32.xlu0 %v2400, 32
  %v2403 = vpop.permute.xlu0 %2402
  %2405 = vst.msk [vmem:[#allocation2 + $0x14] sm:$0xf0] %vm1018, %v2403
  %v2406 = vrot.slane %v2400, 4
  %2407 = vrot.lane.b32.xlu0 %v2406, 32
  %v2408 = vpop.permute.xlu0 %2407
  %v2409 = vsel %vm178, %v2408, 0
  %2411 = vmatprep.subr.mxu0 0.0
  %2412 = vmatpush1.msra.mxu0 0.0
  %2413 = vmatprep.subr.mxu0 0.0
  %2414 = vmatpush1.msra.mxu0 0.0
  %2415 = vmatprep.subr.mxu0 0.0
  %2416 = vmatpush1.msra.mxu0 0.0
  %2417 = vmatprep.subr.mxu0 0.0
  %2418 = vmatpush1.msra.mxu0 0.0
  %2419 = vmatprep.subr.mxu0 0.0
  %2420 = vmatpush1.msra.mxu0 0.0
  %2421 = vmatprep.subr.mxu0 0.0
  %2422 = vmatpush1.msra.mxu0 0.0
  %2423 = vmatprep.subr.mxu0 0.0
  %2424 = vmatpush1.msra.mxu0 0.0
  %2425 = vmatprep.subr.mxu0 0.0
  %2426 = vmatpush1.msra.mxu0 0.0
  %2427 = vmatprep.subr.mxu0 0.0
  %2428 = vmatpush1.msra.mxu0 0.0
  %2429 = vmatprep.subr.mxu0 0.0
  %2430 = vmatpush1.msra.mxu0 0.0
  %2431 = vmatprep.subr.mxu0 0.0
  %2432 = vmatpush1.msra.mxu0 0.0
  %2433 = vmatprep.subr.mxu0 0.0
  %2434 = vmatpush1.msra.mxu0 0.0
  %2435 = vmatprep.subr.mxu0 0.0
  %2436 = vmatpush1.msra.mxu0 %v279
  %2437 = vmatprep.subr.mxu0 0.0
  %2438 = vmatpush1.msra.mxu0 %v278
  %2439 = vmatprep.subr.mxu0 0.0
  %2440 = vmatpush1.msra.mxu0 %v277
  %2441 = vmatprep.subr.mxu0 0.0
  %2442 = vmatpush1.msra.mxu0 %v276
  %2443 = vmatprep.subr.mxu0 0.0
  %2444 = vmatpush2.msra.mxu0 0.0
  %2445 = vmatprep.subr.mxu0 0.0
  %2446 = vmatpush2.msra.mxu0 0.0
  %2447 = vmatprep.subr.mxu0 0.0
  %2448 = vmatpush2.msra.mxu0 0.0
  %2449 = vmatprep.subr.mxu0 0.0
  %2450 = vmatpush2.msra.mxu0 0.0
  %2451 = vmatprep.subr.mxu0 0.0
  %2452 = vmatpush2.msra.mxu0 0.0
  %2453 = vmatprep.subr.mxu0 0.0
  %2454 = vmatpush2.msra.mxu0 0.0
  %2455 = vmatprep.subr.mxu0 0.0
  %2456 = vmatpush2.msra.mxu0 0.0
  %2457 = vmatprep.subr.mxu0 0.0
  %2458 = vmatpush2.msra.mxu0 0.0
  %2459 = vmatprep.subr.mxu0 0.0
  %2460 = vmatpush2.msra.mxu0 0.0
  %2461 = vmatprep.subr.mxu0 0.0
  %2462 = vmatpush2.msra.mxu0 0.0
  %2463 = vmatprep.subr.mxu0 0.0
  %2464 = vmatpush2.msra.mxu0 0.0
  %2465 = vmatprep.subr.mxu0 0.0
  %2466 = vmatpush2.msra.mxu0 0.0
  %2467 = vmatprep.subr.mxu0 0.0
  %2468 = vmatpush2.msra.mxu0 0.0
  %2469 = vmatprep.subr.mxu0 0.0
  %2470 = vmatpush2.msra.mxu0 0.0
  %2471 = vmatprep.subr.mxu0 0.0
  %2472 = vmatpush2.msra.mxu0 0.0
  %2473 = vmatprep.subr.mxu0 0.0
  %2474 = vmatpush2.msra.mxu0 0.0
  %2475 = vmatprep.mubr.f32.mxu0 0.0
  %2476 = vmatmul.mubr.f32.gmra.mxu0 %v2409
  %v2477 = vpop.f32.mrf.mxu0
  %v2478 = vadd.f32 0.0, %v2477
  %v2479 = vpop.f32.mrf.mxu0
  %2480 = vdwg.mxu0
  %v2481 = vadd.f32 %v273, %v2478
  %2482 = vmatprep.subr.mxu0 0.0
  %2483 = vmatpush1.msra.mxu0 0.0
  %2484 = vmatprep.subr.mxu0 0.0
  %2485 = vmatpush1.msra.mxu0 0.0
  %2486 = vmatprep.subr.mxu0 0.0
  %2487 = vmatpush1.msra.mxu0 0.0
  %2488 = vmatprep.subr.mxu0 0.0
  %2489 = vmatpush1.msra.mxu0 0.0
  %2490 = vmatprep.subr.mxu0 0.0
  %2491 = vmatpush1.msra.mxu0 0.0
  %2492 = vmatprep.subr.mxu0 0.0
  %2493 = vmatpush1.msra.mxu0 0.0
  %2494 = vmatprep.subr.mxu0 0.0
  %2495 = vmatpush1.msra.mxu0 0.0
  %2496 = vmatprep.subr.mxu0 0.0
  %2497 = vmatpush1.msra.mxu0 0.0
  %2498 = vmatprep.subr.mxu0 0.0
  %2499 = vmatpush1.msra.mxu0 0.0
  %2500 = vmatprep.subr.mxu0 0.0
  %2501 = vmatpush1.msra.mxu0 0.0
  %2502 = vmatprep.subr.mxu0 0.0
  %2503 = vmatpush1.msra.mxu0 0.0
  %2504 = vmatprep.subr.mxu0 0.0
  %2505 = vmatpush1.msra.mxu0 0.0
  %2506 = vmatprep.subr.mxu0 0.0
  %2507 = vmatpush1.msra.mxu0 %v373
  %2508 = vmatprep.subr.mxu0 0.0
  %2509 = vmatpush1.msra.mxu0 %v371
  %2510 = vmatprep.subr.mxu0 0.0
  %2511 = vmatpush1.msra.mxu0 %v369
  %2512 = vmatprep.subr.mxu0 0.0
  %2513 = vmatpush1.msra.mxu0 %v367
  %2514 = vmatprep.subr.mxu0 0.0
  %2515 = vmatpush2.msra.mxu0 0.0
  %2516 = vmatprep.subr.mxu0 0.0
  %2517 = vmatpush2.msra.mxu0 0.0
  %2518 = vmatprep.subr.mxu0 0.0
  %2519 = vmatpush2.msra.mxu0 0.0
  %2520 = vmatprep.subr.mxu0 0.0
  %2521 = vmatpush2.msra.mxu0 0.0
  %2522 = vmatprep.subr.mxu0 0.0
  %2523 = vmatpush2.msra.mxu0 0.0
  %2524 = vmatprep.subr.mxu0 0.0
  %2525 = vmatpush2.msra.mxu0 0.0
  %2526 = vmatprep.subr.mxu0 0.0
  %2527 = vmatpush2.msra.mxu0 0.0
  %2528 = vmatprep.subr.mxu0 0.0
  %2529 = vmatpush2.msra.mxu0 0.0
  %2530 = vmatprep.subr.mxu0 0.0
  %2531 = vmatpush2.msra.mxu0 0.0
  %2532 = vmatprep.subr.mxu0 0.0
  %2533 = vmatpush2.msra.mxu0 0.0
  %2534 = vmatprep.subr.mxu0 0.0
  %2535 = vmatpush2.msra.mxu0 0.0
  %2536 = vmatprep.subr.mxu0 0.0
  %2537 = vmatpush2.msra.mxu0 0.0
  %2538 = vmatprep.subr.mxu0 0.0
  %2539 = vmatpush2.msra.mxu0 0.0
  %2540 = vmatprep.subr.mxu0 0.0
  %2541 = vmatpush2.msra.mxu0 0.0
  %2542 = vmatprep.subr.mxu0 0.0
  %2543 = vmatpush2.msra.mxu0 0.0
  %2544 = vmatprep.subr.mxu0 0.0
  %2545 = vmatpush2.msra.mxu0 0.0
  %2546 = vmatprep.mubr.f32.mxu0 0.0
  %2547 = vmatmul.mubr.f32.gmra.mxu0 %v2409
  %v2548 = vpop.f32.mrf.mxu0
  %v2549 = vadd.f32 0.0, %v2548
  %v2550 = vpop.f32.mrf.mxu0
  %2551 = vdwg.mxu0
  %2553 = vrot.lane.b32.xlu0 %v2549, 32
  %v2554 = vpop.permute.xlu0 %2553
  %v2556 = vadd.f32 %v273, %v2554
  %2557 = vmatprep.subr.mxu0 0.0
  %2558 = vmatpush1.msra.mxu0 0.0
  %2559 = vmatprep.subr.mxu0 0.0
  %2560 = vmatpush1.msra.mxu0 0.0
  %2561 = vmatprep.subr.mxu0 0.0
  %2562 = vmatpush1.msra.mxu0 0.0
  %2563 = vmatprep.subr.mxu0 0.0
  %2564 = vmatpush1.msra.mxu0 0.0
  %2565 = vmatprep.subr.mxu0 0.0
  %2566 = vmatpush1.msra.mxu0 0.0
  %2567 = vmatprep.subr.mxu0 0.0
  %2568 = vmatpush1.msra.mxu0 0.0
  %2569 = vmatprep.subr.mxu0 0.0
  %2570 = vmatpush1.msra.mxu0 0.0
  %2571 = vmatprep.subr.mxu0 0.0
  %2572 = vmatpush1.msra.mxu0 0.0
  %2573 = vmatprep.subr.mxu0 0.0
  %2574 = vmatpush1.msra.mxu0 0.0
  %2575 = vmatprep.subr.mxu0 0.0
  %2576 = vmatpush1.msra.mxu0 0.0
  %2577 = vmatprep.subr.mxu0 0.0
  %2578 = vmatpush1.msra.mxu0 0.0
  %2579 = vmatprep.subr.mxu0 0.0
  %2580 = vmatpush1.msra.mxu0 0.0
  %2581 = vmatprep.subr.mxu0 0.0
  %2582 = vmatpush1.msra.mxu0 %v460
  %2583 = vmatprep.subr.mxu0 0.0
  %2584 = vmatpush1.msra.mxu0 %v458
  %2585 = vmatprep.subr.mxu0 0.0
  %2586 = vmatpush1.msra.mxu0 %v456
  %2587 = vmatprep.subr.mxu0 0.0
  %2588 = vmatpush1.msra.mxu0 %v454
  %2589 = vmatprep.subr.mxu0 0.0
  %2590 = vmatpush2.msra.mxu0 0.0
  %2591 = vmatprep.subr.mxu0 0.0
  %2592 = vmatpush2.msra.mxu0 0.0
  %2593 = vmatprep.subr.mxu0 0.0
  %2594 = vmatpush2.msra.mxu0 0.0
  %2595 = vmatprep.subr.mxu0 0.0
  %2596 = vmatpush2.msra.mxu0 0.0
  %2597 = vmatprep.subr.mxu0 0.0
  %2598 = vmatpush2.msra.mxu0 0.0
  %2599 = vmatprep.subr.mxu0 0.0
  %2600 = vmatpush2.msra.mxu0 0.0
  %2601 = vmatprep.subr.mxu0 0.0
  %2602 = vmatpush2.msra.mxu0 0.0
  %2603 = vmatprep.subr.mxu0 0.0
  %2604 = vmatpush2.msra.mxu0 0.0
  %2605 = vmatprep.subr.mxu0 0.0
  %2606 = vmatpush2.msra.mxu0 0.0
  %2607 = vmatprep.subr.mxu0 0.0
  %2608 = vmatpush2.msra.mxu0 0.0
  %2609 = vmatprep.subr.mxu0 0.0
  %2610 = vmatpush2.msra.mxu0 0.0
  %2611 = vmatprep.subr.mxu0 0.0
  %2612 = vmatpush2.msra.mxu0 0.0
  %2613 = vmatprep.subr.mxu0 0.0
  %2614 = vmatpush2.msra.mxu0 0.0
  %2615 = vmatprep.subr.mxu0 0.0
  %2616 = vmatpush2.msra.mxu0 0.0
  %2617 = vmatprep.subr.mxu0 0.0
  %2618 = vmatpush2.msra.mxu0 0.0
  %2619 = vmatprep.subr.mxu0 0.0
  %2620 = vmatpush2.msra.mxu0 0.0
  %2621 = vmatprep.mubr.f32.mxu0 0.0
  %2622 = vmatmul.mubr.f32.gmra.mxu0 %v2409
  %v2623 = vpop.f32.mrf.mxu0
  %v2624 = vadd.f32 0.0, %v2623
  %v2625 = vpop.f32.mrf.mxu0
  %2626 = vdwg.mxu0
  %2628 = vrot.lane.b32.xlu0 %v2624, 64
  %v2629 = vpop.permute.xlu0 %2628
  %v2631 = vadd.f32 %v273, %v2629
  %2632 = vmatprep.subr.mxu0 0.0
  %2633 = vmatpush1.msra.mxu0 0.0
  %2634 = vmatprep.subr.mxu0 0.0
  %2635 = vmatpush1.msra.mxu0 0.0
  %2636 = vmatprep.subr.mxu0 0.0
  %2637 = vmatpush1.msra.mxu0 0.0
  %2638 = vmatprep.subr.mxu0 0.0
  %2639 = vmatpush1.msra.mxu0 0.0
  %2640 = vmatprep.subr.mxu0 0.0
  %2641 = vmatpush1.msra.mxu0 0.0
  %2642 = vmatprep.subr.mxu0 0.0
  %2643 = vmatpush1.msra.mxu0 0.0
  %2644 = vmatprep.subr.mxu0 0.0
  %2645 = vmatpush1.msra.mxu0 0.0
  %2646 = vmatprep.subr.mxu0 0.0
  %2647 = vmatpush1.msra.mxu0 0.0
  %2648 = vmatprep.subr.mxu0 0.0
  %2649 = vmatpush1.msra.mxu0 0.0
  %2650 = vmatprep.subr.mxu0 0.0
  %2651 = vmatpush1.msra.mxu0 0.0
  %2652 = vmatprep.subr.mxu0 0.0
  %2653 = vmatpush1.msra.mxu0 0.0
  %2654 = vmatprep.subr.mxu0 0.0
  %2655 = vmatpush1.msra.mxu0 0.0
  %2656 = vmatprep.subr.mxu0 0.0
  %2657 = vmatpush1.msra.mxu0 %v547
  %2658 = vmatprep.subr.mxu0 0.0
  %2659 = vmatpush1.msra.mxu0 %v545
  %2660 = vmatprep.subr.mxu0 0.0
  %2661 = vmatpush1.msra.mxu0 %v543
  %2662 = vmatprep.subr.mxu0 0.0
  %2663 = vmatpush1.msra.mxu0 %v541
  %2664 = vmatprep.subr.mxu0 0.0
  %2665 = vmatpush2.msra.mxu0 0.0
  %2666 = vmatprep.subr.mxu0 0.0
  %2667 = vmatpush2.msra.mxu0 0.0
  %2668 = vmatprep.subr.mxu0 0.0
  %2669 = vmatpush2.msra.mxu0 0.0
  %2670 = vmatprep.subr.mxu0 0.0
  %2671 = vmatpush2.msra.mxu0 0.0
  %2672 = vmatprep.subr.mxu0 0.0
  %2673 = vmatpush2.msra.mxu0 0.0
  %2674 = vmatprep.subr.mxu0 0.0
  %2675 = vmatpush2.msra.mxu0 0.0
  %2676 = vmatprep.subr.mxu0 0.0
  %2677 = vmatpush2.msra.mxu0 0.0
  %2678 = vmatprep.subr.mxu0 0.0
  %2679 = vmatpush2.msra.mxu0 0.0
  %2680 = vmatprep.subr.mxu0 0.0
  %2681 = vmatpush2.msra.mxu0 0.0
  %2682 = vmatprep.subr.mxu0 0.0
  %2683 = vmatpush2.msra.mxu0 0.0
  %2684 = vmatprep.subr.mxu0 0.0
  %2685 = vmatpush2.msra.mxu0 0.0
  %2686 = vmatprep.subr.mxu0 0.0
  %2687 = vmatpush2.msra.mxu0 0.0
  %2688 = vmatprep.subr.mxu0 0.0
  %2689 = vmatpush2.msra.mxu0 0.0
  %2690 = vmatprep.subr.mxu0 0.0
  %2691 = vmatpush2.msra.mxu0 0.0
  %2692 = vmatprep.subr.mxu0 0.0
  %2693 = vmatpush2.msra.mxu0 0.0
  %2694 = vmatprep.subr.mxu0 0.0
  %2695 = vmatpush2.msra.mxu0 0.0
  %2696 = vmatprep.mubr.f32.mxu0 0.0
  %2697 = vmatmul.mubr.f32.gmra.mxu0 %v2409
  %v2698 = vpop.f32.mrf.mxu0
  %v2699 = vadd.f32 0.0, %v2698
  %v2700 = vpop.f32.mrf.mxu0
  %2701 = vdwg.mxu0
  %2703 = vrot.lane.b32.xlu0 %v2699, 96
  %v2704 = vpop.permute.xlu0 %2703
  %v2706 = vadd.f32 %v273, %v2704
  %v2707 = vxor.u32 %v2556, 2147483648
  %v2708 = vmul.f32 %v2707, 1.442695
  %v2709 = vpow.pop %v2708
  %v2710 = vadd.f32 %v2709, 1.0
  %v2711 = vrcp.pop %v2710
  %v2712 = vmul.f32 1.0, %v2711
  %v2714 = vrot.slane %v2388, 4
  %v2716 = vmul.f32 %v2712, %v2714
  %v2717 = vxor.u32 %v2481, 2147483648
  %v2718 = vmul.f32 %v2717, 1.442695
  %v2719 = vpow.pop %v2718
  %v2720 = vadd.f32 %v2719, 1.0
  %v2721 = vrcp.pop %v2720
  %v2722 = vmul.f32 1.0, %v2721
  %v2723 = vtanh.pop %v2631
  %2725 = vrot.lane.b32.xlu0 %v2723, 64
  %v2726 = vpop.permute.xlu0 %2725
  %v2728 = vmul.f32 %v2722, %v2726
  %2730 = vrot.lane.b32.xlu0 %v2728, 32
  %v2731 = vpop.permute.xlu0 %2730
  %v2733 = vadd.f32 %v2716, %v2731
  %v2734 = vxor.u32 %v2706, 2147483648
  %v2735 = vmul.f32 %v2734, 1.442695
  %v2736 = vpow.pop %v2735
  %v2737 = vadd.f32 %v2736, 1.0
  %v2738 = vrcp.pop %v2737
  %v2739 = vmul.f32 1.0, %v2738
  %v2740 = vtanh.pop %v2733
  %2742 = vrot.lane.b32.xlu0 %v2740, 64
  %v2743 = vpop.permute.xlu0 %2742
  %v2745 = vmul.f32 %v2739, %v2743
  %2747 = vrot.lane.b32.xlu0 %v2745, 32
  %v2748 = vpop.permute.xlu0 %2747
  %2750 = vst.msk [vmem:[#allocation2 + $0x1c] sm:$0xf] %vm287, %v2748
  %v2751 = vld [vmem:[#allocation2] sm:$0xff]
  %v2752 = vld [vmem:[#allocation2 + $0x8] sm:$0xff]
  %v2753 = vld [vmem:[#allocation2 + $0x10] sm:$0xff]
  %v2754 = vld [vmem:[#allocation2 + $0x18] sm:$0xff]
  %v2755 = vld [vmem:[%s6] sm:$0xff]
  %v2756 = vld [vmem:[%s6 + $0x8] sm:$0xff]
  %v2757 = vld [vmem:[%s6 + $0x10] sm:$0xff]
  %v2758 = vld [vmem:[%s6 + $0x18] sm:$0xff]
  %v2759 = vld [vmem:[%s6 + $0x20] sm:$0xff]
  %v2760 = vld [vmem:[%s6 + $0x28] sm:$0xff]
  %v2761 = vld [vmem:[%s6 + $0x30] sm:$0xff]
  %v2762 = vld [vmem:[%s6 + $0x38] sm:$0xff]
  %2763 = vmatprep.subr.mxu0 0.0
  %2764 = vmatpush1.msra.mxu0 0.0
  %2765 = vmatprep.subr.mxu0 0.0
  %2766 = vmatpush1.msra.mxu0 0.0
  %2767 = vmatprep.subr.mxu0 0.0
  %2768 = vmatpush1.msra.mxu0 0.0
  %2769 = vmatprep.subr.mxu0 0.0
  %2770 = vmatpush1.msra.mxu0 0.0
  %2771 = vmatprep.subr.mxu0 0.0
  %2772 = vmatpush1.msra.mxu0 0.0
  %2773 = vmatprep.subr.mxu0 0.0
  %2774 = vmatpush1.msra.mxu0 0.0
  %2775 = vmatprep.subr.mxu0 0.0
  %2776 = vmatpush1.msra.mxu0 0.0
  %2777 = vmatprep.subr.mxu0 0.0
  %2778 = vmatpush1.msra.mxu0 0.0
  %2779 = vmatprep.subr.mxu0 0.0
  %2780 = vmatpush1.msra.mxu0 0.0
  %2781 = vmatprep.subr.mxu0 0.0
  %2782 = vmatpush1.msra.mxu0 0.0
  %2783 = vmatprep.subr.mxu0 0.0
  %2784 = vmatpush1.msra.mxu0 0.0
  %2785 = vmatprep.subr.mxu0 0.0
  %2786 = vmatpush1.msra.mxu0 0.0
  %2787 = vmatprep.subr.mxu0 0.0
  %2788 = vmatpush1.msra.mxu0 %v2762
  %2789 = vmatprep.subr.mxu0 0.0
  %2790 = vmatpush1.msra.mxu0 %v2761
  %2791 = vmatprep.subr.mxu0 0.0
  %2792 = vmatpush1.msra.mxu0 %v2760
  %2793 = vmatprep.subr.mxu0 0.0
  %2794 = vmatpush1.msra.mxu0 %v2759
  %2795 = vmatprep.subr.mxu0 0.0
  %2796 = vmatpush2.msra.mxu0 0.0
  %2797 = vmatprep.subr.mxu0 0.0
  %2798 = vmatpush2.msra.mxu0 0.0
  %2799 = vmatprep.subr.mxu0 0.0
  %2800 = vmatpush2.msra.mxu0 0.0
  %2801 = vmatprep.subr.mxu0 0.0
  %2802 = vmatpush2.msra.mxu0 0.0
  %2803 = vmatprep.subr.mxu0 0.0
  %2804 = vmatpush2.msra.mxu0 0.0
  %2805 = vmatprep.subr.mxu0 0.0
  %2806 = vmatpush2.msra.mxu0 0.0
  %2807 = vmatprep.subr.mxu0 0.0
  %2808 = vmatpush2.msra.mxu0 0.0
  %2809 = vmatprep.subr.mxu0 0.0
  %2810 = vmatpush2.msra.mxu0 0.0
  %2811 = vmatprep.subr.mxu0 0.0
  %2812 = vmatpush2.msra.mxu0 0.0
  %2813 = vmatprep.subr.mxu0 0.0
  %2814 = vmatpush2.msra.mxu0 0.0
  %2815 = vmatprep.subr.mxu0 0.0
  %2816 = vmatpush2.msra.mxu0 0.0
  %2817 = vmatprep.subr.mxu0 0.0
  %2818 = vmatpush2.msra.mxu0 0.0
  %2819 = vmatprep.subr.mxu0 0.0
  %2820 = vmatpush2.msra.mxu0 0.0
  %2821 = vmatprep.subr.mxu0 0.0
  %2822 = vmatpush2.msra.mxu0 0.0
  %2823 = vmatprep.subr.mxu0 0.0
  %2824 = vmatpush2.msra.mxu0 0.0
  %2825 = vmatprep.subr.mxu0 0.0
  %2826 = vmatpush2.msra.mxu0 0.0
  %2827 = vmatprep.mubr.f32.mxu0 0.0
  %2828 = vmatmul.mubr.f32.gmra.mxu0 %v180
  %v2829 = vpop.f32.mrf.mxu0
  %v2830 = vadd.f32 0.0, %v2829
  %v2831 = vpop.f32.mrf.mxu0
  %2832 = vmatprep.mubr.f32.mxu0 0.0
  %2833 = vmatmul.mubr.f32.gmra.mxu0 %v183
  %v2834 = vpop.f32.mrf.mxu0
  %v2835 = vadd.f32 0.0, %v2834
  %v2836 = vpop.f32.mrf.mxu0
  %2837 = vmatprep.mubr.f32.mxu0 0.0
  %2838 = vmatmul.mubr.f32.gmra.mxu0 %v186
  %v2839 = vpop.f32.mrf.mxu0
  %v2840 = vadd.f32 0.0, %v2839
  %v2841 = vpop.f32.mrf.mxu0
  %2842 = vmatprep.mubr.f32.mxu0 0.0
  %2843 = vmatmul.mubr.f32.gmra.mxu0 %v189
  %v2844 = vpop.f32.mrf.mxu0
  %v2845 = vadd.f32 0.0, %v2844
  %v2846 = vpop.f32.mrf.mxu0
  %2847 = vdwg.mxu0
  %v2849 = vsel %vm178, %v2751, 0
  %v2852 = vsel %vm178, %v2752, 0
  %v2855 = vsel %vm178, %v2753, 0
  %v2858 = vsel %vm178, %v2754, 0
  %2860 = vmatprep.subr.mxu0 0.0
  %2861 = vmatpush1.msra.mxu0 0.0
  %2862 = vmatprep.subr.mxu0 0.0
  %2863 = vmatpush1.msra.mxu0 0.0
  %2864 = vmatprep.subr.mxu0 0.0
  %2865 = vmatpush1.msra.mxu0 0.0
  %2866 = vmatprep.subr.mxu0 0.0
  %2867 = vmatpush1.msra.mxu0 0.0
  %2868 = vmatprep.subr.mxu0 0.0
  %2869 = vmatpush1.msra.mxu0 0.0
  %2870 = vmatprep.subr.mxu0 0.0
  %2871 = vmatpush1.msra.mxu0 0.0
  %2872 = vmatprep.subr.mxu0 0.0
  %2873 = vmatpush1.msra.mxu0 0.0
  %2874 = vmatprep.subr.mxu0 0.0
  %2875 = vmatpush1.msra.mxu0 0.0
  %2876 = vmatprep.subr.mxu0 0.0
  %2877 = vmatpush1.msra.mxu0 0.0
  %2878 = vmatprep.subr.mxu0 0.0
  %2879 = vmatpush1.msra.mxu0 0.0
  %2880 = vmatprep.subr.mxu0 0.0
  %2881 = vmatpush1.msra.mxu0 0.0
  %2882 = vmatprep.subr.mxu0 0.0
  %2883 = vmatpush1.msra.mxu0 0.0
  %2884 = vmatprep.subr.mxu0 0.0
  %2885 = vmatpush1.msra.mxu0 %v2758
  %2886 = vmatprep.subr.mxu0 0.0
  %2887 = vmatpush1.msra.mxu0 %v2757
  %2888 = vmatprep.subr.mxu0 0.0
  %2889 = vmatpush1.msra.mxu0 %v2756
  %2890 = vmatprep.subr.mxu0 0.0
  %2891 = vmatpush1.msra.mxu0 %v2755
  %2892 = vmatprep.subr.mxu0 0.0
  %2893 = vmatpush2.msra.mxu0 0.0
  %2894 = vmatprep.subr.mxu0 0.0
  %2895 = vmatpush2.msra.mxu0 0.0
  %2896 = vmatprep.subr.mxu0 0.0
  %2897 = vmatpush2.msra.mxu0 0.0
  %2898 = vmatprep.subr.mxu0 0.0
  %2899 = vmatpush2.msra.mxu0 0.0
  %2900 = vmatprep.subr.mxu0 0.0
  %2901 = vmatpush2.msra.mxu0 0.0
  %2902 = vmatprep.subr.mxu0 0.0
  %2903 = vmatpush2.msra.mxu0 0.0
  %2904 = vmatprep.subr.mxu0 0.0
  %2905 = vmatpush2.msra.mxu0 0.0
  %2906 = vmatprep.subr.mxu0 0.0
  %2907 = vmatpush2.msra.mxu0 0.0
  %2908 = vmatprep.subr.mxu0 0.0
  %2909 = vmatpush2.msra.mxu0 0.0
  %2910 = vmatprep.subr.mxu0 0.0
  %2911 = vmatpush2.msra.mxu0 0.0
  %2912 = vmatprep.subr.mxu0 0.0
  %2913 = vmatpush2.msra.mxu0 0.0
  %2914 = vmatprep.subr.mxu0 0.0
  %2915 = vmatpush2.msra.mxu0 0.0
  %2916 = vmatprep.subr.mxu0 0.0
  %2917 = vmatpush2.msra.mxu0 0.0
  %2918 = vmatprep.subr.mxu0 0.0
  %2919 = vmatpush2.msra.mxu0 0.0
  %2920 = vmatprep.subr.mxu0 0.0
  %2921 = vmatpush2.msra.mxu0 0.0
  %2922 = vmatprep.subr.mxu0 0.0
  %2923 = vmatpush2.msra.mxu0 0.0
  %2924 = vmatprep.mubr.f32.mxu0 0.0
  %2925 = vmatmul.mubr.f32.gmra.mxu0 %v2849
  %v2926 = vpop.f32.mrf.mxu0
  %v2927 = vadd.f32 %v2830, %v2926
  %v2928 = vpop.f32.mrf.mxu0
  %2929 = vmatprep.mubr.f32.mxu0 0.0
  %2930 = vmatmul.mubr.f32.gmra.mxu0 %v2852
  %v2931 = vpop.f32.mrf.mxu0
  %v2932 = vadd.f32 %v2835, %v2931
  %v2933 = vpop.f32.mrf.mxu0
  %2934 = vmatprep.mubr.f32.mxu0 0.0
  %2935 = vmatmul.mubr.f32.gmra.mxu0 %v2855
  %v2936 = vpop.f32.mrf.mxu0
  %v2937 = vadd.f32 %v2840, %v2936
  %v2938 = vpop.f32.mrf.mxu0
  %2939 = vmatprep.mubr.f32.mxu0 0.0
  %2940 = vmatmul.mubr.f32.gmra.mxu0 %v2858
  %v2941 = vpop.f32.mrf.mxu0
  %v2942 = vadd.f32 %v2845, %v2941
  %v2943 = vpop.f32.mrf.mxu0
  %2944 = vdwg.mxu0
  %v2945 = vld [vmem:[%s7] sm:$0x1]
  %v2947 = vlaneseq
  %v2948 = vshrl.u32 %v2947, 7
  %v2949 = vsub.s32 0, %v2948
  %v2950 = vrot.slane %v2945, %v2949
  %v2952 = vadd.f32 %v2927, %v2950
  %v2953 = vadd.f32 %v2932, %v2950
  %v2954 = vadd.f32 %v2937, %v2950
  %v2955 = vadd.f32 %v2942, %v2950
  %v2956 = vmax.f32 %v2952, 0.0
  %v2957 = vmax.f32 %v2953, 0.0
  %v2958 = vmax.f32 %v2954, 0.0
  %v2959 = vmax.f32 %v2955, 0.0
  %v2960 = vld [vmem:[%s8] sm:$0xff]
  %v2961 = vld [vmem:[%s8 + $0x8] sm:$0xff]
  %v2962 = vld [vmem:[%s8 + $0x10] sm:$0xff]
  %v2963 = vld [vmem:[%s8 + $0x18] sm:$0xff]
  %v2964 = vld [vmem:[#allocation3] sm:$0x1]
  %v2966 = vlaneseq
  %v2967 = vshrl.u32 %v2966, 7
  %v2968 = vsub.s32 0, %v2967
  %v2969 = vrot.slane %v2964, %v2968
  %v2972 = vsel %vm178, %v2956, 0
  %v2975 = vsel %vm178, %v2957, 0
  %v2978 = vsel %vm178, %v2958, 0
  %v2981 = vsel %vm178, %v2959, 0
  %2983 = vmatprep.subr.mxu0 0.0
  %2984 = vmatpush1.msra.mxu0 0.0
  %2985 = vmatprep.subr.mxu0 0.0
  %2986 = vmatpush1.msra.mxu0 0.0
  %2987 = vmatprep.subr.mxu0 0.0
  %2988 = vmatpush1.msra.mxu0 0.0
  %2989 = vmatprep.subr.mxu0 0.0
  %2990 = vmatpush1.msra.mxu0 0.0
  %2991 = vmatprep.subr.mxu0 0.0
  %2992 = vmatpush1.msra.mxu0 0.0
  %2993 = vmatprep.subr.mxu0 0.0
  %2994 = vmatpush1.msra.mxu0 0.0
  %2995 = vmatprep.subr.mxu0 0.0
  %2996 = vmatpush1.msra.mxu0 0.0
  %2997 = vmatprep.subr.mxu0 0.0
  %2998 = vmatpush1.msra.mxu0 0.0
  %2999 = vmatprep.subr.mxu0 0.0
  %3000 = vmatpush1.msra.mxu0 0.0
  %3001 = vmatprep.subr.mxu0 0.0
  %3002 = vmatpush1.msra.mxu0 0.0
  %3003 = vmatprep.subr.mxu0 0.0
  %3004 = vmatpush1.msra.mxu0 0.0
  %3005 = vmatprep.subr.mxu0 0.0
  %3006 = vmatpush1.msra.mxu0 0.0
  %3007 = vmatprep.subr.mxu0 0.0
  %3008 = vmatpush1.msra.mxu0 %v2963
  %3009 = vmatprep.subr.mxu0 0.0
  %3010 = vmatpush1.msra.mxu0 %v2962
  %3011 = vmatprep.subr.mxu0 0.0
  %3012 = vmatpush1.msra.mxu0 %v2961
  %3013 = vmatprep.subr.mxu0 0.0
  %3014 = vmatpush1.msra.mxu0 %v2960
  %3015 = vmatprep.subr.mxu0 0.0
  %3016 = vmatpush2.msra.mxu0 0.0
  %3017 = vmatprep.subr.mxu0 0.0
  %3018 = vmatpush2.msra.mxu0 0.0
  %3019 = vmatprep.subr.mxu0 0.0
  %3020 = vmatpush2.msra.mxu0 0.0
  %3021 = vmatprep.subr.mxu0 0.0
  %3022 = vmatpush2.msra.mxu0 0.0
  %3023 = vmatprep.subr.mxu0 0.0
  %3024 = vmatpush2.msra.mxu0 0.0
  %3025 = vmatprep.subr.mxu0 0.0
  %3026 = vmatpush2.msra.mxu0 0.0
  %3027 = vmatprep.subr.mxu0 0.0
  %3028 = vmatpush2.msra.mxu0 0.0
  %3029 = vmatprep.subr.mxu0 0.0
  %3030 = vmatpush2.msra.mxu0 0.0
  %3031 = vmatprep.subr.mxu0 0.0
  %3032 = vmatpush2.msra.mxu0 0.0
  %3033 = vmatprep.subr.mxu0 0.0
  %3034 = vmatpush2.msra.mxu0 0.0
  %3035 = vmatprep.subr.mxu0 0.0
  %3036 = vmatpush2.msra.mxu0 0.0
  %3037 = vmatprep.subr.mxu0 0.0
  %3038 = vmatpush2.msra.mxu0 0.0
  %3039 = vmatprep.subr.mxu0 0.0
  %3040 = vmatpush2.msra.mxu0 0.0
  %3041 = vmatprep.subr.mxu0 0.0
  %3042 = vmatpush2.msra.mxu0 0.0
  %3043 = vmatprep.subr.mxu0 0.0
  %3044 = vmatpush2.msra.mxu0 0.0
  %3045 = vmatprep.subr.mxu0 0.0
  %3046 = vmatpush2.msra.mxu0 0.0
  %3047 = vmatprep.mubr.f32.mxu0 0.0
  %3048 = vmatmul.mubr.f32.gmra.mxu0 %v2972
  %v3049 = vpop.f32.mrf.mxu0
  %v3050 = vadd.f32 %v2969, %v3049
  %v3051 = vpop.f32.mrf.mxu0
  %3052 = vmatprep.mubr.f32.mxu0 0.0
  %3053 = vmatmul.mubr.f32.gmra.mxu0 %v2975
  %v3054 = vpop.f32.mrf.mxu0
  %v3055 = vadd.f32 %v2969, %v3054
  %v3056 = vpop.f32.mrf.mxu0
  %3057 = vmatprep.mubr.f32.mxu0 0.0
  %3058 = vmatmul.mubr.f32.gmra.mxu0 %v2978
  %v3059 = vpop.f32.mrf.mxu0
  %v3060 = vadd.f32 %v2969, %v3059
  %v3061 = vpop.f32.mrf.mxu0
  %3062 = vmatprep.mubr.f32.mxu0 0.0
  %3063 = vmatmul.mubr.f32.gmra.mxu0 %v2981
  %v3064 = vpop.f32.mrf.mxu0
  %v3065 = vadd.f32 %v2969, %v3064
  %v3066 = vpop.f32.mrf.mxu0
  %3067 = vdwg.mxu0
  %vm3068 = vcmask 7168
  %3069 = vst.msk [vmem:[%s10] sm:$0xff] %vm3068, %v3050
  %3070 = vst.msk [vmem:[%s10 + $0x8] sm:$0xff] %vm3068, %v3055
  %3071 = vst.msk [vmem:[%s10 + $0x10] sm:$0xff] %vm3068, %v3060
  %3072 = vst.msk [vmem:[%s10 + $0x18] sm:$0xff] %vm3068, %v3065
  // Predicated region
  $region42: #{lstm_arg_selector_forward.1} parent=0 // pred_check
    _
  $region43: #{lstm_arg_selector_forward.1} parent=0 // pred_check_branch
    %3074 = sbr.rel (0) target = $region45
  $region44: #{lstm_arg_selector_forward.1} parent=0 // pred_region
    _
  $region45: #{lstm_arg_selector_forward.1} parent=0 // pred_fallthru
    _
  // Predicated region
  $region46: #{lstm_arg_selector_forward.1} parent=0 // pred_check
    _
  $region47: #{lstm_arg_selector_forward.1} parent=0 // pred_check_branch
    %3076 = sbr.rel (0) target = $region49
  $region48: #{lstm_arg_selector_forward.1} parent=0 // pred_region
    _
  $region49: #{lstm_arg_selector_forward.1} parent=0 // pred_fallthru
    _

</llo_original>
